<compile_context>
chip_gen: v6e
topology: v6e:2x2x1
jax: 0.10.0
libtpu: 0.0.40
codegen_flags: <defaults>
</compile_context>

<pallas_src>
import functools

import jax
import jax.numpy as jnp
from jax import lax
from jax.experimental import pallas as pl
from jax.experimental.pallas import tpu as pltpu


def _conv3x3_relu_kernel(x_ref, w_ref, b_ref, o_ref, *, wp):
    """One (batch element, C_out tile) block.

    x_ref: (1, L, C_in)      zero-padded image, spatially flattened, L=(H+3)*(W+2)
    w_ref: (9, C_in, T_CO)   conv taps ordered (kh, kw)
    b_ref: (1, T_CO)
    o_ref: (1, M, T_CO)      M = H*(W+2) flattened output rows (junk cols stripped
                             by the wrapper)
    """
    m = o_ref.shape[1]
    tile_co = o_ref.shape[2]
    acc = jnp.zeros((m, tile_co), jnp.float32)
    # 3x3 conv with padding=1 == sum of 9 row-shifted matmuls in flattened space.
    for kh in range(3):
        for kw in range(3):
            shift = kh * wp + kw                      # static row shift
            xs = x_ref[0, shift:shift + m, :]         # (M, C_in)
            acc = acc + jnp.dot(xs, w_ref[kh * 3 + kw],
                                preferred_element_type=jnp.float32)
    acc = acc + b_ref[...].astype(jnp.float32)        # (1, T_CO) broadcasts
    o_ref[0] = jnp.maximum(acc, 0.0).astype(o_ref.dtype)


def conv2d_relu_forward(x, weight, bias):
    """Forward of the Conv2d module: ReLU(conv3x3_pad1(x, weight) + bias), NCHW."""
    n, c_in, h, w = x.shape
    c_out = weight.shape[0]
    wp = w + 2                   # padded width
    l_rows = (h + 3) * wp        # H padded by (1 top, 2 bottom) so every shifted
                                 # slice [shift, shift+M) stays in bounds
    m = h * wp                   # flattened output rows (2 junk cols per row)

    # NCHW -> NHWC (channels on lanes), zero-pad spatially, flatten pixels.
    x_nhwc = jnp.transpose(x, (0, 2, 3, 1))
    x_pad = jnp.pad(x_nhwc, ((0, 0), (1, 2), (1, 1), (0, 0)))
    x_flat = x_pad.reshape(n, l_rows, c_in)

    # (C_out, C_in, 3, 3) -> (9, C_in, C_out), taps in (kh, kw) order.
    w_taps = jnp.transpose(weight, (2, 3, 1, 0)).reshape(9, c_in, c_out)
    b2d = bias.reshape(1, c_out).astype(x.dtype)

    # Lane (C_out) tiling: 128-wide tiles when it divides evenly, else full.
    tile_co = 128 if (c_out % 128 == 0) else c_out
    n_co = c_out // tile_co

    kernel = functools.partial(_conv3x3_relu_kernel, wp=wp)

    out_flat = pl.pallas_call(
        kernel,
        out_shape=jax.ShapeDtypeStruct((n, m, c_out), x.dtype),
        grid_spec=pltpu.PrefetchScalarGridSpec(
            num_scalar_prefetch=0,
            grid=(n, n_co),
            in_specs=[
                pl.BlockSpec((1, l_rows, c_in), lambda b, co: (b, 0, 0)),
                pl.BlockSpec((9, c_in, tile_co), lambda b, co: (0, 0, co)),
                pl.BlockSpec((1, tile_co), lambda b, co: (0, co)),
            ],
            out_specs=pl.BlockSpec((1, m, tile_co), lambda b, co: (b, 0, co)),
        ),
        compiler_params=pltpu.CompilerParams(
            dimension_semantics=("parallel", "parallel")),
    )(x_flat, w_taps, b2d)

    # Strip the two junk (padded-width) columns, back to NCHW.
    out_nhwc = out_flat.reshape(n, h, wp, c_out)[:, :, :w, :]
    return jnp.transpose(out_nhwc, (0, 3, 1, 2))


if __name__ == "__main__":
    key = jax.random.PRNGKey(0)
    kx, kw = jax.random.split(key)

    batch, c_in, c_out, hw = 2, 4, 8, 16
    x = jax.random.normal(kx, (batch, c_in, hw, hw), dtype=jnp.float32)

    # Kaiming-normal (mode='fan_out', relu) weights, zero bias — as in
    # _initialize_weights for nn.Conv2d.
    fan_out = c_out * 3 * 3
    std = (2.0 / fan_out) ** 0.5
    weight = std * jax.random.normal(kw, (c_out, c_in, 3, 3), dtype=jnp.float32)
    bias = jnp.zeros((c_out,), dtype=jnp.float32)

    out = conv2d_relu_forward(x, weight, bias)
    jax.block_until_ready(out)

    # Reference: high-precision XLA conv + bias + ReLU.
    ref = lax.conv_general_dilated(
        x, weight, window_strides=(1, 1), padding=((1, 1), (1, 1)),
        dimension_numbers=("NCHW", "OIHW", "NCHW"),
        precision=lax.Precision.HIGHEST)
    ref = jnp.maximum(ref + bias.reshape(1, c_out, 1, 1), 0.0)

    assert out.shape == (batch, c_out, hw, hw)
    assert bool(jnp.all(out >= 0.0)), "ReLU output must be non-negative"
    max_err = float(jnp.max(jnp.abs(out - ref)))
    assert max_err < 1e-2, f"max abs error {max_err} vs reference conv"

    # TODO(synk): the checkpoint/recompute branch is a training-memory feature
    # (gradient rematerialization); forward semantics are identical, so it is
    # intentionally not modeled here.

    print("KERNEL_OK")
</pallas_src>

<mosaic_0001>
module attributes {stable_mosaic.version = 11 : i64} {
  func.func @_conv3x3_relu_kernel(%arg0: i32, %arg1: i32, %arg2: memref<1x342x4xf32, #tpu.memory_space<vmem>>, %arg3: memref<9x4x8xf32, #tpu.memory_space<vmem>>, %arg4: memref<1x8xf32, #tpu.memory_space<vmem>>, %arg5: memref<1x288x8xf32, #tpu.memory_space<vmem>>) attributes {dimension_semantics = [#tpu.dimension_semantics<parallel>, #tpu.dimension_semantics<parallel>], iteration_bounds = array<i64: 2, 1>, scalar_prefetch = 0 : i64, scratch_operands = 0 : i64, tpu.core_type = #tpu.core_type<tc>, window_params = [{transform_indices = @transform_0, window_bounds = array<i64: 1, 342, 4>}, {transform_indices = @transform_1, window_bounds = array<i64: 9, 4, 8>}, {transform_indices = @transform_2, window_bounds = array<i64: 1, 8>}, {transform_indices = @transform_3, window_bounds = array<i64: 1, 288, 8>}]} {
    %cst = arith.constant 0.000000e+00 : f32
    %0 = vector.broadcast %cst : f32 to vector<288x8xf32>
    %c0 = arith.constant 0 : index
    %c0_0 = arith.constant 0 : index
    %c0_1 = arith.constant 0 : index
    %1 = vector.load %arg2[%c0, %c0_0, %c0_1] : memref<1x342x4xf32, #tpu.memory_space<vmem>>, vector<1x288x4xf32>
    %2 = vector.shape_cast %1 : vector<1x288x4xf32> to vector<288x4xf32>
    %c0_2 = arith.constant 0 : index
    %c0_3 = arith.constant 0 : index
    %c0_4 = arith.constant 0 : index
    %3 = vector.load %arg3[%c0_2, %c0_3, %c0_4] : memref<9x4x8xf32, #tpu.memory_space<vmem>>, vector<1x4x8xf32>
    %4 = vector.shape_cast %3 : vector<1x4x8xf32> to vector<4x8xf32>
    %cst_5 = arith.constant dense<0.000000e+00> : vector<288x8xf32>
    %5 = tpu.matmul %2, %4, %cst_5 {dimension_numbers = #tpu.dot_dimension_numbers<[1], [0], [0], [1], [0, 0, 1, 1], [], []>} : vector<288x4xf32>, vector<4x8xf32>, vector<288x8xf32> -> vector<288x8xf32>
    %6 = arith.addf %0, %5 : vector<288x8xf32>
    %c0_6 = arith.constant 0 : index
    %c1 = arith.constant 1 : index
    %c0_7 = arith.constant 0 : index
    %7 = vector.load %arg2[%c0_6, %c1, %c0_7] : memref<1x342x4xf32, #tpu.memory_space<vmem>>, vector<1x288x4xf32>
    %8 = vector.shape_cast %7 : vector<1x288x4xf32> to vector<288x4xf32>
    %c1_8 = arith.constant 1 : index
    %c0_9 = arith.constant 0 : index
    %c0_10 = arith.constant 0 : index
    %9 = vector.load %arg3[%c1_8, %c0_9, %c0_10] : memref<9x4x8xf32, #tpu.memory_space<vmem>>, vector<1x4x8xf32>
    %10 = vector.shape_cast %9 : vector<1x4x8xf32> to vector<4x8xf32>
    %cst_11 = arith.constant dense<0.000000e+00> : vector<288x8xf32>
    %11 = tpu.matmul %8, %10, %cst_11 {dimension_numbers = #tpu.dot_dimension_numbers<[1], [0], [0], [1], [0, 0, 1, 1], [], []>} : vector<288x4xf32>, vector<4x8xf32>, vector<288x8xf32> -> vector<288x8xf32>
    %12 = arith.addf %6, %11 : vector<288x8xf32>
    %c0_12 = arith.constant 0 : index
    %c2 = arith.constant 2 : index
    %c0_13 = arith.constant 0 : index
    %13 = vector.load %arg2[%c0_12, %c2, %c0_13] : memref<1x342x4xf32, #tpu.memory_space<vmem>>, vector<1x288x4xf32>
    %14 = vector.shape_cast %13 : vector<1x288x4xf32> to vector<288x4xf32>
    %c2_14 = arith.constant 2 : index
    %c0_15 = arith.constant 0 : index
    %c0_16 = arith.constant 0 : index
    %15 = vector.load %arg3[%c2_14, %c0_15, %c0_16] : memref<9x4x8xf32, #tpu.memory_space<vmem>>, vector<1x4x8xf32>
    %16 = vector.shape_cast %15 : vector<1x4x8xf32> to vector<4x8xf32>
    %cst_17 = arith.constant dense<0.000000e+00> : vector<288x8xf32>
    %17 = tpu.matmul %14, %16, %cst_17 {dimension_numbers = #tpu.dot_dimension_numbers<[1], [0], [0], [1], [0, 0, 1, 1], [], []>} : vector<288x4xf32>, vector<4x8xf32>, vector<288x8xf32> -> vector<288x8xf32>
    %18 = arith.addf %12, %17 : vector<288x8xf32>
    %c0_18 = arith.constant 0 : index
    %c18 = arith.constant 18 : index
    %c0_19 = arith.constant 0 : index
    %19 = vector.load %arg2[%c0_18, %c18, %c0_19] : memref<1x342x4xf32, #tpu.memory_space<vmem>>, vector<1x288x4xf32>
    %20 = vector.shape_cast %19 : vector<1x288x4xf32> to vector<288x4xf32>
    %c3 = arith.constant 3 : index
    %c0_20 = arith.constant 0 : index
    %c0_21 = arith.constant 0 : index
    %21 = vector.load %arg3[%c3, %c0_20, %c0_21] : memref<9x4x8xf32, #tpu.memory_space<vmem>>, vector<1x4x8xf32>
    %22 = vector.shape_cast %21 : vector<1x4x8xf32> to vector<4x8xf32>
    %cst_22 = arith.constant dense<0.000000e+00> : vector<288x8xf32>
    %23 = tpu.matmul %20, %22, %cst_22 {dimension_numbers = #tpu.dot_dimension_numbers<[1], [0], [0], [1], [0, 0, 1, 1], [], []>} : vector<288x4xf32>, vector<4x8xf32>, vector<288x8xf32> -> vector<288x8xf32>
    %24 = arith.addf %18, %23 : vector<288x8xf32>
    %c0_23 = arith.constant 0 : index
    %c19 = arith.constant 19 : index
    %c0_24 = arith.constant 0 : index
    %25 = vector.load %arg2[%c0_23, %c19, %c0_24] : memref<1x342x4xf32, #tpu.memory_space<vmem>>, vector<1x288x4xf32>
    %26 = vector.shape_cast %25 : vector<1x288x4xf32> to vector<288x4xf32>
    %c4 = arith.constant 4 : index
    %c0_25 = arith.constant 0 : index
    %c0_26 = arith.constant 0 : index
    %27 = vector.load %arg3[%c4, %c0_25, %c0_26] : memref<9x4x8xf32, #tpu.memory_space<vmem>>, vector<1x4x8xf32>
    %28 = vector.shape_cast %27 : vector<1x4x8xf32> to vector<4x8xf32>
    %cst_27 = arith.constant dense<0.000000e+00> : vector<288x8xf32>
    %29 = tpu.matmul %26, %28, %cst_27 {dimension_numbers = #tpu.dot_dimension_numbers<[1], [0], [0], [1], [0, 0, 1, 1], [], []>} : vector<288x4xf32>, vector<4x8xf32>, vector<288x8xf32> -> vector<288x8xf32>
    %30 = arith.addf %24, %29 : vector<288x8xf32>
    %c0_28 = arith.constant 0 : index
    %c20 = arith.constant 20 : index
    %c0_29 = arith.constant 0 : index
    %31 = vector.load %arg2[%c0_28, %c20, %c0_29] : memref<1x342x4xf32, #tpu.memory_space<vmem>>, vector<1x288x4xf32>
    %32 = vector.shape_cast %31 : vector<1x288x4xf32> to vector<288x4xf32>
    %c5 = arith.constant 5 : index
    %c0_30 = arith.constant 0 : index
    %c0_31 = arith.constant 0 : index
    %33 = vector.load %arg3[%c5, %c0_30, %c0_31] : memref<9x4x8xf32, #tpu.memory_space<vmem>>, vector<1x4x8xf32>
    %34 = vector.shape_cast %33 : vector<1x4x8xf32> to vector<4x8xf32>
    %cst_32 = arith.constant dense<0.000000e+00> : vector<288x8xf32>
    %35 = tpu.matmul %32, %34, %cst_32 {dimension_numbers = #tpu.dot_dimension_numbers<[1], [0], [0], [1], [0, 0, 1, 1], [], []>} : vector<288x4xf32>, vector<4x8xf32>, vector<288x8xf32> -> vector<288x8xf32>
    %36 = arith.addf %30, %35 : vector<288x8xf32>
    %c0_33 = arith.constant 0 : index
    %c36 = arith.constant 36 : index
    %c0_34 = arith.constant 0 : index
    %37 = vector.load %arg2[%c0_33, %c36, %c0_34] : memref<1x342x4xf32, #tpu.memory_space<vmem>>, vector<1x288x4xf32>
    %38 = vector.shape_cast %37 : vector<1x288x4xf32> to vector<288x4xf32>
    %c6 = arith.constant 6 : index
    %c0_35 = arith.constant 0 : index
    %c0_36 = arith.constant 0 : index
    %39 = vector.load %arg3[%c6, %c0_35, %c0_36] : memref<9x4x8xf32, #tpu.memory_space<vmem>>, vector<1x4x8xf32>
    %40 = vector.shape_cast %39 : vector<1x4x8xf32> to vector<4x8xf32>
    %cst_37 = arith.constant dense<0.000000e+00> : vector<288x8xf32>
    %41 = tpu.matmul %38, %40, %cst_37 {dimension_numbers = #tpu.dot_dimension_numbers<[1], [0], [0], [1], [0, 0, 1, 1], [], []>} : vector<288x4xf32>, vector<4x8xf32>, vector<288x8xf32> -> vector<288x8xf32>
    %42 = arith.addf %36, %41 : vector<288x8xf32>
    %c0_38 = arith.constant 0 : index
    %c37 = arith.constant 37 : index
    %c0_39 = arith.constant 0 : index
    %43 = vector.load %arg2[%c0_38, %c37, %c0_39] : memref<1x342x4xf32, #tpu.memory_space<vmem>>, vector<1x288x4xf32>
    %44 = vector.shape_cast %43 : vector<1x288x4xf32> to vector<288x4xf32>
    %c7 = arith.constant 7 : index
    %c0_40 = arith.constant 0 : index
    %c0_41 = arith.constant 0 : index
    %45 = vector.load %arg3[%c7, %c0_40, %c0_41] : memref<9x4x8xf32, #tpu.memory_space<vmem>>, vector<1x4x8xf32>
    %46 = vector.shape_cast %45 : vector<1x4x8xf32> to vector<4x8xf32>
    %cst_42 = arith.constant dense<0.000000e+00> : vector<288x8xf32>
    %47 = tpu.matmul %44, %46, %cst_42 {dimension_numbers = #tpu.dot_dimension_numbers<[1], [0], [0], [1], [0, 0, 1, 1], [], []>} : vector<288x4xf32>, vector<4x8xf32>, vector<288x8xf32> -> vector<288x8xf32>
    %48 = arith.addf %42, %47 : vector<288x8xf32>
    %c0_43 = arith.constant 0 : index
    %c38 = arith.constant 38 : index
    %c0_44 = arith.constant 0 : index
    %49 = vector.load %arg2[%c0_43, %c38, %c0_44] : memref<1x342x4xf32, #tpu.memory_space<vmem>>, vector<1x288x4xf32>
    %50 = vector.shape_cast %49 : vector<1x288x4xf32> to vector<288x4xf32>
    %c8 = arith.constant 8 : index
    %c0_45 = arith.constant 0 : index
    %c0_46 = arith.constant 0 : index
    %51 = vector.load %arg3[%c8, %c0_45, %c0_46] : memref<9x4x8xf32, #tpu.memory_space<vmem>>, vector<1x4x8xf32>
    %52 = vector.shape_cast %51 : vector<1x4x8xf32> to vector<4x8xf32>
    %cst_47 = arith.constant dense<0.000000e+00> : vector<288x8xf32>
    %53 = tpu.matmul %50, %52, %cst_47 {dimension_numbers = #tpu.dot_dimension_numbers<[1], [0], [0], [1], [0, 0, 1, 1], [], []>} : vector<288x4xf32>, vector<4x8xf32>, vector<288x8xf32> -> vector<288x8xf32>
    %54 = arith.addf %48, %53 : vector<288x8xf32>
    %c0_48 = arith.constant 0 : index
    %c0_49 = arith.constant 0 : index
    %55 = vector.load %arg4[%c0_48, %c0_49] : memref<1x8xf32, #tpu.memory_space<vmem>>, vector<1x8xf32>
    %56 = vector.broadcast %55 : vector<1x8xf32> to vector<288x8xf32>
    %57 = arith.addf %54, %56 : vector<288x8xf32>
    %cst_50 = arith.constant 0.000000e+00 : f32
    %58 = vector.broadcast %cst_50 : f32 to vector<288x8xf32>
    %59 = arith.maximumf %57, %58 : vector<288x8xf32>
    %c0_51 = arith.constant 0 : index
    %c0_52 = arith.constant 0 : index
    %c0_53 = arith.constant 0 : index
    %60 = vector.load %arg5[%c0_51, %c0_52, %c0_53] : memref<1x288x8xf32, #tpu.memory_space<vmem>>, vector<1x288x8xf32>
    %61 = vector.shape_cast %60 : vector<1x288x8xf32> to vector<288x8xf32>
    %62 = vector.shape_cast %59 : vector<288x8xf32> to vector<1x288x8xf32>
    tpu.vector_store %arg5[%c0_51, %c0_52, %c0_53], %62 {strides = array<i32>} : memref<1x288x8xf32, #tpu.memory_space<vmem>>, vector<1x288x8xf32>,
    return
  }
  func.func @transform_0(%arg0: i32, %arg1: i32) -> (i32, i32, i32) {
    %c0_i32 = arith.constant 0 : i32
    %c0_i32_0 = arith.constant 0 : i32
    %c0_i32_1 = arith.constant 0 : i32
    return %arg0, %c0_i32, %c0_i32_0 : i32, i32, i32
  }
  func.func @transform_1(%arg0: i32, %arg1: i32) -> (i32, i32, i32) {
    %c0_i32 = arith.constant 0 : i32
    %c0_i32_0 = arith.constant 0 : i32
    %c0_i32_1 = arith.constant 0 : i32
    return %c0_i32, %c0_i32_0, %arg1 : i32, i32, i32
  }
  func.func @transform_2(%arg0: i32, %arg1: i32) -> (i32, i32) {
    %c0_i32 = arith.constant 0 : i32
    %c0_i32_0 = arith.constant 0 : i32
    return %c0_i32, %arg1 : i32, i32
  }
  func.func @transform_3(%arg0: i32, %arg1: i32) -> (i32, i32, i32) {
    %c0_i32 = arith.constant 0 : i32
    %c0_i32_0 = arith.constant 0 : i32
    return %arg0, %c0_i32, %arg1 : i32, i32, i32
  }
}

</mosaic_0001>

<llo_original>
// kernel: tpu_custom_call.1
$region0: #{tpu_custom_call.1}
  #allocation0 [shape = 'u32[]', space=smem, size = 0x4, offset = 0x4, fixed_abs, tag = 'smem constant byte address 0x4 - core index']
  #allocation1 [shape = 'u32[144,128]{1,0:T(1,128)}', space=vmem, size = 0x12000, scoped, tag = 'internal scratch']
  %s0 = inlined_call_operand.vmem [shape: f32[2,342,4], index: 0, kind: input, shape index: {}]
  %s1 = inlined_call_operand.vmem [shape: f32[9,4,8], index: 1, kind: input, shape index: {}]
  %s2 = inlined_call_operand.vmem [shape: f32[1,8], index: 2, kind: input, shape index: {}]
  %s3 = inlined_call_operand.vmem [shape: f32[2,288,8], index: 3, kind: output, shape index: {}]
  %s4 = sld [smem:[#allocation0]]
  $region45: #{tpu_custom_call.1} parent=0
    _
  %s6 = ssub.s32 1, %s4
  %s7 = scalar_select 0, %s6, %s4
  loop: start=0, step=1, limit=4
  $region2: #{tpu_custom_call.1} parent=0 // loop_pre_header
    _
  $region3: #{tpu_custom_call.1} parent=0 // loop_header
    %s9 = sphi 0, %s13
    %p10 = scmp.ge.s32.totalorder %s9, 4
    %s16 = sphi 0, %s28
    %s17 = sphi 0, %s24
    %s18 = sphi 0, %s16
    %s19 = sphi 0, %s17
    %s20 = sphi 0, %s18
    %s21 = sphi 0, %s19
    %s31 = sphi 0, %s33
    %s34 = sphi 0, %s31
    %s35 = sphi 0, %s34
    %s51 = sphi 0, %s35
    %s57 = sphi 0, %s59
    %s60 = sphi 0, %s57
    %s61 = sphi 0, %s60
    %s77 = sphi 0, %s61
    %s83 = sphi 0, %s85
    %s86 = sphi 0, %s83
    %s87 = sphi 0, %s86
    %s103 = sphi 0, %s87
    %s111 = sphi 0, %s113
    %s114 = sphi 0, %s111
    %s115 = sphi 0, %s114
    %s131 = sphi 0, %s115
  $region4: #{tpu_custom_call.1} parent=0 // loop_header_branch
    %12 = sbr.rel (%p10) target = $region8
  $region5: #{tpu_custom_call.1} parent=0 // loop_body
    %s14 = ssub.s32 %s9, 1
    %s15 = ssub.s32 %s9, 2
    %s22 = sadd.s32 1, %s17
    %p23 = scmp.ge.s32.totalorder %s22, 1
    %s24 = scalar_select %p23, 0, %s22
    %s25 = sadd.s32 1, %s16
    %s26 = scalar_select %p23, %s25, %s16
    %p27 = scmp.ge.s32.totalorder %s26, 2
    %s28 = scalar_select %p27, 0, %s26
    %s29 = ssub.s32 %s16, %s28
    %p30 = scmp.eq.s32.totalorder %s29, 0
    %s32 = sadd.s32 %s31, 1
    %s33 = scalar_select %p30, %s31, %s32
    %p36 = pneg %p30
    %p37 = scmp.eq.s32.totalorder %s9, 1
    %p38 = por %p36, %p37
    %p39 = scmp.ne.s32.totalorder %s31, %s34
    %p40 = scmp.eq.s32.totalorder %s9, 0
    %p41 = por %p39, %p40
    %p42 = scmp.ne.s32.totalorder %s31, %s34
    %p43 = scmp.eq.s32.totalorder %s14, 1
    %p44 = por %p42, %p43
    %p45 = scmp.ne.s32.totalorder %s34, %s35
    %p46 = scmp.eq.s32.totalorder %s14, 0
    %p47 = por %p45, %p46
    %p48 = scmp.ne.s32.totalorder %s34, %s35
    %p49 = scmp.eq.s32.totalorder %s15, 1
    %p50 = por %p48, %p49
    %p52 = scmp.ne.s32.totalorder %s35, %s51
    %p53 = scmp.eq.s32.totalorder %s15, 0
    %p54 = por %p52, %p53
    %s55 = ssub.s32 %s17, %s24
    %p56 = scmp.eq.s32.totalorder %s55, 0
    %s58 = sadd.s32 %s57, 1
    %s59 = scalar_select %p56, %s57, %s58
    %p62 = pneg %p56
    %p63 = scmp.eq.s32.totalorder %s9, 1
    %p64 = por %p62, %p63
    %p65 = scmp.ne.s32.totalorder %s57, %s60
    %p66 = scmp.eq.s32.totalorder %s9, 0
    %p67 = por %p65, %p66
    %p68 = scmp.ne.s32.totalorder %s57, %s60
    %p69 = scmp.eq.s32.totalorder %s14, 1
    %p70 = por %p68, %p69
    %p71 = scmp.ne.s32.totalorder %s60, %s61
    %p72 = scmp.eq.s32.totalorder %s14, 0
    %p73 = por %p71, %p72
    %p74 = scmp.ne.s32.totalorder %s60, %s61
    %p75 = scmp.eq.s32.totalorder %s15, 1
    %p76 = por %p74, %p75
    %p78 = scmp.ne.s32.totalorder %s61, %s77
    %p79 = scmp.eq.s32.totalorder %s15, 0
    %p80 = por %p78, %p79
    %s81 = ssub.s32 %s17, %s24
    %p82 = scmp.eq.s32.totalorder %s81, 0
    %s84 = sadd.s32 %s83, 1
    %s85 = scalar_select %p82, %s83, %s84
    %p88 = pneg %p82
    %p89 = scmp.eq.s32.totalorder %s9, 1
    %p90 = por %p88, %p89
    %p91 = scmp.ne.s32.totalorder %s83, %s86
    %p92 = scmp.eq.s32.totalorder %s9, 0
    %p93 = por %p91, %p92
    %p94 = scmp.ne.s32.totalorder %s83, %s86
    %p95 = scmp.eq.s32.totalorder %s14, 1
    %p96 = por %p94, %p95
    %p97 = scmp.ne.s32.totalorder %s86, %s87
    %p98 = scmp.eq.s32.totalorder %s14, 0
    %p99 = por %p97, %p98
    %p100 = scmp.ne.s32.totalorder %s86, %s87
    %p101 = scmp.eq.s32.totalorder %s15, 1
    %p102 = por %p100, %p101
    %p104 = scmp.ne.s32.totalorder %s87, %s103
    %p105 = scmp.eq.s32.totalorder %s15, 0
    %p106 = por %p104, %p105
    %s107 = ssub.s32 %s16, %s28
    %s108 = ssub.s32 %s17, %s24
    %s109 = sor.u32 %s107, %s108
    %p110 = scmp.eq.s32.totalorder %s109, 0
    %s112 = sadd.s32 %s111, 1
    %s113 = scalar_select %p110, %s111, %s112
    %p116 = pneg %p110
    %p117 = scmp.eq.s32.totalorder %s9, 1
    %p118 = por %p116, %p117
    %p119 = scmp.ne.s32.totalorder %s111, %s114
    %p120 = scmp.eq.s32.totalorder %s9, 0
    %p121 = por %p119, %p120
    %p122 = scmp.ne.s32.totalorder %s111, %s114
    %p123 = scmp.eq.s32.totalorder %s14, 1
    %p124 = por %p122, %p123
    %p125 = scmp.ne.s32.totalorder %s114, %s115
    %p126 = scmp.eq.s32.totalorder %s14, 0
    %p127 = por %p125, %p126
    %p128 = scmp.ne.s32.totalorder %s114, %s115
    %p129 = scmp.eq.s32.totalorder %s15, 1
    %p130 = por %p128, %p129
    %p132 = scmp.ne.s32.totalorder %s115, %s131
    %p133 = scmp.eq.s32.totalorder %s15, 0
    %p134 = por %p132, %p133
    %p135 = scmp.le.s32.totalorder 1, %s9
    %p136 = scmp.lt.s32.totalorder %s9, 3
    %p137 = pnand %p135, %p136
    %p138 = pneg %p137
    // Predicated region
    $region9: #{tpu_custom_call.1} parent=5 // pred_check
      _
    $region10: #{tpu_custom_call.1} parent=5 // pred_check_branch
      %140 = sbr.rel (%p137) target = $region12
    $region11: #{tpu_custom_call.1} parent=5 // pred_region
      %s141 = ssub.s32 %s9, 1
      // Predicated region
      $region13: #{tpu_custom_call.1} parent=11 // pred_check
        %p142 = pneg %p73
      $region14: #{tpu_custom_call.1} parent=11 // pred_check_branch
        %144 = sbr.rel (%p142) target = $region16
      $region15: #{tpu_custom_call.1} parent=11 // pred_region
        %p145 = scmp.lt.s32.totalorder %s19, 0
        %s146 = scalar_select %p145, %s19, 0
        %s147 = smul.addr %s146, 4
        %s148 = scalar_lea.vmem %s1, %s147
      $region16: #{tpu_custom_call.1} parent=11 // pred_fallthru
        _
      // Predicated region
      $region17: #{tpu_custom_call.1} parent=11 // pred_check
        %p149 = pneg %p99
      $region18: #{tpu_custom_call.1} parent=11 // pred_check_branch
        %151 = sbr.rel (%p149) target = $region20
      $region19: #{tpu_custom_call.1} parent=11 // pred_region
        %p152 = scmp.lt.s32.totalorder %s19, 0
        %s153 = scalar_select %p152, %s19, 0
        %s154 = scalar_lea.vmem %s2, %s153
      $region20: #{tpu_custom_call.1} parent=11 // pred_fallthru
        _
    $region12: #{tpu_custom_call.1} parent=5 // pred_fallthru
      _
    %p155 = scmp.lt.s32.totalorder %s9, 2
    // Predicated region
    $region21: #{tpu_custom_call.1} parent=5 // pred_check
      %p156 = pneg %p155
    $region22: #{tpu_custom_call.1} parent=5 // pred_check_branch
      %158 = sbr.rel (%p156) target = $region24
    $region23: #{tpu_custom_call.1} parent=5 // pred_region
      // Predicated region
      $region25: #{tpu_custom_call.1} parent=23 // pred_check
        %p159 = pneg %p41
      $region26: #{tpu_custom_call.1} parent=23 // pred_check_branch
        %161 = sbr.rel (%p159) target = $region28
      $region27: #{tpu_custom_call.1} parent=23 // pred_region
        %p162 = scmp.lt.s32.totalorder %s16, 1
        %s163 = scalar_select %p162, %s16, 1
        %s164 = smul.addr %s163, 43
        %s165 = smul.addr %s164, 8
        %s166 = scalar_lea.vmem %s0, %s165
      $region28: #{tpu_custom_call.1} parent=23 // pred_fallthru
        _
    $region24: #{tpu_custom_call.1} parent=5 // pred_fallthru
      _
    %p167 = scmp.le.s32.totalorder 1, %s9
    %p168 = scmp.lt.s32.totalorder %s9, 3
    %p169 = pnand %p167, %p168
    %p170 = pneg %p169
    // Predicated region
    $region29: #{tpu_custom_call.1} parent=5 // pred_check
      _
    $region30: #{tpu_custom_call.1} parent=5 // pred_check_branch
      %172 = sbr.rel (%p169) target = $region32
    $region31: #{tpu_custom_call.1} parent=5 // pred_region
      %s173 = ssub.s32 %s9, 1
      %p174 = scmp.lt.s32.totalorder %s18, 1
      %s175 = scalar_select %p174, %s18, 1
      %s176 = smul.addr %s175, 43
      %s177 = smul.addr %s176, 8
      %s178 = scalar_lea.vmem %s0, %s177
      %p179 = pneg %p47
      %p180 = pneg %p44
      %p181 = scmp.lt.s32.totalorder %s19, 0
      %s182 = scalar_select %p181, %s19, 0
      %s183 = smul.addr %s182, 4
      %s184 = scalar_lea.vmem %s1, %s183
      %p185 = pneg %p73
      %p186 = pneg %p70
      %p187 = scmp.lt.s32.totalorder %s19, 0
      %s188 = scalar_select %p187, %s19, 0
      %s189 = scalar_lea.vmem %s2, %s188
      %p190 = pneg %p99
      %p191 = pneg %p96
      %p192 = pneg %p127
      %p193 = pneg %p124
      %p194 = scmp.lt.s32.totalorder %s18, 1
      %s195 = scalar_select %p194, %s18, 1
      %p196 = scmp.lt.s32.totalorder %s19, 0
      %s197 = scalar_select %p196, %s19, 0
      %s198 = smul.addr %s195, 36
      %s199 = sadd.s32 %s197, %s198
      %s200 = smul.addr %s199, 8
      %s201 = scalar_lea.vmem %s3, %s200
      %p202 = scmp.lt.s32.totalorder %s18, 1
      %s203 = scalar_select %p202, %s18, 1
      %s204 = smul.addr %s203, 43
      %s205 = smul.addr %s204, 8
      %s206 = scalar_lea.vmem %s0, %s205
      %p207 = scmp.lt.s32.totalorder %s19, 0
      %s208 = scalar_select %p207, %s19, 0
      %s209 = smul.addr %s208, 4
      %s210 = scalar_lea.vmem %s1, %s209
      %p211 = scmp.lt.s32.totalorder %s19, 0
      %s212 = scalar_select %p211, %s19, 0
      %s213 = scalar_lea.vmem %s2, %s212
      %p214 = scmp.lt.s32.totalorder %s18, 1
      %s215 = scalar_select %p214, %s18, 1
      %p216 = scmp.lt.s32.totalorder %s19, 0
      %s217 = scalar_select %p216, %s19, 0
      %s218 = smul.addr %s215, 36
      %s219 = sadd.s32 %s217, %s218
      %s220 = smul.addr %s219, 8
      %s221 = scalar_lea.vmem %s3, %s220
      %v222 = vld [vmem:[%s206] sm:$0xff]
      %v223 = vld [vmem:[%s206 + $0x8] sm:$0xff]
      %v224 = vld [vmem:[%s206 + $0x10] sm:$0xff]
      %v225 = vld [vmem:[%s206 + $0x18] sm:$0xff]
      %v226 = vld [vmem:[%s206 + $0x20] sm:$0xff]
      %v227 = vld [vmem:[%s206 + $0x28] sm:$0xff]
      %v228 = vld [vmem:[%s206 + $0x30] sm:$0xff]
      %v229 = vld [vmem:[%s206 + $0x38] sm:$0xff]
      %v230 = vld [vmem:[%s206 + $0x40] sm:$0xff]
      %v231 = vld [vmem:[%s206 + $0x48] sm:$0xff]
      %v232 = vld [vmem:[%s206 + $0x50] sm:$0xff]
      %v233 = vld [vmem:[%s206 + $0x58] sm:$0xff]
      %v234 = vld [vmem:[%s206 + $0x60] sm:$0xff]
      %v235 = vld [vmem:[%s206 + $0x68] sm:$0xff]
      %v236 = vld [vmem:[%s206 + $0x70] sm:$0xff]
      %v237 = vld [vmem:[%s206 + $0x78] sm:$0xff]
      %v238 = vld [vmem:[%s206 + $0x80] sm:$0xff]
      %v239 = vld [vmem:[%s206 + $0x88] sm:$0xff]
      %v240 = vld [vmem:[%s206 + $0x90] sm:$0xff]
      %v241 = vld [vmem:[%s206 + $0x98] sm:$0xff]
      %v242 = vld [vmem:[%s206 + $0xa0] sm:$0xff]
      %v243 = vld [vmem:[%s206 + $0xa8] sm:$0xff]
      %v244 = vld [vmem:[%s206 + $0xb0] sm:$0xff]
      %v245 = vld [vmem:[%s206 + $0xb8] sm:$0xff]
      %v246 = vld [vmem:[%s206 + $0xc0] sm:$0xff]
      %v247 = vld [vmem:[%s206 + $0xc8] sm:$0xff]
      %v248 = vld [vmem:[%s206 + $0xd0] sm:$0xff]
      %v249 = vld [vmem:[%s206 + $0xd8] sm:$0xff]
      %v250 = vld [vmem:[%s206 + $0xe0] sm:$0xff]
      %v251 = vld [vmem:[%s206 + $0xe8] sm:$0xff]
      %v252 = vld [vmem:[%s206 + $0xf0] sm:$0xff]
      %v253 = vld [vmem:[%s206 + $0xf8] sm:$0xff]
      %v254 = vld [vmem:[%s206 + $0x100] sm:$0xff]
      %v255 = vld [vmem:[%s206 + $0x108] sm:$0xff]
      %v256 = vld [vmem:[%s206 + $0x110] sm:$0xff]
      %v257 = vld [vmem:[%s206 + $0x118] sm:$0xff]
      %v258 = vld [vmem:[%s210] sm:$0xf]
      %v259 = vld [vmem:[%s206 + $0x1] sm:$0xff]
      %v260 = vld [vmem:[%s206 + $0x9] sm:$0xff]
      %v261 = vld [vmem:[%s206 + $0x11] sm:$0xff]
      %v262 = vld [vmem:[%s206 + $0x19] sm:$0xff]
      %v263 = vld [vmem:[%s206 + $0x21] sm:$0xff]
      %v264 = vld [vmem:[%s206 + $0x29] sm:$0xff]
      %v265 = vld [vmem:[%s206 + $0x31] sm:$0xff]
      %v266 = vld [vmem:[%s206 + $0x39] sm:$0xff]
      %v267 = vld [vmem:[%s206 + $0x41] sm:$0xff]
      %v268 = vld [vmem:[%s206 + $0x49] sm:$0xff]
      %v269 = vld [vmem:[%s206 + $0x51] sm:$0xff]
      %v270 = vld [vmem:[%s206 + $0x59] sm:$0xff]
      %v271 = vld [vmem:[%s206 + $0x61] sm:$0xff]
      %v272 = vld [vmem:[%s206 + $0x69] sm:$0xff]
      %v273 = vld [vmem:[%s206 + $0x71] sm:$0xff]
      %v274 = vld [vmem:[%s206 + $0x79] sm:$0xff]
      %v275 = vld [vmem:[%s206 + $0x81] sm:$0xff]
      %v276 = vld [vmem:[%s206 + $0x89] sm:$0xff]
      %v277 = vld [vmem:[%s206 + $0x91] sm:$0xff]
      %v278 = vld [vmem:[%s206 + $0x99] sm:$0xff]
      %v279 = vld [vmem:[%s206 + $0xa1] sm:$0xff]
      %v280 = vld [vmem:[%s206 + $0xa9] sm:$0xff]
      %v281 = vld [vmem:[%s206 + $0xb1] sm:$0xff]
      %v282 = vld [vmem:[%s206 + $0xb9] sm:$0xff]
      %v283 = vld [vmem:[%s206 + $0xc1] sm:$0xff]
      %v284 = vld [vmem:[%s206 + $0xc9] sm:$0xff]
      %v285 = vld [vmem:[%s206 + $0xd1] sm:$0xff]
      %v286 = vld [vmem:[%s206 + $0xd9] sm:$0xff]
      %v287 = vld [vmem:[%s206 + $0xe1] sm:$0xff]
      %v288 = vld [vmem:[%s206 + $0xe9] sm:$0xff]
      %v289 = vld [vmem:[%s206 + $0xf1] sm:$0xff]
      %v290 = vld [vmem:[%s206 + $0xf9] sm:$0xff]
      %v291 = vld [vmem:[%s206 + $0x101] sm:$0xff]
      %v292 = vld [vmem:[%s206 + $0x109] sm:$0xff]
      %v293 = vld [vmem:[%s206 + $0x111] sm:$0xff]
      %v294 = vld [vmem:[%s206 + $0x119] sm:$0xff]
      %s295 = scalar_lea.vmem %s210, 4
      %v296 = vld [vmem:[%s295] sm:$0xf]
      %vm297 = vcmask 31744
      %v299 = vsel %vm297, %v259, 0
      %v302 = vsel %vm297, %v260, 0
      %v305 = vsel %vm297, %v261, 0
      %v308 = vsel %vm297, %v262, 0
      %v311 = vsel %vm297, %v263, 0
      %v314 = vsel %vm297, %v264, 0
      %v317 = vsel %vm297, %v265, 0
      %v320 = vsel %vm297, %v266, 0
      %v323 = vsel %vm297, %v267, 0
      %v326 = vsel %vm297, %v268, 0
      %v329 = vsel %vm297, %v269, 0
      %v332 = vsel %vm297, %v270, 0
      %v335 = vsel %vm297, %v271, 0
      %v338 = vsel %vm297, %v272, 0
      %v341 = vsel %vm297, %v273, 0
      %v344 = vsel %vm297, %v274, 0
      %v347 = vsel %vm297, %v275, 0
      %v350 = vsel %vm297, %v276, 0
      %v353 = vsel %vm297, %v277, 0
      %v356 = vsel %vm297, %v278, 0
      %v359 = vsel %vm297, %v279, 0
      %v362 = vsel %vm297, %v280, 0
      %v365 = vsel %vm297, %v281, 0
      %v368 = vsel %vm297, %v282, 0
      %v371 = vsel %vm297, %v283, 0
      %v374 = vsel %vm297, %v284, 0
      %v377 = vsel %vm297, %v285, 0
      %v380 = vsel %vm297, %v286, 0
      %v383 = vsel %vm297, %v287, 0
      %v386 = vsel %vm297, %v288, 0
      %v389 = vsel %vm297, %v289, 0
      %v392 = vsel %vm297, %v290, 0
      %v395 = vsel %vm297, %v291, 0
      %v398 = vsel %vm297, %v292, 0
      %v401 = vsel %vm297, %v293, 0
      %v404 = vsel %vm297, %v294, 0
      %vm406 = vcmask 1043456
      %v408 = vsel %vm406, %v296, 0
      %410 = vmatprep.subr.mxu0 0.0
      %411 = vmatpush1.msra.mxu0 0.0
      %412 = vmatprep.subr.mxu0 0.0
      %413 = vmatpush1.msra.mxu0 0.0
      %414 = vmatprep.subr.mxu0 0.0
      %415 = vmatpush1.msra.mxu0 0.0
      %416 = vmatprep.subr.mxu0 0.0
      %417 = vmatpush1.msra.mxu0 0.0
      %418 = vmatprep.subr.mxu0 0.0
      %419 = vmatpush1.msra.mxu0 0.0
      %420 = vmatprep.subr.mxu0 0.0
      %421 = vmatpush1.msra.mxu0 0.0
      %422 = vmatprep.subr.mxu0 0.0
      %423 = vmatpush1.msra.mxu0 0.0
      %424 = vmatprep.subr.mxu0 0.0
      %425 = vmatpush1.msra.mxu0 0.0
      %426 = vmatprep.subr.mxu0 0.0
      %427 = vmatpush1.msra.mxu0 0.0
      %428 = vmatprep.subr.mxu0 0.0
      %429 = vmatpush1.msra.mxu0 0.0
      %430 = vmatprep.subr.mxu0 0.0
      %431 = vmatpush1.msra.mxu0 0.0
      %432 = vmatprep.subr.mxu0 0.0
      %433 = vmatpush1.msra.mxu0 0.0
      %434 = vmatprep.subr.mxu0 0.0
      %435 = vmatpush1.msra.mxu0 0.0
      %436 = vmatprep.subr.mxu0 0.0
      %437 = vmatpush1.msra.mxu0 0.0
      %438 = vmatprep.subr.mxu0 0.0
      %439 = vmatpush1.msra.mxu0 0.0
      %440 = vmatprep.subr.mxu0 0.0
      %441 = vmatpush1.msra.mxu0 %v408
      %442 = vmatprep.subr.mxu0 0.0
      %443 = vmatpush2.msra.mxu0 0.0
      %444 = vmatprep.subr.mxu0 0.0
      %445 = vmatpush2.msra.mxu0 0.0
      %446 = vmatprep.subr.mxu0 0.0
      %447 = vmatpush2.msra.mxu0 0.0
      %448 = vmatprep.subr.mxu0 0.0
      %449 = vmatpush2.msra.mxu0 0.0
      %450 = vmatprep.subr.mxu0 0.0
      %451 = vmatpush2.msra.mxu0 0.0
      %452 = vmatprep.subr.mxu0 0.0
      %453 = vmatpush2.msra.mxu0 0.0
      %454 = vmatprep.subr.mxu0 0.0
      %455 = vmatpush2.msra.mxu0 0.0
      %456 = vmatprep.subr.mxu0 0.0
      %457 = vmatpush2.msra.mxu0 0.0
      %458 = vmatprep.subr.mxu0 0.0
      %459 = vmatpush2.msra.mxu0 0.0
      %460 = vmatprep.subr.mxu0 0.0
      %461 = vmatpush2.msra.mxu0 0.0
      %462 = vmatprep.subr.mxu0 0.0
      %463 = vmatpush2.msra.mxu0 0.0
      %464 = vmatprep.subr.mxu0 0.0
      %465 = vmatpush2.msra.mxu0 0.0
      %466 = vmatprep.subr.mxu0 0.0
      %467 = vmatpush2.msra.mxu0 0.0
      %468 = vmatprep.subr.mxu0 0.0
      %469 = vmatpush2.msra.mxu0 0.0
      %470 = vmatprep.subr.mxu0 0.0
      %471 = vmatpush2.msra.mxu0 0.0
      %472 = vmatprep.subr.mxu0 0.0
      %473 = vmatpush2.msra.mxu0 0.0
      %474 = vmatprep.mubr.f32.mxu0 0.0
      %475 = vmatmul.mubr.f32.gmra.mxu0 %v299
      %v476 = vpop.f32.mrf.mxu0
      %v477 = vadd.f32 0.0, %v476
      %v478 = vpop.f32.mrf.mxu0
      %479 = vmatprep.mubr.f32.mxu0 0.0
      %480 = vmatmul.mubr.f32.gmra.mxu0 %v302
      %v481 = vpop.f32.mrf.mxu0
      %v482 = vadd.f32 0.0, %v481
      %v483 = vpop.f32.mrf.mxu0
      %484 = vmatprep.mubr.f32.mxu0 0.0
      %485 = vmatmul.mubr.f32.gmra.mxu0 %v305
      %v486 = vpop.f32.mrf.mxu0
      %v487 = vadd.f32 0.0, %v486
      %v488 = vpop.f32.mrf.mxu0
      %489 = vmatprep.mubr.f32.mxu0 0.0
      %490 = vmatmul.mubr.f32.gmra.mxu0 %v308
      %v491 = vpop.f32.mrf.mxu0
      %v492 = vadd.f32 0.0, %v491
      %v493 = vpop.f32.mrf.mxu0
      %494 = vmatprep.mubr.f32.mxu0 0.0
      %495 = vmatmul.mubr.f32.gmra.mxu0 %v311
      %v496 = vpop.f32.mrf.mxu0
      %v497 = vadd.f32 0.0, %v496
      %v498 = vpop.f32.mrf.mxu0
      %499 = vmatprep.mubr.f32.mxu0 0.0
      %500 = vmatmul.mubr.f32.gmra.mxu0 %v314
      %v501 = vpop.f32.mrf.mxu0
      %v502 = vadd.f32 0.0, %v501
      %v503 = vpop.f32.mrf.mxu0
      %504 = vmatprep.mubr.f32.mxu0 0.0
      %505 = vmatmul.mubr.f32.gmra.mxu0 %v317
      %v506 = vpop.f32.mrf.mxu0
      %v507 = vadd.f32 0.0, %v506
      %v508 = vpop.f32.mrf.mxu0
      %509 = vmatprep.mubr.f32.mxu0 0.0
      %510 = vmatmul.mubr.f32.gmra.mxu0 %v320
      %v511 = vpop.f32.mrf.mxu0
      %v512 = vadd.f32 0.0, %v511
      %v513 = vpop.f32.mrf.mxu0
      %514 = vmatprep.mubr.f32.mxu0 0.0
      %515 = vmatmul.mubr.f32.gmra.mxu0 %v323
      %v516 = vpop.f32.mrf.mxu0
      %v517 = vadd.f32 0.0, %v516
      %v518 = vpop.f32.mrf.mxu0
      %519 = vmatprep.mubr.f32.mxu0 0.0
      %520 = vmatmul.mubr.f32.gmra.mxu0 %v326
      %v521 = vpop.f32.mrf.mxu0
      %v522 = vadd.f32 0.0, %v521
      %v523 = vpop.f32.mrf.mxu0
      %524 = vmatprep.mubr.f32.mxu0 0.0
      %525 = vmatmul.mubr.f32.gmra.mxu0 %v329
      %v526 = vpop.f32.mrf.mxu0
      %v527 = vadd.f32 0.0, %v526
      %v528 = vpop.f32.mrf.mxu0
      %529 = vmatprep.mubr.f32.mxu0 0.0
      %530 = vmatmul.mubr.f32.gmra.mxu0 %v332
      %v531 = vpop.f32.mrf.mxu0
      %v532 = vadd.f32 0.0, %v531
      %v533 = vpop.f32.mrf.mxu0
      %534 = vmatprep.mubr.f32.mxu0 0.0
      %535 = vmatmul.mubr.f32.gmra.mxu0 %v335
      %v536 = vpop.f32.mrf.mxu0
      %v537 = vadd.f32 0.0, %v536
      %v538 = vpop.f32.mrf.mxu0
      %539 = vmatprep.mubr.f32.mxu0 0.0
      %540 = vmatmul.mubr.f32.gmra.mxu0 %v338
      %v541 = vpop.f32.mrf.mxu0
      %v542 = vadd.f32 0.0, %v541
      %v543 = vpop.f32.mrf.mxu0
      %544 = vmatprep.mubr.f32.mxu0 0.0
      %545 = vmatmul.mubr.f32.gmra.mxu0 %v341
      %v546 = vpop.f32.mrf.mxu0
      %v547 = vadd.f32 0.0, %v546
      %v548 = vpop.f32.mrf.mxu0
      %549 = vmatprep.mubr.f32.mxu0 0.0
      %550 = vmatmul.mubr.f32.gmra.mxu0 %v344
      %v551 = vpop.f32.mrf.mxu0
      %v552 = vadd.f32 0.0, %v551
      %v553 = vpop.f32.mrf.mxu0
      %554 = vmatprep.mubr.f32.mxu0 0.0
      %555 = vmatmul.mubr.f32.gmra.mxu0 %v347
      %v556 = vpop.f32.mrf.mxu0
      %v557 = vadd.f32 0.0, %v556
      %v558 = vpop.f32.mrf.mxu0
      %559 = vmatprep.mubr.f32.mxu0 0.0
      %560 = vmatmul.mubr.f32.gmra.mxu0 %v350
      %v561 = vpop.f32.mrf.mxu0
      %v562 = vadd.f32 0.0, %v561
      %v563 = vpop.f32.mrf.mxu0
      %564 = vmatprep.mubr.f32.mxu0 0.0
      %565 = vmatmul.mubr.f32.gmra.mxu0 %v353
      %v566 = vpop.f32.mrf.mxu0
      %v567 = vadd.f32 0.0, %v566
      %v568 = vpop.f32.mrf.mxu0
      %569 = vmatprep.mubr.f32.mxu0 0.0
      %570 = vmatmul.mubr.f32.gmra.mxu0 %v356
      %v571 = vpop.f32.mrf.mxu0
      %v572 = vadd.f32 0.0, %v571
      %v573 = vpop.f32.mrf.mxu0
      %574 = vmatprep.mubr.f32.mxu0 0.0
      %575 = vmatmul.mubr.f32.gmra.mxu0 %v359
      %v576 = vpop.f32.mrf.mxu0
      %v577 = vadd.f32 0.0, %v576
      %v578 = vpop.f32.mrf.mxu0
      %579 = vmatprep.mubr.f32.mxu0 0.0
      %580 = vmatmul.mubr.f32.gmra.mxu0 %v362
      %v581 = vpop.f32.mrf.mxu0
      %v582 = vadd.f32 0.0, %v581
      %v583 = vpop.f32.mrf.mxu0
      %584 = vmatprep.mubr.f32.mxu0 0.0
      %585 = vmatmul.mubr.f32.gmra.mxu0 %v365
      %v586 = vpop.f32.mrf.mxu0
      %v587 = vadd.f32 0.0, %v586
      %v588 = vpop.f32.mrf.mxu0
      %589 = vmatprep.mubr.f32.mxu0 0.0
      %590 = vmatmul.mubr.f32.gmra.mxu0 %v368
      %v591 = vpop.f32.mrf.mxu0
      %v592 = vadd.f32 0.0, %v591
      %v593 = vpop.f32.mrf.mxu0
      %594 = vmatprep.mubr.f32.mxu0 0.0
      %595 = vmatmul.mubr.f32.gmra.mxu0 %v371
      %v596 = vpop.f32.mrf.mxu0
      %v597 = vadd.f32 0.0, %v596
      %v598 = vpop.f32.mrf.mxu0
      %599 = vmatprep.mubr.f32.mxu0 0.0
      %600 = vmatmul.mubr.f32.gmra.mxu0 %v374
      %v601 = vpop.f32.mrf.mxu0
      %v602 = vadd.f32 0.0, %v601
      %v603 = vpop.f32.mrf.mxu0
      %604 = vmatprep.mubr.f32.mxu0 0.0
      %605 = vmatmul.mubr.f32.gmra.mxu0 %v377
      %v606 = vpop.f32.mrf.mxu0
      %v607 = vadd.f32 0.0, %v606
      %v608 = vpop.f32.mrf.mxu0
      %609 = vmatprep.mubr.f32.mxu0 0.0
      %610 = vmatmul.mubr.f32.gmra.mxu0 %v380
      %v611 = vpop.f32.mrf.mxu0
      %v612 = vadd.f32 0.0, %v611
      %v613 = vpop.f32.mrf.mxu0
      %614 = vmatprep.mubr.f32.mxu0 0.0
      %615 = vmatmul.mubr.f32.gmra.mxu0 %v383
      %v616 = vpop.f32.mrf.mxu0
      %v617 = vadd.f32 0.0, %v616
      %v618 = vpop.f32.mrf.mxu0
      %619 = vmatprep.mubr.f32.mxu0 0.0
      %620 = vmatmul.mubr.f32.gmra.mxu0 %v386
      %v621 = vpop.f32.mrf.mxu0
      %v622 = vadd.f32 0.0, %v621
      %v623 = vpop.f32.mrf.mxu0
      %624 = vmatprep.mubr.f32.mxu0 0.0
      %625 = vmatmul.mubr.f32.gmra.mxu0 %v389
      %v626 = vpop.f32.mrf.mxu0
      %v627 = vadd.f32 0.0, %v626
      %v628 = vpop.f32.mrf.mxu0
      %629 = vmatprep.mubr.f32.mxu0 0.0
      %630 = vmatmul.mubr.f32.gmra.mxu0 %v392
      %v631 = vpop.f32.mrf.mxu0
      %v632 = vadd.f32 0.0, %v631
      %v633 = vpop.f32.mrf.mxu0
      %634 = vmatprep.mubr.f32.mxu0 0.0
      %635 = vmatmul.mubr.f32.gmra.mxu0 %v395
      %v636 = vpop.f32.mrf.mxu0
      %v637 = vadd.f32 0.0, %v636
      %v638 = vpop.f32.mrf.mxu0
      %639 = vmatprep.mubr.f32.mxu0 0.0
      %640 = vmatmul.mubr.f32.gmra.mxu0 %v398
      %v641 = vpop.f32.mrf.mxu0
      %v642 = vadd.f32 0.0, %v641
      %v643 = vpop.f32.mrf.mxu0
      %644 = vmatprep.mubr.f32.mxu0 0.0
      %645 = vmatmul.mubr.f32.gmra.mxu0 %v401
      %v646 = vpop.f32.mrf.mxu0
      %v647 = vadd.f32 0.0, %v646
      %v648 = vpop.f32.mrf.mxu0
      %649 = vmatprep.mubr.f32.mxu0 0.0
      %650 = vmatmul.mubr.f32.gmra.mxu0 %v404
      %v651 = vpop.f32.mrf.mxu0
      %v652 = vadd.f32 0.0, %v651
      %v653 = vpop.f32.mrf.mxu0
      %654 = vdwg.mxu0
      %v656 = vsel %vm297, %v222, 0
      %v659 = vsel %vm297, %v223, 0
      %v662 = vsel %vm297, %v224, 0
      %v665 = vsel %vm297, %v225, 0
      %v668 = vsel %vm297, %v226, 0
      %v671 = vsel %vm297, %v227, 0
      %v674 = vsel %vm297, %v228, 0
      %v677 = vsel %vm297, %v229, 0
      %v680 = vsel %vm297, %v230, 0
      %v683 = vsel %vm297, %v231, 0
      %v686 = vsel %vm297, %v232, 0
      %v689 = vsel %vm297, %v233, 0
      %v692 = vsel %vm297, %v234, 0
      %v695 = vsel %vm297, %v235, 0
      %v698 = vsel %vm297, %v236, 0
      %v701 = vsel %vm297, %v237, 0
      %v704 = vsel %vm297, %v238, 0
      %v707 = vsel %vm297, %v239, 0
      %v710 = vsel %vm297, %v240, 0
      %v713 = vsel %vm297, %v241, 0
      %v716 = vsel %vm297, %v242, 0
      %v719 = vsel %vm297, %v243, 0
      %v722 = vsel %vm297, %v244, 0
      %v725 = vsel %vm297, %v245, 0
      %v728 = vsel %vm297, %v246, 0
      %v731 = vsel %vm297, %v247, 0
      %v734 = vsel %vm297, %v248, 0
      %v737 = vsel %vm297, %v249, 0
      %v740 = vsel %vm297, %v250, 0
      %v743 = vsel %vm297, %v251, 0
      %v746 = vsel %vm297, %v252, 0
      %v749 = vsel %vm297, %v253, 0
      %v752 = vsel %vm297, %v254, 0
      %v755 = vsel %vm297, %v255, 0
      %v758 = vsel %vm297, %v256, 0
      %v761 = vsel %vm297, %v257, 0
      %v764 = vsel %vm406, %v258, 0
      %766 = vmatprep.subr.mxu0 0.0
      %767 = vmatpush1.msra.mxu0 0.0
      %768 = vmatprep.subr.mxu0 0.0
      %769 = vmatpush1.msra.mxu0 0.0
      %770 = vmatprep.subr.mxu0 0.0
      %771 = vmatpush1.msra.mxu0 0.0
      %772 = vmatprep.subr.mxu0 0.0
      %773 = vmatpush1.msra.mxu0 0.0
      %774 = vmatprep.subr.mxu0 0.0
      %775 = vmatpush1.msra.mxu0 0.0
      %776 = vmatprep.subr.mxu0 0.0
      %777 = vmatpush1.msra.mxu0 0.0
      %778 = vmatprep.subr.mxu0 0.0
      %779 = vmatpush1.msra.mxu0 0.0
      %780 = vmatprep.subr.mxu0 0.0
      %781 = vmatpush1.msra.mxu0 0.0
      %782 = vmatprep.subr.mxu0 0.0
      %783 = vmatpush1.msra.mxu0 0.0
      %784 = vmatprep.subr.mxu0 0.0
      %785 = vmatpush1.msra.mxu0 0.0
      %786 = vmatprep.subr.mxu0 0.0
      %787 = vmatpush1.msra.mxu0 0.0
      %788 = vmatprep.subr.mxu0 0.0
      %789 = vmatpush1.msra.mxu0 0.0
      %790 = vmatprep.subr.mxu0 0.0
      %791 = vmatpush1.msra.mxu0 0.0
      %792 = vmatprep.subr.mxu0 0.0
      %793 = vmatpush1.msra.mxu0 0.0
      %794 = vmatprep.subr.mxu0 0.0
      %795 = vmatpush1.msra.mxu0 0.0
      %796 = vmatprep.subr.mxu0 0.0
      %797 = vmatpush1.msra.mxu0 %v764
      %798 = vmatprep.subr.mxu0 0.0
      %799 = vmatpush2.msra.mxu0 0.0
      %800 = vmatprep.subr.mxu0 0.0
      %801 = vmatpush2.msra.mxu0 0.0
      %802 = vmatprep.subr.mxu0 0.0
      %803 = vmatpush2.msra.mxu0 0.0
      %804 = vmatprep.subr.mxu0 0.0
      %805 = vmatpush2.msra.mxu0 0.0
      %806 = vmatprep.subr.mxu0 0.0
      %807 = vmatpush2.msra.mxu0 0.0
      %808 = vmatprep.subr.mxu0 0.0
      %809 = vmatpush2.msra.mxu0 0.0
      %810 = vmatprep.subr.mxu0 0.0
      %811 = vmatpush2.msra.mxu0 0.0
      %812 = vmatprep.subr.mxu0 0.0
      %813 = vmatpush2.msra.mxu0 0.0
      %814 = vmatprep.subr.mxu0 0.0
      %815 = vmatpush2.msra.mxu0 0.0
      %816 = vmatprep.subr.mxu0 0.0
      %817 = vmatpush2.msra.mxu0 0.0
      %818 = vmatprep.subr.mxu0 0.0
      %819 = vmatpush2.msra.mxu0 0.0
      %820 = vmatprep.subr.mxu0 0.0
      %821 = vmatpush2.msra.mxu0 0.0
      %822 = vmatprep.subr.mxu0 0.0
      %823 = vmatpush2.msra.mxu0 0.0
      %824 = vmatprep.subr.mxu0 0.0
      %825 = vmatpush2.msra.mxu0 0.0
      %826 = vmatprep.subr.mxu0 0.0
      %827 = vmatpush2.msra.mxu0 0.0
      %828 = vmatprep.subr.mxu0 0.0
      %829 = vmatpush2.msra.mxu0 0.0
      %830 = vmatprep.mubr.f32.mxu0 0.0
      %831 = vmatmul.mubr.f32.gmra.mxu0 %v656
      %v832 = vpop.f32.mrf.mxu0
      %v833 = vadd.f32 %v477, %v832
      %v834 = vpop.f32.mrf.mxu0
      %835 = vmatprep.mubr.f32.mxu0 0.0
      %836 = vmatmul.mubr.f32.gmra.mxu0 %v659
      %v837 = vpop.f32.mrf.mxu0
      %v838 = vadd.f32 %v482, %v837
      %v839 = vpop.f32.mrf.mxu0
      %840 = vmatprep.mubr.f32.mxu0 0.0
      %841 = vmatmul.mubr.f32.gmra.mxu0 %v662
      %v842 = vpop.f32.mrf.mxu0
      %v843 = vadd.f32 %v487, %v842
      %v844 = vpop.f32.mrf.mxu0
      %845 = vmatprep.mubr.f32.mxu0 0.0
      %846 = vmatmul.mubr.f32.gmra.mxu0 %v665
      %v847 = vpop.f32.mrf.mxu0
      %v848 = vadd.f32 %v492, %v847
      %v849 = vpop.f32.mrf.mxu0
      %850 = vmatprep.mubr.f32.mxu0 0.0
      %851 = vmatmul.mubr.f32.gmra.mxu0 %v668
      %v852 = vpop.f32.mrf.mxu0
      %v853 = vadd.f32 %v497, %v852
      %v854 = vpop.f32.mrf.mxu0
      %855 = vmatprep.mubr.f32.mxu0 0.0
      %856 = vmatmul.mubr.f32.gmra.mxu0 %v671
      %v857 = vpop.f32.mrf.mxu0
      %v858 = vadd.f32 %v502, %v857
      %v859 = vpop.f32.mrf.mxu0
      %860 = vmatprep.mubr.f32.mxu0 0.0
      %861 = vmatmul.mubr.f32.gmra.mxu0 %v674
      %v862 = vpop.f32.mrf.mxu0
      %v863 = vadd.f32 %v507, %v862
      %v864 = vpop.f32.mrf.mxu0
      %865 = vmatprep.mubr.f32.mxu0 0.0
      %866 = vmatmul.mubr.f32.gmra.mxu0 %v677
      %v867 = vpop.f32.mrf.mxu0
      %v868 = vadd.f32 %v512, %v867
      %v869 = vpop.f32.mrf.mxu0
      %870 = vmatprep.mubr.f32.mxu0 0.0
      %871 = vmatmul.mubr.f32.gmra.mxu0 %v680
      %v872 = vpop.f32.mrf.mxu0
      %v873 = vadd.f32 %v517, %v872
      %v874 = vpop.f32.mrf.mxu0
      %875 = vmatprep.mubr.f32.mxu0 0.0
      %876 = vmatmul.mubr.f32.gmra.mxu0 %v683
      %v877 = vpop.f32.mrf.mxu0
      %v878 = vadd.f32 %v522, %v877
      %v879 = vpop.f32.mrf.mxu0
      %880 = vmatprep.mubr.f32.mxu0 0.0
      %881 = vmatmul.mubr.f32.gmra.mxu0 %v686
      %v882 = vpop.f32.mrf.mxu0
      %v883 = vadd.f32 %v527, %v882
      %v884 = vpop.f32.mrf.mxu0
      %885 = vmatprep.mubr.f32.mxu0 0.0
      %886 = vmatmul.mubr.f32.gmra.mxu0 %v689
      %v887 = vpop.f32.mrf.mxu0
      %v888 = vadd.f32 %v532, %v887
      %v889 = vpop.f32.mrf.mxu0
      %890 = vmatprep.mubr.f32.mxu0 0.0
      %891 = vmatmul.mubr.f32.gmra.mxu0 %v692
      %v892 = vpop.f32.mrf.mxu0
      %v893 = vadd.f32 %v537, %v892
      %v894 = vpop.f32.mrf.mxu0
      %895 = vmatprep.mubr.f32.mxu0 0.0
      %896 = vmatmul.mubr.f32.gmra.mxu0 %v695
      %v897 = vpop.f32.mrf.mxu0
      %v898 = vadd.f32 %v542, %v897
      %v899 = vpop.f32.mrf.mxu0
      %900 = vmatprep.mubr.f32.mxu0 0.0
      %901 = vmatmul.mubr.f32.gmra.mxu0 %v698
      %v902 = vpop.f32.mrf.mxu0
      %v903 = vadd.f32 %v547, %v902
      %v904 = vpop.f32.mrf.mxu0
      %905 = vmatprep.mubr.f32.mxu0 0.0
      %906 = vmatmul.mubr.f32.gmra.mxu0 %v701
      %v907 = vpop.f32.mrf.mxu0
      %v908 = vadd.f32 %v552, %v907
      %v909 = vpop.f32.mrf.mxu0
      %910 = vmatprep.mubr.f32.mxu0 0.0
      %911 = vmatmul.mubr.f32.gmra.mxu0 %v704
      %v912 = vpop.f32.mrf.mxu0
      %v913 = vadd.f32 %v557, %v912
      %v914 = vpop.f32.mrf.mxu0
      %915 = vmatprep.mubr.f32.mxu0 0.0
      %916 = vmatmul.mubr.f32.gmra.mxu0 %v707
      %v917 = vpop.f32.mrf.mxu0
      %v918 = vadd.f32 %v562, %v917
      %v919 = vpop.f32.mrf.mxu0
      %920 = vmatprep.mubr.f32.mxu0 0.0
      %921 = vmatmul.mubr.f32.gmra.mxu0 %v710
      %v922 = vpop.f32.mrf.mxu0
      %v923 = vadd.f32 %v567, %v922
      %v924 = vpop.f32.mrf.mxu0
      %925 = vmatprep.mubr.f32.mxu0 0.0
      %926 = vmatmul.mubr.f32.gmra.mxu0 %v713
      %v927 = vpop.f32.mrf.mxu0
      %v928 = vadd.f32 %v572, %v927
      %v929 = vpop.f32.mrf.mxu0
      %930 = vmatprep.mubr.f32.mxu0 0.0
      %931 = vmatmul.mubr.f32.gmra.mxu0 %v716
      %v932 = vpop.f32.mrf.mxu0
      %v933 = vadd.f32 %v577, %v932
      %v934 = vpop.f32.mrf.mxu0
      %935 = vmatprep.mubr.f32.mxu0 0.0
      %936 = vmatmul.mubr.f32.gmra.mxu0 %v719
      %v937 = vpop.f32.mrf.mxu0
      %v938 = vadd.f32 %v582, %v937
      %v939 = vpop.f32.mrf.mxu0
      %940 = vmatprep.mubr.f32.mxu0 0.0
      %941 = vmatmul.mubr.f32.gmra.mxu0 %v722
      %v942 = vpop.f32.mrf.mxu0
      %v943 = vadd.f32 %v587, %v942
      %v944 = vpop.f32.mrf.mxu0
      %945 = vmatprep.mubr.f32.mxu0 0.0
      %946 = vmatmul.mubr.f32.gmra.mxu0 %v725
      %v947 = vpop.f32.mrf.mxu0
      %v948 = vadd.f32 %v592, %v947
      %v949 = vpop.f32.mrf.mxu0
      %950 = vmatprep.mubr.f32.mxu0 0.0
      %951 = vmatmul.mubr.f32.gmra.mxu0 %v728
      %v952 = vpop.f32.mrf.mxu0
      %v953 = vadd.f32 %v597, %v952
      %v954 = vpop.f32.mrf.mxu0
      %955 = vmatprep.mubr.f32.mxu0 0.0
      %956 = vmatmul.mubr.f32.gmra.mxu0 %v731
      %v957 = vpop.f32.mrf.mxu0
      %v958 = vadd.f32 %v602, %v957
      %v959 = vpop.f32.mrf.mxu0
      %960 = vmatprep.mubr.f32.mxu0 0.0
      %961 = vmatmul.mubr.f32.gmra.mxu0 %v734
      %v962 = vpop.f32.mrf.mxu0
      %v963 = vadd.f32 %v607, %v962
      %v964 = vpop.f32.mrf.mxu0
      %965 = vmatprep.mubr.f32.mxu0 0.0
      %966 = vmatmul.mubr.f32.gmra.mxu0 %v737
      %v967 = vpop.f32.mrf.mxu0
      %v968 = vadd.f32 %v612, %v967
      %v969 = vpop.f32.mrf.mxu0
      %970 = vmatprep.mubr.f32.mxu0 0.0
      %971 = vmatmul.mubr.f32.gmra.mxu0 %v740
      %v972 = vpop.f32.mrf.mxu0
      %v973 = vadd.f32 %v617, %v972
      %v974 = vpop.f32.mrf.mxu0
      %975 = vmatprep.mubr.f32.mxu0 0.0
      %976 = vmatmul.mubr.f32.gmra.mxu0 %v743
      %v977 = vpop.f32.mrf.mxu0
      %v978 = vadd.f32 %v622, %v977
      %v979 = vpop.f32.mrf.mxu0
      %980 = vmatprep.mubr.f32.mxu0 0.0
      %981 = vmatmul.mubr.f32.gmra.mxu0 %v746
      %v982 = vpop.f32.mrf.mxu0
      %v983 = vadd.f32 %v627, %v982
      %v984 = vpop.f32.mrf.mxu0
      %985 = vmatprep.mubr.f32.mxu0 0.0
      %986 = vmatmul.mubr.f32.gmra.mxu0 %v749
      %v987 = vpop.f32.mrf.mxu0
      %v988 = vadd.f32 %v632, %v987
      %v989 = vpop.f32.mrf.mxu0
      %990 = vmatprep.mubr.f32.mxu0 0.0
      %991 = vmatmul.mubr.f32.gmra.mxu0 %v752
      %v992 = vpop.f32.mrf.mxu0
      %v993 = vadd.f32 %v637, %v992
      %v994 = vpop.f32.mrf.mxu0
      %995 = vmatprep.mubr.f32.mxu0 0.0
      %996 = vmatmul.mubr.f32.gmra.mxu0 %v755
      %v997 = vpop.f32.mrf.mxu0
      %v998 = vadd.f32 %v642, %v997
      %v999 = vpop.f32.mrf.mxu0
      %1000 = vmatprep.mubr.f32.mxu0 0.0
      %1001 = vmatmul.mubr.f32.gmra.mxu0 %v758
      %v1002 = vpop.f32.mrf.mxu0
      %v1003 = vadd.f32 %v647, %v1002
      %v1004 = vpop.f32.mrf.mxu0
      %1005 = vmatprep.mubr.f32.mxu0 0.0
      %1006 = vmatmul.mubr.f32.gmra.mxu0 %v761
      %v1007 = vpop.f32.mrf.mxu0
      %v1008 = vadd.f32 %v652, %v1007
      %v1009 = vpop.f32.mrf.mxu0
      %1010 = vdwg.mxu0
      %v1011 = vld [vmem:[%s206 + $0x2] sm:$0xff]
      %v1012 = vld [vmem:[%s206 + $0xa] sm:$0xff]
      %v1013 = vld [vmem:[%s206 + $0x12] sm:$0xff]
      %v1014 = vld [vmem:[%s206 + $0x1a] sm:$0xff]
      %v1015 = vld [vmem:[%s206 + $0x22] sm:$0xff]
      %v1016 = vld [vmem:[%s206 + $0x2a] sm:$0xff]
      %v1017 = vld [vmem:[%s206 + $0x32] sm:$0xff]
      %v1018 = vld [vmem:[%s206 + $0x3a] sm:$0xff]
      %v1019 = vld [vmem:[%s206 + $0x42] sm:$0xff]
      %v1020 = vld [vmem:[%s206 + $0x4a] sm:$0xff]
      %v1021 = vld [vmem:[%s206 + $0x52] sm:$0xff]
      %v1022 = vld [vmem:[%s206 + $0x5a] sm:$0xff]
      %v1023 = vld [vmem:[%s206 + $0x62] sm:$0xff]
      %v1024 = vld [vmem:[%s206 + $0x6a] sm:$0xff]
      %v1025 = vld [vmem:[%s206 + $0x72] sm:$0xff]
      %v1026 = vld [vmem:[%s206 + $0x7a] sm:$0xff]
      %v1027 = vld [vmem:[%s206 + $0x82] sm:$0xff]
      %v1028 = vld [vmem:[%s206 + $0x8a] sm:$0xff]
      %v1029 = vld [vmem:[%s206 + $0x92] sm:$0xff]
      %v1030 = vld [vmem:[%s206 + $0x9a] sm:$0xff]
      %v1031 = vld [vmem:[%s206 + $0xa2] sm:$0xff]
      %v1032 = vld [vmem:[%s206 + $0xaa] sm:$0xff]
      %v1033 = vld [vmem:[%s206 + $0xb2] sm:$0xff]
      %v1034 = vld [vmem:[%s206 + $0xba] sm:$0xff]
      %v1035 = vld [vmem:[%s206 + $0xc2] sm:$0xff]
      %v1036 = vld [vmem:[%s206 + $0xca] sm:$0xff]
      %v1037 = vld [vmem:[%s206 + $0xd2] sm:$0xff]
      %v1038 = vld [vmem:[%s206 + $0xda] sm:$0xff]
      %v1039 = vld [vmem:[%s206 + $0xe2] sm:$0xff]
      %v1040 = vld [vmem:[%s206 + $0xea] sm:$0xff]
      %v1041 = vld [vmem:[%s206 + $0xf2] sm:$0xff]
      %v1042 = vld [vmem:[%s206 + $0xfa] sm:$0xff]
      %v1043 = vld [vmem:[%s206 + $0x102] sm:$0xff]
      %v1044 = vld [vmem:[%s206 + $0x10a] sm:$0xff]
      %v1045 = vld [vmem:[%s206 + $0x112] sm:$0xff]
      %v1046 = vld [vmem:[%s206 + $0x11a] sm:$0xff]
      %s1047 = scalar_lea.vmem %s210, 8
      %v1048 = vld [vmem:[%s1047] sm:$0xf]
      %v1050 = vsel %vm297, %v1011, 0
      %v1053 = vsel %vm297, %v1012, 0
      %v1056 = vsel %vm297, %v1013, 0
      %v1059 = vsel %vm297, %v1014, 0
      %v1062 = vsel %vm297, %v1015, 0
      %v1065 = vsel %vm297, %v1016, 0
      %v1068 = vsel %vm297, %v1017, 0
      %v1071 = vsel %vm297, %v1018, 0
      %v1074 = vsel %vm297, %v1019, 0
      %v1077 = vsel %vm297, %v1020, 0
      %v1080 = vsel %vm297, %v1021, 0
      %v1083 = vsel %vm297, %v1022, 0
      %v1086 = vsel %vm297, %v1023, 0
      %v1089 = vsel %vm297, %v1024, 0
      %v1092 = vsel %vm297, %v1025, 0
      %v1095 = vsel %vm297, %v1026, 0
      %v1098 = vsel %vm297, %v1027, 0
      %v1101 = vsel %vm297, %v1028, 0
      %v1104 = vsel %vm297, %v1029, 0
      %v1107 = vsel %vm297, %v1030, 0
      %v1110 = vsel %vm297, %v1031, 0
      %v1113 = vsel %vm297, %v1032, 0
      %v1116 = vsel %vm297, %v1033, 0
      %v1119 = vsel %vm297, %v1034, 0
      %v1122 = vsel %vm297, %v1035, 0
      %v1125 = vsel %vm297, %v1036, 0
      %v1128 = vsel %vm297, %v1037, 0
      %v1131 = vsel %vm297, %v1038, 0
      %v1134 = vsel %vm297, %v1039, 0
      %v1137 = vsel %vm297, %v1040, 0
      %v1140 = vsel %vm297, %v1041, 0
      %v1143 = vsel %vm297, %v1042, 0
      %v1146 = vsel %vm297, %v1043, 0
      %v1149 = vsel %vm297, %v1044, 0
      %v1152 = vsel %vm297, %v1045, 0
      %v1155 = vsel %vm297, %v1046, 0
      %v1158 = vsel %vm406, %v1048, 0
      %1160 = vmatprep.subr.mxu0 0.0
      %1161 = vmatpush1.msra.mxu0 0.0
      %1162 = vmatprep.subr.mxu0 0.0
      %1163 = vmatpush1.msra.mxu0 0.0
      %1164 = vmatprep.subr.mxu0 0.0
      %1165 = vmatpush1.msra.mxu0 0.0
      %1166 = vmatprep.subr.mxu0 0.0
      %1167 = vmatpush1.msra.mxu0 0.0
      %1168 = vmatprep.subr.mxu0 0.0
      %1169 = vmatpush1.msra.mxu0 0.0
      %1170 = vmatprep.subr.mxu0 0.0
      %1171 = vmatpush1.msra.mxu0 0.0
      %1172 = vmatprep.subr.mxu0 0.0
      %1173 = vmatpush1.msra.mxu0 0.0
      %1174 = vmatprep.subr.mxu0 0.0
      %1175 = vmatpush1.msra.mxu0 0.0
      %1176 = vmatprep.subr.mxu0 0.0
      %1177 = vmatpush1.msra.mxu0 0.0
      %1178 = vmatprep.subr.mxu0 0.0
      %1179 = vmatpush1.msra.mxu0 0.0
      %1180 = vmatprep.subr.mxu0 0.0
      %1181 = vmatpush1.msra.mxu0 0.0
      %1182 = vmatprep.subr.mxu0 0.0
      %1183 = vmatpush1.msra.mxu0 0.0
      %1184 = vmatprep.subr.mxu0 0.0
      %1185 = vmatpush1.msra.mxu0 0.0
      %1186 = vmatprep.subr.mxu0 0.0
      %1187 = vmatpush1.msra.mxu0 0.0
      %1188 = vmatprep.subr.mxu0 0.0
      %1189 = vmatpush1.msra.mxu0 0.0
      %1190 = vmatprep.subr.mxu0 0.0
      %1191 = vmatpush1.msra.mxu0 %v1158
      %1192 = vmatprep.subr.mxu0 0.0
      %1193 = vmatpush2.msra.mxu0 0.0
      %1194 = vmatprep.subr.mxu0 0.0
      %1195 = vmatpush2.msra.mxu0 0.0
      %1196 = vmatprep.subr.mxu0 0.0
      %1197 = vmatpush2.msra.mxu0 0.0
      %1198 = vmatprep.subr.mxu0 0.0
      %1199 = vmatpush2.msra.mxu0 0.0
      %1200 = vmatprep.subr.mxu0 0.0
      %1201 = vmatpush2.msra.mxu0 0.0
      %1202 = vmatprep.subr.mxu0 0.0
      %1203 = vmatpush2.msra.mxu0 0.0
      %1204 = vmatprep.subr.mxu0 0.0
      %1205 = vmatpush2.msra.mxu0 0.0
      %1206 = vmatprep.subr.mxu0 0.0
      %1207 = vmatpush2.msra.mxu0 0.0
      %1208 = vmatprep.subr.mxu0 0.0
      %1209 = vmatpush2.msra.mxu0 0.0
      %1210 = vmatprep.subr.mxu0 0.0
      %1211 = vmatpush2.msra.mxu0 0.0
      %1212 = vmatprep.subr.mxu0 0.0
      %1213 = vmatpush2.msra.mxu0 0.0
      %1214 = vmatprep.subr.mxu0 0.0
      %1215 = vmatpush2.msra.mxu0 0.0
      %1216 = vmatprep.subr.mxu0 0.0
      %1217 = vmatpush2.msra.mxu0 0.0
      %1218 = vmatprep.subr.mxu0 0.0
      %1219 = vmatpush2.msra.mxu0 0.0
      %1220 = vmatprep.subr.mxu0 0.0
      %1221 = vmatpush2.msra.mxu0 0.0
      %1222 = vmatprep.subr.mxu0 0.0
      %1223 = vmatpush2.msra.mxu0 0.0
      %1224 = vmatprep.mubr.f32.mxu0 0.0
      %1225 = vmatmul.mubr.f32.gmra.mxu0 %v1050
      %v1226 = vpop.f32.mrf.mxu0
      %v1227 = vadd.f32 0.0, %v1226
      %v1228 = vpop.f32.mrf.mxu0
      %1229 = vmatprep.mubr.f32.mxu0 0.0
      %1230 = vmatmul.mubr.f32.gmra.mxu0 %v1053
      %v1231 = vpop.f32.mrf.mxu0
      %v1232 = vadd.f32 0.0, %v1231
      %v1233 = vpop.f32.mrf.mxu0
      %1234 = vmatprep.mubr.f32.mxu0 0.0
      %1235 = vmatmul.mubr.f32.gmra.mxu0 %v1056
      %v1236 = vpop.f32.mrf.mxu0
      %v1237 = vadd.f32 0.0, %v1236
      %v1238 = vpop.f32.mrf.mxu0
      %1239 = vmatprep.mubr.f32.mxu0 0.0
      %1240 = vmatmul.mubr.f32.gmra.mxu0 %v1059
      %v1241 = vpop.f32.mrf.mxu0
      %v1242 = vadd.f32 0.0, %v1241
      %v1243 = vpop.f32.mrf.mxu0
      %1244 = vmatprep.mubr.f32.mxu0 0.0
      %1245 = vmatmul.mubr.f32.gmra.mxu0 %v1062
      %v1246 = vpop.f32.mrf.mxu0
      %v1247 = vadd.f32 0.0, %v1246
      %v1248 = vpop.f32.mrf.mxu0
      %1249 = vmatprep.mubr.f32.mxu0 0.0
      %1250 = vmatmul.mubr.f32.gmra.mxu0 %v1065
      %v1251 = vpop.f32.mrf.mxu0
      %v1252 = vadd.f32 0.0, %v1251
      %v1253 = vpop.f32.mrf.mxu0
      %1254 = vmatprep.mubr.f32.mxu0 0.0
      %1255 = vmatmul.mubr.f32.gmra.mxu0 %v1068
      %v1256 = vpop.f32.mrf.mxu0
      %v1257 = vadd.f32 0.0, %v1256
      %v1258 = vpop.f32.mrf.mxu0
      %1259 = vmatprep.mubr.f32.mxu0 0.0
      %1260 = vmatmul.mubr.f32.gmra.mxu0 %v1071
      %v1261 = vpop.f32.mrf.mxu0
      %v1262 = vadd.f32 0.0, %v1261
      %v1263 = vpop.f32.mrf.mxu0
      %1264 = vmatprep.mubr.f32.mxu0 0.0
      %1265 = vmatmul.mubr.f32.gmra.mxu0 %v1074
      %v1266 = vpop.f32.mrf.mxu0
      %v1267 = vadd.f32 0.0, %v1266
      %v1268 = vpop.f32.mrf.mxu0
      %1269 = vmatprep.mubr.f32.mxu0 0.0
      %1270 = vmatmul.mubr.f32.gmra.mxu0 %v1077
      %v1271 = vpop.f32.mrf.mxu0
      %v1272 = vadd.f32 0.0, %v1271
      %v1273 = vpop.f32.mrf.mxu0
      %1274 = vmatprep.mubr.f32.mxu0 0.0
      %1275 = vmatmul.mubr.f32.gmra.mxu0 %v1080
      %v1276 = vpop.f32.mrf.mxu0
      %v1277 = vadd.f32 0.0, %v1276
      %v1278 = vpop.f32.mrf.mxu0
      %1279 = vmatprep.mubr.f32.mxu0 0.0
      %1280 = vmatmul.mubr.f32.gmra.mxu0 %v1083
      %v1281 = vpop.f32.mrf.mxu0
      %v1282 = vadd.f32 0.0, %v1281
      %v1283 = vpop.f32.mrf.mxu0
      %1284 = vmatprep.mubr.f32.mxu0 0.0
      %1285 = vmatmul.mubr.f32.gmra.mxu0 %v1086
      %v1286 = vpop.f32.mrf.mxu0
      %v1287 = vadd.f32 0.0, %v1286
      %v1288 = vpop.f32.mrf.mxu0
      %1289 = vmatprep.mubr.f32.mxu0 0.0
      %1290 = vmatmul.mubr.f32.gmra.mxu0 %v1089
      %v1291 = vpop.f32.mrf.mxu0
      %v1292 = vadd.f32 0.0, %v1291
      %v1293 = vpop.f32.mrf.mxu0
      %1294 = vmatprep.mubr.f32.mxu0 0.0
      %1295 = vmatmul.mubr.f32.gmra.mxu0 %v1092
      %v1296 = vpop.f32.mrf.mxu0
      %v1297 = vadd.f32 0.0, %v1296
      %v1298 = vpop.f32.mrf.mxu0
      %1299 = vmatprep.mubr.f32.mxu0 0.0
      %1300 = vmatmul.mubr.f32.gmra.mxu0 %v1095
      %v1301 = vpop.f32.mrf.mxu0
      %v1302 = vadd.f32 0.0, %v1301
      %v1303 = vpop.f32.mrf.mxu0
      %1304 = vmatprep.mubr.f32.mxu0 0.0
      %1305 = vmatmul.mubr.f32.gmra.mxu0 %v1098
      %v1306 = vpop.f32.mrf.mxu0
      %v1307 = vadd.f32 0.0, %v1306
      %v1308 = vpop.f32.mrf.mxu0
      %1309 = vmatprep.mubr.f32.mxu0 0.0
      %1310 = vmatmul.mubr.f32.gmra.mxu0 %v1101
      %v1311 = vpop.f32.mrf.mxu0
      %v1312 = vadd.f32 0.0, %v1311
      %v1313 = vpop.f32.mrf.mxu0
      %1314 = vmatprep.mubr.f32.mxu0 0.0
      %1315 = vmatmul.mubr.f32.gmra.mxu0 %v1104
      %v1316 = vpop.f32.mrf.mxu0
      %v1317 = vadd.f32 0.0, %v1316
      %v1318 = vpop.f32.mrf.mxu0
      %1319 = vmatprep.mubr.f32.mxu0 0.0
      %1320 = vmatmul.mubr.f32.gmra.mxu0 %v1107
      %v1321 = vpop.f32.mrf.mxu0
      %v1322 = vadd.f32 0.0, %v1321
      %v1323 = vpop.f32.mrf.mxu0
      %1324 = vmatprep.mubr.f32.mxu0 0.0
      %1325 = vmatmul.mubr.f32.gmra.mxu0 %v1110
      %v1326 = vpop.f32.mrf.mxu0
      %v1327 = vadd.f32 0.0, %v1326
      %v1328 = vpop.f32.mrf.mxu0
      %1329 = vmatprep.mubr.f32.mxu0 0.0
      %1330 = vmatmul.mubr.f32.gmra.mxu0 %v1113
      %v1331 = vpop.f32.mrf.mxu0
      %v1332 = vadd.f32 0.0, %v1331
      %v1333 = vpop.f32.mrf.mxu0
      %1334 = vmatprep.mubr.f32.mxu0 0.0
      %1335 = vmatmul.mubr.f32.gmra.mxu0 %v1116
      %v1336 = vpop.f32.mrf.mxu0
      %v1337 = vadd.f32 0.0, %v1336
      %v1338 = vpop.f32.mrf.mxu0
      %1339 = vmatprep.mubr.f32.mxu0 0.0
      %1340 = vmatmul.mubr.f32.gmra.mxu0 %v1119
      %v1341 = vpop.f32.mrf.mxu0
      %v1342 = vadd.f32 0.0, %v1341
      %v1343 = vpop.f32.mrf.mxu0
      %1344 = vmatprep.mubr.f32.mxu0 0.0
      %1345 = vmatmul.mubr.f32.gmra.mxu0 %v1122
      %v1346 = vpop.f32.mrf.mxu0
      %v1347 = vadd.f32 0.0, %v1346
      %v1348 = vpop.f32.mrf.mxu0
      %1349 = vmatprep.mubr.f32.mxu0 0.0
      %1350 = vmatmul.mubr.f32.gmra.mxu0 %v1125
      %v1351 = vpop.f32.mrf.mxu0
      %v1352 = vadd.f32 0.0, %v1351
      %v1353 = vpop.f32.mrf.mxu0
      %1354 = vmatprep.mubr.f32.mxu0 0.0
      %1355 = vmatmul.mubr.f32.gmra.mxu0 %v1128
      %v1356 = vpop.f32.mrf.mxu0
      %v1357 = vadd.f32 0.0, %v1356
      %v1358 = vpop.f32.mrf.mxu0
      %1359 = vmatprep.mubr.f32.mxu0 0.0
      %1360 = vmatmul.mubr.f32.gmra.mxu0 %v1131
      %v1361 = vpop.f32.mrf.mxu0
      %v1362 = vadd.f32 0.0, %v1361
      %v1363 = vpop.f32.mrf.mxu0
      %1364 = vmatprep.mubr.f32.mxu0 0.0
      %1365 = vmatmul.mubr.f32.gmra.mxu0 %v1134
      %v1366 = vpop.f32.mrf.mxu0
      %v1367 = vadd.f32 0.0, %v1366
      %v1368 = vpop.f32.mrf.mxu0
      %1369 = vmatprep.mubr.f32.mxu0 0.0
      %1370 = vmatmul.mubr.f32.gmra.mxu0 %v1137
      %v1371 = vpop.f32.mrf.mxu0
      %v1372 = vadd.f32 0.0, %v1371
      %v1373 = vpop.f32.mrf.mxu0
      %1374 = vmatprep.mubr.f32.mxu0 0.0
      %1375 = vmatmul.mubr.f32.gmra.mxu0 %v1140
      %v1376 = vpop.f32.mrf.mxu0
      %v1377 = vadd.f32 0.0, %v1376
      %v1378 = vpop.f32.mrf.mxu0
      %1379 = vmatprep.mubr.f32.mxu0 0.0
      %1380 = vmatmul.mubr.f32.gmra.mxu0 %v1143
      %v1381 = vpop.f32.mrf.mxu0
      %v1382 = vadd.f32 0.0, %v1381
      %v1383 = vpop.f32.mrf.mxu0
      %1384 = vmatprep.mubr.f32.mxu0 0.0
      %1385 = vmatmul.mubr.f32.gmra.mxu0 %v1146
      %v1386 = vpop.f32.mrf.mxu0
      %v1387 = vadd.f32 0.0, %v1386
      %v1388 = vpop.f32.mrf.mxu0
      %1389 = vmatprep.mubr.f32.mxu0 0.0
      %1390 = vmatmul.mubr.f32.gmra.mxu0 %v1149
      %v1391 = vpop.f32.mrf.mxu0
      %v1392 = vadd.f32 0.0, %v1391
      %v1393 = vpop.f32.mrf.mxu0
      %1394 = vmatprep.mubr.f32.mxu0 0.0
      %1395 = vmatmul.mubr.f32.gmra.mxu0 %v1152
      %v1396 = vpop.f32.mrf.mxu0
      %v1397 = vadd.f32 0.0, %v1396
      %v1398 = vpop.f32.mrf.mxu0
      %1399 = vmatprep.mubr.f32.mxu0 0.0
      %1400 = vmatmul.mubr.f32.gmra.mxu0 %v1155
      %v1401 = vpop.f32.mrf.mxu0
      %v1402 = vadd.f32 0.0, %v1401
      %v1403 = vpop.f32.mrf.mxu0
      %1404 = vdwg.mxu0
      %v1405 = vadd.f32 %v833, %v1227
      %v1406 = vadd.f32 %v838, %v1232
      %v1407 = vadd.f32 %v843, %v1237
      %v1408 = vadd.f32 %v848, %v1242
      %v1409 = vadd.f32 %v853, %v1247
      %v1410 = vadd.f32 %v858, %v1252
      %v1411 = vadd.f32 %v863, %v1257
      %v1412 = vadd.f32 %v868, %v1262
      %v1413 = vadd.f32 %v873, %v1267
      %v1414 = vadd.f32 %v878, %v1272
      %v1415 = vadd.f32 %v883, %v1277
      %v1416 = vadd.f32 %v888, %v1282
      %v1417 = vadd.f32 %v893, %v1287
      %v1418 = vadd.f32 %v898, %v1292
      %v1419 = vadd.f32 %v903, %v1297
      %v1420 = vadd.f32 %v908, %v1302
      %v1421 = vadd.f32 %v913, %v1307
      %v1422 = vadd.f32 %v918, %v1312
      %v1423 = vadd.f32 %v923, %v1317
      %v1424 = vadd.f32 %v928, %v1322
      %v1425 = vadd.f32 %v933, %v1327
      %v1426 = vadd.f32 %v938, %v1332
      %v1427 = vadd.f32 %v943, %v1337
      %v1428 = vadd.f32 %v948, %v1342
      %v1429 = vadd.f32 %v953, %v1347
      %v1430 = vadd.f32 %v958, %v1352
      %v1431 = vadd.f32 %v963, %v1357
      %v1432 = vadd.f32 %v968, %v1362
      %v1433 = vadd.f32 %v973, %v1367
      %v1434 = vadd.f32 %v978, %v1372
      %v1435 = vadd.f32 %v983, %v1377
      %v1436 = vadd.f32 %v988, %v1382
      %v1437 = vadd.f32 %v993, %v1387
      %v1438 = vadd.f32 %v998, %v1392
      %v1439 = vadd.f32 %v1003, %v1397
      %v1440 = vadd.f32 %v1008, %v1402
      %v1441 = vld [vmem:[%s206 + $0x12] sm:$0xff]
      %v1442 = vld [vmem:[%s206 + $0x1a] sm:$0xff]
      %v1443 = vld [vmem:[%s206 + $0x22] sm:$0xff]
      %v1444 = vld [vmem:[%s206 + $0x2a] sm:$0xff]
      %v1445 = vld [vmem:[%s206 + $0x32] sm:$0xff]
      %v1446 = vld [vmem:[%s206 + $0x3a] sm:$0xff]
      %v1447 = vld [vmem:[%s206 + $0x42] sm:$0xff]
      %v1448 = vld [vmem:[%s206 + $0x4a] sm:$0xff]
      %v1449 = vld [vmem:[%s206 + $0x52] sm:$0xff]
      %v1450 = vld [vmem:[%s206 + $0x5a] sm:$0xff]
      %v1451 = vld [vmem:[%s206 + $0x62] sm:$0xff]
      %v1452 = vld [vmem:[%s206 + $0x6a] sm:$0xff]
      %v1453 = vld [vmem:[%s206 + $0x72] sm:$0xff]
      %v1454 = vld [vmem:[%s206 + $0x7a] sm:$0xff]
      %v1455 = vld [vmem:[%s206 + $0x82] sm:$0xff]
      %v1456 = vld [vmem:[%s206 + $0x8a] sm:$0xff]
      %v1457 = vld [vmem:[%s206 + $0x92] sm:$0xff]
      %v1458 = vld [vmem:[%s206 + $0x9a] sm:$0xff]
      %v1459 = vld [vmem:[%s206 + $0xa2] sm:$0xff]
      %v1460 = vld [vmem:[%s206 + $0xaa] sm:$0xff]
      %v1461 = vld [vmem:[%s206 + $0xb2] sm:$0xff]
      %v1462 = vld [vmem:[%s206 + $0xba] sm:$0xff]
      %v1463 = vld [vmem:[%s206 + $0xc2] sm:$0xff]
      %v1464 = vld [vmem:[%s206 + $0xca] sm:$0xff]
      %v1465 = vld [vmem:[%s206 + $0xd2] sm:$0xff]
      %v1466 = vld [vmem:[%s206 + $0xda] sm:$0xff]
      %v1467 = vld [vmem:[%s206 + $0xe2] sm:$0xff]
      %v1468 = vld [vmem:[%s206 + $0xea] sm:$0xff]
      %v1469 = vld [vmem:[%s206 + $0xf2] sm:$0xff]
      %v1470 = vld [vmem:[%s206 + $0xfa] sm:$0xff]
      %v1471 = vld [vmem:[%s206 + $0x102] sm:$0xff]
      %v1472 = vld [vmem:[%s206 + $0x10a] sm:$0xff]
      %v1473 = vld [vmem:[%s206 + $0x112] sm:$0xff]
      %v1474 = vld [vmem:[%s206 + $0x11a] sm:$0xff]
      %v1475 = vld [vmem:[%s206 + $0x122] sm:$0xff]
      %v1476 = vld [vmem:[%s206 + $0x12a] sm:$0xff]
      %s1477 = scalar_lea.vmem %s210, 12
      %v1478 = vld [vmem:[%s1477] sm:$0xf]
      %v1480 = vsel %vm297, %v1441, 0
      %v1483 = vsel %vm297, %v1442, 0
      %v1486 = vsel %vm297, %v1443, 0
      %v1489 = vsel %vm297, %v1444, 0
      %v1492 = vsel %vm297, %v1445, 0
      %v1495 = vsel %vm297, %v1446, 0
      %v1498 = vsel %vm297, %v1447, 0
      %v1501 = vsel %vm297, %v1448, 0
      %v1504 = vsel %vm297, %v1449, 0
      %v1507 = vsel %vm297, %v1450, 0
      %v1510 = vsel %vm297, %v1451, 0
      %v1513 = vsel %vm297, %v1452, 0
      %v1516 = vsel %vm297, %v1453, 0
      %v1519 = vsel %vm297, %v1454, 0
      %v1522 = vsel %vm297, %v1455, 0
      %v1525 = vsel %vm297, %v1456, 0
      %v1528 = vsel %vm297, %v1457, 0
      %v1531 = vsel %vm297, %v1458, 0
      %v1534 = vsel %vm297, %v1459, 0
      %v1537 = vsel %vm297, %v1460, 0
      %v1540 = vsel %vm297, %v1461, 0
      %v1543 = vsel %vm297, %v1462, 0
      %v1546 = vsel %vm297, %v1463, 0
      %v1549 = vsel %vm297, %v1464, 0
      %v1552 = vsel %vm297, %v1465, 0
      %v1555 = vsel %vm297, %v1466, 0
      %v1558 = vsel %vm297, %v1467, 0
      %v1561 = vsel %vm297, %v1468, 0
      %v1564 = vsel %vm297, %v1469, 0
      %v1567 = vsel %vm297, %v1470, 0
      %v1570 = vsel %vm297, %v1471, 0
      %v1573 = vsel %vm297, %v1472, 0
      %v1576 = vsel %vm297, %v1473, 0
      %v1579 = vsel %vm297, %v1474, 0
      %v1582 = vsel %vm297, %v1475, 0
      %v1585 = vsel %vm297, %v1476, 0
      %v1588 = vsel %vm406, %v1478, 0
      %1590 = vmatprep.subr.mxu0 0.0
      %1591 = vmatpush1.msra.mxu0 0.0
      %1592 = vmatprep.subr.mxu0 0.0
      %1593 = vmatpush1.msra.mxu0 0.0
      %1594 = vmatprep.subr.mxu0 0.0
      %1595 = vmatpush1.msra.mxu0 0.0
      %1596 = vmatprep.subr.mxu0 0.0
      %1597 = vmatpush1.msra.mxu0 0.0
      %1598 = vmatprep.subr.mxu0 0.0
      %1599 = vmatpush1.msra.mxu0 0.0
      %1600 = vmatprep.subr.mxu0 0.0
      %1601 = vmatpush1.msra.mxu0 0.0
      %1602 = vmatprep.subr.mxu0 0.0
      %1603 = vmatpush1.msra.mxu0 0.0
      %1604 = vmatprep.subr.mxu0 0.0
      %1605 = vmatpush1.msra.mxu0 0.0
      %1606 = vmatprep.subr.mxu0 0.0
      %1607 = vmatpush1.msra.mxu0 0.0
      %1608 = vmatprep.subr.mxu0 0.0
      %1609 = vmatpush1.msra.mxu0 0.0
      %1610 = vmatprep.subr.mxu0 0.0
      %1611 = vmatpush1.msra.mxu0 0.0
      %1612 = vmatprep.subr.mxu0 0.0
      %1613 = vmatpush1.msra.mxu0 0.0
      %1614 = vmatprep.subr.mxu0 0.0
      %1615 = vmatpush1.msra.mxu0 0.0
      %1616 = vmatprep.subr.mxu0 0.0
      %1617 = vmatpush1.msra.mxu0 0.0
      %1618 = vmatprep.subr.mxu0 0.0
      %1619 = vmatpush1.msra.mxu0 0.0
      %1620 = vmatprep.subr.mxu0 0.0
      %1621 = vmatpush1.msra.mxu0 %v1588
      %1622 = vmatprep.subr.mxu0 0.0
      %1623 = vmatpush2.msra.mxu0 0.0
      %1624 = vmatprep.subr.mxu0 0.0
      %1625 = vmatpush2.msra.mxu0 0.0
      %1626 = vmatprep.subr.mxu0 0.0
      %1627 = vmatpush2.msra.mxu0 0.0
      %1628 = vmatprep.subr.mxu0 0.0
      %1629 = vmatpush2.msra.mxu0 0.0
      %1630 = vmatprep.subr.mxu0 0.0
      %1631 = vmatpush2.msra.mxu0 0.0
      %1632 = vmatprep.subr.mxu0 0.0
      %1633 = vmatpush2.msra.mxu0 0.0
      %1634 = vmatprep.subr.mxu0 0.0
      %1635 = vmatpush2.msra.mxu0 0.0
      %1636 = vmatprep.subr.mxu0 0.0
      %1637 = vmatpush2.msra.mxu0 0.0
      %1638 = vmatprep.subr.mxu0 0.0
      %1639 = vmatpush2.msra.mxu0 0.0
      %1640 = vmatprep.subr.mxu0 0.0
      %1641 = vmatpush2.msra.mxu0 0.0
      %1642 = vmatprep.subr.mxu0 0.0
      %1643 = vmatpush2.msra.mxu0 0.0
      %1644 = vmatprep.subr.mxu0 0.0
      %1645 = vmatpush2.msra.mxu0 0.0
      %1646 = vmatprep.subr.mxu0 0.0
      %1647 = vmatpush2.msra.mxu0 0.0
      %1648 = vmatprep.subr.mxu0 0.0
      %1649 = vmatpush2.msra.mxu0 0.0
      %1650 = vmatprep.subr.mxu0 0.0
      %1651 = vmatpush2.msra.mxu0 0.0
      %1652 = vmatprep.subr.mxu0 0.0
      %1653 = vmatpush2.msra.mxu0 0.0
      %1654 = vmatprep.mubr.f32.mxu0 0.0
      %1655 = vmatmul.mubr.f32.gmra.mxu0 %v1480
      %v1656 = vpop.f32.mrf.mxu0
      %v1657 = vadd.f32 0.0, %v1656
      %v1658 = vpop.f32.mrf.mxu0
      %1659 = vmatprep.mubr.f32.mxu0 0.0
      %1660 = vmatmul.mubr.f32.gmra.mxu0 %v1483
      %v1661 = vpop.f32.mrf.mxu0
      %v1662 = vadd.f32 0.0, %v1661
      %v1663 = vpop.f32.mrf.mxu0
      %1664 = vmatprep.mubr.f32.mxu0 0.0
      %1665 = vmatmul.mubr.f32.gmra.mxu0 %v1486
      %v1666 = vpop.f32.mrf.mxu0
      %v1667 = vadd.f32 0.0, %v1666
      %v1668 = vpop.f32.mrf.mxu0
      %1669 = vmatprep.mubr.f32.mxu0 0.0
      %1670 = vmatmul.mubr.f32.gmra.mxu0 %v1489
      %v1671 = vpop.f32.mrf.mxu0
      %v1672 = vadd.f32 0.0, %v1671
      %v1673 = vpop.f32.mrf.mxu0
      %1674 = vmatprep.mubr.f32.mxu0 0.0
      %1675 = vmatmul.mubr.f32.gmra.mxu0 %v1492
      %v1676 = vpop.f32.mrf.mxu0
      %v1677 = vadd.f32 0.0, %v1676
      %v1678 = vpop.f32.mrf.mxu0
      %1679 = vmatprep.mubr.f32.mxu0 0.0
      %1680 = vmatmul.mubr.f32.gmra.mxu0 %v1495
      %v1681 = vpop.f32.mrf.mxu0
      %v1682 = vadd.f32 0.0, %v1681
      %v1683 = vpop.f32.mrf.mxu0
      %1684 = vmatprep.mubr.f32.mxu0 0.0
      %1685 = vmatmul.mubr.f32.gmra.mxu0 %v1498
      %v1686 = vpop.f32.mrf.mxu0
      %v1687 = vadd.f32 0.0, %v1686
      %v1688 = vpop.f32.mrf.mxu0
      %1689 = vmatprep.mubr.f32.mxu0 0.0
      %1690 = vmatmul.mubr.f32.gmra.mxu0 %v1501
      %v1691 = vpop.f32.mrf.mxu0
      %v1692 = vadd.f32 0.0, %v1691
      %v1693 = vpop.f32.mrf.mxu0
      %1694 = vmatprep.mubr.f32.mxu0 0.0
      %1695 = vmatmul.mubr.f32.gmra.mxu0 %v1504
      %v1696 = vpop.f32.mrf.mxu0
      %v1697 = vadd.f32 0.0, %v1696
      %v1698 = vpop.f32.mrf.mxu0
      %1699 = vmatprep.mubr.f32.mxu0 0.0
      %1700 = vmatmul.mubr.f32.gmra.mxu0 %v1507
      %v1701 = vpop.f32.mrf.mxu0
      %v1702 = vadd.f32 0.0, %v1701
      %v1703 = vpop.f32.mrf.mxu0
      %1704 = vmatprep.mubr.f32.mxu0 0.0
      %1705 = vmatmul.mubr.f32.gmra.mxu0 %v1510
      %v1706 = vpop.f32.mrf.mxu0
      %v1707 = vadd.f32 0.0, %v1706
      %v1708 = vpop.f32.mrf.mxu0
      %1709 = vmatprep.mubr.f32.mxu0 0.0
      %1710 = vmatmul.mubr.f32.gmra.mxu0 %v1513
      %v1711 = vpop.f32.mrf.mxu0
      %v1712 = vadd.f32 0.0, %v1711
      %v1713 = vpop.f32.mrf.mxu0
      %1714 = vmatprep.mubr.f32.mxu0 0.0
      %1715 = vmatmul.mubr.f32.gmra.mxu0 %v1516
      %v1716 = vpop.f32.mrf.mxu0
      %v1717 = vadd.f32 0.0, %v1716
      %v1718 = vpop.f32.mrf.mxu0
      %1719 = vmatprep.mubr.f32.mxu0 0.0
      %1720 = vmatmul.mubr.f32.gmra.mxu0 %v1519
      %v1721 = vpop.f32.mrf.mxu0
      %v1722 = vadd.f32 0.0, %v1721
      %v1723 = vpop.f32.mrf.mxu0
      %1724 = vmatprep.mubr.f32.mxu0 0.0
      %1725 = vmatmul.mubr.f32.gmra.mxu0 %v1522
      %v1726 = vpop.f32.mrf.mxu0
      %v1727 = vadd.f32 0.0, %v1726
      %v1728 = vpop.f32.mrf.mxu0
      %1729 = vmatprep.mubr.f32.mxu0 0.0
      %1730 = vmatmul.mubr.f32.gmra.mxu0 %v1525
      %v1731 = vpop.f32.mrf.mxu0
      %v1732 = vadd.f32 0.0, %v1731
      %v1733 = vpop.f32.mrf.mxu0
      %1734 = vmatprep.mubr.f32.mxu0 0.0
      %1735 = vmatmul.mubr.f32.gmra.mxu0 %v1528
      %v1736 = vpop.f32.mrf.mxu0
      %v1737 = vadd.f32 0.0, %v1736
      %v1738 = vpop.f32.mrf.mxu0
      %1739 = vmatprep.mubr.f32.mxu0 0.0
      %1740 = vmatmul.mubr.f32.gmra.mxu0 %v1531
      %v1741 = vpop.f32.mrf.mxu0
      %v1742 = vadd.f32 0.0, %v1741
      %v1743 = vpop.f32.mrf.mxu0
      %1744 = vmatprep.mubr.f32.mxu0 0.0
      %1745 = vmatmul.mubr.f32.gmra.mxu0 %v1534
      %v1746 = vpop.f32.mrf.mxu0
      %v1747 = vadd.f32 0.0, %v1746
      %v1748 = vpop.f32.mrf.mxu0
      %1749 = vmatprep.mubr.f32.mxu0 0.0
      %1750 = vmatmul.mubr.f32.gmra.mxu0 %v1537
      %v1751 = vpop.f32.mrf.mxu0
      %v1752 = vadd.f32 0.0, %v1751
      %v1753 = vpop.f32.mrf.mxu0
      %1754 = vmatprep.mubr.f32.mxu0 0.0
      %1755 = vmatmul.mubr.f32.gmra.mxu0 %v1540
      %v1756 = vpop.f32.mrf.mxu0
      %v1757 = vadd.f32 0.0, %v1756
      %v1758 = vpop.f32.mrf.mxu0
      %1759 = vmatprep.mubr.f32.mxu0 0.0
      %1760 = vmatmul.mubr.f32.gmra.mxu0 %v1543
      %v1761 = vpop.f32.mrf.mxu0
      %v1762 = vadd.f32 0.0, %v1761
      %v1763 = vpop.f32.mrf.mxu0
      %1764 = vmatprep.mubr.f32.mxu0 0.0
      %1765 = vmatmul.mubr.f32.gmra.mxu0 %v1546
      %v1766 = vpop.f32.mrf.mxu0
      %v1767 = vadd.f32 0.0, %v1766
      %v1768 = vpop.f32.mrf.mxu0
      %1769 = vmatprep.mubr.f32.mxu0 0.0
      %1770 = vmatmul.mubr.f32.gmra.mxu0 %v1549
      %v1771 = vpop.f32.mrf.mxu0
      %v1772 = vadd.f32 0.0, %v1771
      %v1773 = vpop.f32.mrf.mxu0
      %1774 = vmatprep.mubr.f32.mxu0 0.0
      %1775 = vmatmul.mubr.f32.gmra.mxu0 %v1552
      %v1776 = vpop.f32.mrf.mxu0
      %v1777 = vadd.f32 0.0, %v1776
      %v1778 = vpop.f32.mrf.mxu0
      %1779 = vmatprep.mubr.f32.mxu0 0.0
      %1780 = vmatmul.mubr.f32.gmra.mxu0 %v1555
      %v1781 = vpop.f32.mrf.mxu0
      %v1782 = vadd.f32 0.0, %v1781
      %v1783 = vpop.f32.mrf.mxu0
      %1784 = vmatprep.mubr.f32.mxu0 0.0
      %1785 = vmatmul.mubr.f32.gmra.mxu0 %v1558
      %v1786 = vpop.f32.mrf.mxu0
      %v1787 = vadd.f32 0.0, %v1786
      %v1788 = vpop.f32.mrf.mxu0
      %1789 = vmatprep.mubr.f32.mxu0 0.0
      %1790 = vmatmul.mubr.f32.gmra.mxu0 %v1561
      %v1791 = vpop.f32.mrf.mxu0
      %v1792 = vadd.f32 0.0, %v1791
      %v1793 = vpop.f32.mrf.mxu0
      %1794 = vmatprep.mubr.f32.mxu0 0.0
      %1795 = vmatmul.mubr.f32.gmra.mxu0 %v1564
      %v1796 = vpop.f32.mrf.mxu0
      %v1797 = vadd.f32 0.0, %v1796
      %v1798 = vpop.f32.mrf.mxu0
      %1799 = vmatprep.mubr.f32.mxu0 0.0
      %1800 = vmatmul.mubr.f32.gmra.mxu0 %v1567
      %v1801 = vpop.f32.mrf.mxu0
      %v1802 = vadd.f32 0.0, %v1801
      %v1803 = vpop.f32.mrf.mxu0
      %1804 = vmatprep.mubr.f32.mxu0 0.0
      %1805 = vmatmul.mubr.f32.gmra.mxu0 %v1570
      %v1806 = vpop.f32.mrf.mxu0
      %v1807 = vadd.f32 0.0, %v1806
      %v1808 = vpop.f32.mrf.mxu0
      %1809 = vmatprep.mubr.f32.mxu0 0.0
      %1810 = vmatmul.mubr.f32.gmra.mxu0 %v1573
      %v1811 = vpop.f32.mrf.mxu0
      %v1812 = vadd.f32 0.0, %v1811
      %v1813 = vpop.f32.mrf.mxu0
      %1814 = vmatprep.mubr.f32.mxu0 0.0
      %1815 = vmatmul.mubr.f32.gmra.mxu0 %v1576
      %v1816 = vpop.f32.mrf.mxu0
      %v1817 = vadd.f32 0.0, %v1816
      %v1818 = vpop.f32.mrf.mxu0
      %1819 = vmatprep.mubr.f32.mxu0 0.0
      %1820 = vmatmul.mubr.f32.gmra.mxu0 %v1579
      %v1821 = vpop.f32.mrf.mxu0
      %v1822 = vadd.f32 0.0, %v1821
      %v1823 = vpop.f32.mrf.mxu0
      %1824 = vmatprep.mubr.f32.mxu0 0.0
      %1825 = vmatmul.mubr.f32.gmra.mxu0 %v1582
      %v1826 = vpop.f32.mrf.mxu0
      %v1827 = vadd.f32 0.0, %v1826
      %v1828 = vpop.f32.mrf.mxu0
      %1829 = vmatprep.mubr.f32.mxu0 0.0
      %1830 = vmatmul.mubr.f32.gmra.mxu0 %v1585
      %v1831 = vpop.f32.mrf.mxu0
      %v1832 = vadd.f32 0.0, %v1831
      %v1833 = vpop.f32.mrf.mxu0
      %1834 = vdwg.mxu0
      %v1835 = vadd.f32 %v1405, %v1657
      %v1836 = vadd.f32 %v1406, %v1662
      %v1837 = vadd.f32 %v1407, %v1667
      %v1838 = vadd.f32 %v1408, %v1672
      %v1839 = vadd.f32 %v1409, %v1677
      %v1840 = vadd.f32 %v1410, %v1682
      %v1841 = vadd.f32 %v1411, %v1687
      %v1842 = vadd.f32 %v1412, %v1692
      %v1843 = vadd.f32 %v1413, %v1697
      %v1844 = vadd.f32 %v1414, %v1702
      %v1845 = vadd.f32 %v1415, %v1707
      %v1846 = vadd.f32 %v1416, %v1712
      %v1847 = vadd.f32 %v1417, %v1717
      %v1848 = vadd.f32 %v1418, %v1722
      %v1849 = vadd.f32 %v1419, %v1727
      %v1850 = vadd.f32 %v1420, %v1732
      %v1851 = vadd.f32 %v1421, %v1737
      %v1852 = vadd.f32 %v1422, %v1742
      %v1853 = vadd.f32 %v1423, %v1747
      %v1854 = vadd.f32 %v1424, %v1752
      %v1855 = vadd.f32 %v1425, %v1757
      %v1856 = vadd.f32 %v1426, %v1762
      %v1857 = vadd.f32 %v1427, %v1767
      %v1858 = vadd.f32 %v1428, %v1772
      %v1859 = vadd.f32 %v1429, %v1777
      %v1860 = vadd.f32 %v1430, %v1782
      %v1861 = vadd.f32 %v1431, %v1787
      %v1862 = vadd.f32 %v1432, %v1792
      %v1863 = vadd.f32 %v1433, %v1797
      %v1864 = vadd.f32 %v1434, %v1802
      %v1865 = vadd.f32 %v1435, %v1807
      %v1866 = vadd.f32 %v1436, %v1812
      %v1867 = vadd.f32 %v1437, %v1817
      %v1868 = vadd.f32 %v1438, %v1822
      %v1869 = vadd.f32 %v1439, %v1827
      %v1870 = vadd.f32 %v1440, %v1832
      %v1871 = vld [vmem:[%s206 + $0x13] sm:$0xff]
      %v1872 = vld [vmem:[%s206 + $0x1b] sm:$0xff]
      %v1873 = vld [vmem:[%s206 + $0x23] sm:$0xff]
      %v1874 = vld [vmem:[%s206 + $0x2b] sm:$0xff]
      %v1875 = vld [vmem:[%s206 + $0x33] sm:$0xff]
      %v1876 = vld [vmem:[%s206 + $0x3b] sm:$0xff]
      %v1877 = vld [vmem:[%s206 + $0x43] sm:$0xff]
      %v1878 = vld [vmem:[%s206 + $0x4b] sm:$0xff]
      %v1879 = vld [vmem:[%s206 + $0x53] sm:$0xff]
      %v1880 = vld [vmem:[%s206 + $0x5b] sm:$0xff]
      %v1881 = vld [vmem:[%s206 + $0x63] sm:$0xff]
      %v1882 = vld [vmem:[%s206 + $0x6b] sm:$0xff]
      %v1883 = vld [vmem:[%s206 + $0x73] sm:$0xff]
      %v1884 = vld [vmem:[%s206 + $0x7b] sm:$0xff]
      %v1885 = vld [vmem:[%s206 + $0x83] sm:$0xff]
      %v1886 = vld [vmem:[%s206 + $0x8b] sm:$0xff]
      %v1887 = vld [vmem:[%s206 + $0x93] sm:$0xff]
      %v1888 = vld [vmem:[%s206 + $0x9b] sm:$0xff]
      %v1889 = vld [vmem:[%s206 + $0xa3] sm:$0xff]
      %v1890 = vld [vmem:[%s206 + $0xab] sm:$0xff]
      %v1891 = vld [vmem:[%s206 + $0xb3] sm:$0xff]
      %v1892 = vld [vmem:[%s206 + $0xbb] sm:$0xff]
      %v1893 = vld [vmem:[%s206 + $0xc3] sm:$0xff]
      %v1894 = vld [vmem:[%s206 + $0xcb] sm:$0xff]
      %v1895 = vld [vmem:[%s206 + $0xd3] sm:$0xff]
      %v1896 = vld [vmem:[%s206 + $0xdb] sm:$0xff]
      %v1897 = vld [vmem:[%s206 + $0xe3] sm:$0xff]
      %v1898 = vld [vmem:[%s206 + $0xeb] sm:$0xff]
      %v1899 = vld [vmem:[%s206 + $0xf3] sm:$0xff]
      %v1900 = vld [vmem:[%s206 + $0xfb] sm:$0xff]
      %v1901 = vld [vmem:[%s206 + $0x103] sm:$0xff]
      %v1902 = vld [vmem:[%s206 + $0x10b] sm:$0xff]
      %v1903 = vld [vmem:[%s206 + $0x113] sm:$0xff]
      %v1904 = vld [vmem:[%s206 + $0x11b] sm:$0xff]
      %v1905 = vld [vmem:[%s206 + $0x123] sm:$0xff]
      %v1906 = vld [vmem:[%s206 + $0x12b] sm:$0xff]
      %s1907 = scalar_lea.vmem %s210, 16
      %v1908 = vld [vmem:[%s1907] sm:$0xf]
      %v1910 = vsel %vm297, %v1871, 0
      %v1913 = vsel %vm297, %v1872, 0
      %v1916 = vsel %vm297, %v1873, 0
      %v1919 = vsel %vm297, %v1874, 0
      %v1922 = vsel %vm297, %v1875, 0
      %v1925 = vsel %vm297, %v1876, 0
      %v1928 = vsel %vm297, %v1877, 0
      %v1931 = vsel %vm297, %v1878, 0
      %v1934 = vsel %vm297, %v1879, 0
      %v1937 = vsel %vm297, %v1880, 0
      %v1940 = vsel %vm297, %v1881, 0
      %v1943 = vsel %vm297, %v1882, 0
      %v1946 = vsel %vm297, %v1883, 0
      %v1949 = vsel %vm297, %v1884, 0
      %v1952 = vsel %vm297, %v1885, 0
      %v1955 = vsel %vm297, %v1886, 0
      %v1958 = vsel %vm297, %v1887, 0
      %v1961 = vsel %vm297, %v1888, 0
      %v1964 = vsel %vm297, %v1889, 0
      %v1967 = vsel %vm297, %v1890, 0
      %v1970 = vsel %vm297, %v1891, 0
      %v1973 = vsel %vm297, %v1892, 0
      %v1976 = vsel %vm297, %v1893, 0
      %v1979 = vsel %vm297, %v1894, 0
      %v1982 = vsel %vm297, %v1895, 0
      %v1985 = vsel %vm297, %v1896, 0
      %v1988 = vsel %vm297, %v1897, 0
      %v1991 = vsel %vm297, %v1898, 0
      %v1994 = vsel %vm297, %v1899, 0
      %v1997 = vsel %vm297, %v1900, 0
      %v2000 = vsel %vm297, %v1901, 0
      %v2003 = vsel %vm297, %v1902, 0
      %v2006 = vsel %vm297, %v1903, 0
      %v2009 = vsel %vm297, %v1904, 0
      %v2012 = vsel %vm297, %v1905, 0
      %v2015 = vsel %vm297, %v1906, 0
      %v2018 = vsel %vm406, %v1908, 0
      %2020 = vmatprep.subr.mxu0 0.0
      %2021 = vmatpush1.msra.mxu0 0.0
      %2022 = vmatprep.subr.mxu0 0.0
      %2023 = vmatpush1.msra.mxu0 0.0
      %2024 = vmatprep.subr.mxu0 0.0
      %2025 = vmatpush1.msra.mxu0 0.0
      %2026 = vmatprep.subr.mxu0 0.0
      %2027 = vmatpush1.msra.mxu0 0.0
      %2028 = vmatprep.subr.mxu0 0.0
      %2029 = vmatpush1.msra.mxu0 0.0
      %2030 = vmatprep.subr.mxu0 0.0
      %2031 = vmatpush1.msra.mxu0 0.0
      %2032 = vmatprep.subr.mxu0 0.0
      %2033 = vmatpush1.msra.mxu0 0.0
      %2034 = vmatprep.subr.mxu0 0.0
      %2035 = vmatpush1.msra.mxu0 0.0
      %2036 = vmatprep.subr.mxu0 0.0
      %2037 = vmatpush1.msra.mxu0 0.0
      %2038 = vmatprep.subr.mxu0 0.0
      %2039 = vmatpush1.msra.mxu0 0.0
      %2040 = vmatprep.subr.mxu0 0.0
      %2041 = vmatpush1.msra.mxu0 0.0
      %2042 = vmatprep.subr.mxu0 0.0
      %2043 = vmatpush1.msra.mxu0 0.0
      %2044 = vmatprep.subr.mxu0 0.0
      %2045 = vmatpush1.msra.mxu0 0.0
      %2046 = vmatprep.subr.mxu0 0.0
      %2047 = vmatpush1.msra.mxu0 0.0
      %2048 = vmatprep.subr.mxu0 0.0
      %2049 = vmatpush1.msra.mxu0 0.0
      %2050 = vmatprep.subr.mxu0 0.0
      %2051 = vmatpush1.msra.mxu0 %v2018
      %2052 = vmatprep.subr.mxu0 0.0
      %2053 = vmatpush2.msra.mxu0 0.0
      %2054 = vmatprep.subr.mxu0 0.0
      %2055 = vmatpush2.msra.mxu0 0.0
      %2056 = vmatprep.subr.mxu0 0.0
      %2057 = vmatpush2.msra.mxu0 0.0
      %2058 = vmatprep.subr.mxu0 0.0
      %2059 = vmatpush2.msra.mxu0 0.0
      %2060 = vmatprep.subr.mxu0 0.0
      %2061 = vmatpush2.msra.mxu0 0.0
      %2062 = vmatprep.subr.mxu0 0.0
      %2063 = vmatpush2.msra.mxu0 0.0
      %2064 = vmatprep.subr.mxu0 0.0
      %2065 = vmatpush2.msra.mxu0 0.0
      %2066 = vmatprep.subr.mxu0 0.0
      %2067 = vmatpush2.msra.mxu0 0.0
      %2068 = vmatprep.subr.mxu0 0.0
      %2069 = vmatpush2.msra.mxu0 0.0
      %2070 = vmatprep.subr.mxu0 0.0
      %2071 = vmatpush2.msra.mxu0 0.0
      %2072 = vmatprep.subr.mxu0 0.0
      %2073 = vmatpush2.msra.mxu0 0.0
      %2074 = vmatprep.subr.mxu0 0.0
      %2075 = vmatpush2.msra.mxu0 0.0
      %2076 = vmatprep.subr.mxu0 0.0
      %2077 = vmatpush2.msra.mxu0 0.0
      %2078 = vmatprep.subr.mxu0 0.0
      %2079 = vmatpush2.msra.mxu0 0.0
      %2080 = vmatprep.subr.mxu0 0.0
      %2081 = vmatpush2.msra.mxu0 0.0
      %2082 = vmatprep.subr.mxu0 0.0
      %2083 = vmatpush2.msra.mxu0 0.0
      %2084 = vmatprep.mubr.f32.mxu0 0.0
      %2085 = vmatmul.mubr.f32.gmra.mxu0 %v1910
      %v2086 = vpop.f32.mrf.mxu0
      %v2087 = vadd.f32 0.0, %v2086
      %v2088 = vpop.f32.mrf.mxu0
      %2089 = vmatprep.mubr.f32.mxu0 0.0
      %2090 = vmatmul.mubr.f32.gmra.mxu0 %v1913
      %v2091 = vpop.f32.mrf.mxu0
      %v2092 = vadd.f32 0.0, %v2091
      %v2093 = vpop.f32.mrf.mxu0
      %2094 = vmatprep.mubr.f32.mxu0 0.0
      %2095 = vmatmul.mubr.f32.gmra.mxu0 %v1916
      %v2096 = vpop.f32.mrf.mxu0
      %v2097 = vadd.f32 0.0, %v2096
      %v2098 = vpop.f32.mrf.mxu0
      %2099 = vmatprep.mubr.f32.mxu0 0.0
      %2100 = vmatmul.mubr.f32.gmra.mxu0 %v1919
      %v2101 = vpop.f32.mrf.mxu0
      %v2102 = vadd.f32 0.0, %v2101
      %v2103 = vpop.f32.mrf.mxu0
      %2104 = vmatprep.mubr.f32.mxu0 0.0
      %2105 = vmatmul.mubr.f32.gmra.mxu0 %v1922
      %v2106 = vpop.f32.mrf.mxu0
      %v2107 = vadd.f32 0.0, %v2106
      %v2108 = vpop.f32.mrf.mxu0
      %2109 = vmatprep.mubr.f32.mxu0 0.0
      %2110 = vmatmul.mubr.f32.gmra.mxu0 %v1925
      %v2111 = vpop.f32.mrf.mxu0
      %v2112 = vadd.f32 0.0, %v2111
      %v2113 = vpop.f32.mrf.mxu0
      %2114 = vmatprep.mubr.f32.mxu0 0.0
      %2115 = vmatmul.mubr.f32.gmra.mxu0 %v1928
      %v2116 = vpop.f32.mrf.mxu0
      %v2117 = vadd.f32 0.0, %v2116
      %v2118 = vpop.f32.mrf.mxu0
      %2119 = vmatprep.mubr.f32.mxu0 0.0
      %2120 = vmatmul.mubr.f32.gmra.mxu0 %v1931
      %v2121 = vpop.f32.mrf.mxu0
      %v2122 = vadd.f32 0.0, %v2121
      %v2123 = vpop.f32.mrf.mxu0
      %2124 = vmatprep.mubr.f32.mxu0 0.0
      %2125 = vmatmul.mubr.f32.gmra.mxu0 %v1934
      %v2126 = vpop.f32.mrf.mxu0
      %v2127 = vadd.f32 0.0, %v2126
      %v2128 = vpop.f32.mrf.mxu0
      %2129 = vmatprep.mubr.f32.mxu0 0.0
      %2130 = vmatmul.mubr.f32.gmra.mxu0 %v1937
      %v2131 = vpop.f32.mrf.mxu0
      %v2132 = vadd.f32 0.0, %v2131
      %v2133 = vpop.f32.mrf.mxu0
      %2134 = vmatprep.mubr.f32.mxu0 0.0
      %2135 = vmatmul.mubr.f32.gmra.mxu0 %v1940
      %v2136 = vpop.f32.mrf.mxu0
      %v2137 = vadd.f32 0.0, %v2136
      %v2138 = vpop.f32.mrf.mxu0
      %2139 = vmatprep.mubr.f32.mxu0 0.0
      %2140 = vmatmul.mubr.f32.gmra.mxu0 %v1943
      %v2141 = vpop.f32.mrf.mxu0
      %v2142 = vadd.f32 0.0, %v2141
      %v2143 = vpop.f32.mrf.mxu0
      %2144 = vmatprep.mubr.f32.mxu0 0.0
      %2145 = vmatmul.mubr.f32.gmra.mxu0 %v1946
      %v2146 = vpop.f32.mrf.mxu0
      %v2147 = vadd.f32 0.0, %v2146
      %v2148 = vpop.f32.mrf.mxu0
      %2149 = vmatprep.mubr.f32.mxu0 0.0
      %2150 = vmatmul.mubr.f32.gmra.mxu0 %v1949
      %v2151 = vpop.f32.mrf.mxu0
      %v2152 = vadd.f32 0.0, %v2151
      %v2153 = vpop.f32.mrf.mxu0
      %2154 = vmatprep.mubr.f32.mxu0 0.0
      %2155 = vmatmul.mubr.f32.gmra.mxu0 %v1952
      %v2156 = vpop.f32.mrf.mxu0
      %v2157 = vadd.f32 0.0, %v2156
      %v2158 = vpop.f32.mrf.mxu0
      %2159 = vmatprep.mubr.f32.mxu0 0.0
      %2160 = vmatmul.mubr.f32.gmra.mxu0 %v1955
      %v2161 = vpop.f32.mrf.mxu0
      %v2162 = vadd.f32 0.0, %v2161
      %v2163 = vpop.f32.mrf.mxu0
      %2164 = vmatprep.mubr.f32.mxu0 0.0
      %2165 = vmatmul.mubr.f32.gmra.mxu0 %v1958
      %v2166 = vpop.f32.mrf.mxu0
      %v2167 = vadd.f32 0.0, %v2166
      %v2168 = vpop.f32.mrf.mxu0
      %2169 = vmatprep.mubr.f32.mxu0 0.0
      %2170 = vmatmul.mubr.f32.gmra.mxu0 %v1961
      %v2171 = vpop.f32.mrf.mxu0
      %v2172 = vadd.f32 0.0, %v2171
      %v2173 = vpop.f32.mrf.mxu0
      %2174 = vmatprep.mubr.f32.mxu0 0.0
      %2175 = vmatmul.mubr.f32.gmra.mxu0 %v1964
      %v2176 = vpop.f32.mrf.mxu0
      %v2177 = vadd.f32 0.0, %v2176
      %v2178 = vpop.f32.mrf.mxu0
      %2179 = vmatprep.mubr.f32.mxu0 0.0
      %2180 = vmatmul.mubr.f32.gmra.mxu0 %v1967
      %v2181 = vpop.f32.mrf.mxu0
      %v2182 = vadd.f32 0.0, %v2181
      %v2183 = vpop.f32.mrf.mxu0
      %2184 = vmatprep.mubr.f32.mxu0 0.0
      %2185 = vmatmul.mubr.f32.gmra.mxu0 %v1970
      %v2186 = vpop.f32.mrf.mxu0
      %v2187 = vadd.f32 0.0, %v2186
      %v2188 = vpop.f32.mrf.mxu0
      %2189 = vmatprep.mubr.f32.mxu0 0.0
      %2190 = vmatmul.mubr.f32.gmra.mxu0 %v1973
      %v2191 = vpop.f32.mrf.mxu0
      %v2192 = vadd.f32 0.0, %v2191
      %v2193 = vpop.f32.mrf.mxu0
      %2194 = vmatprep.mubr.f32.mxu0 0.0
      %2195 = vmatmul.mubr.f32.gmra.mxu0 %v1976
      %v2196 = vpop.f32.mrf.mxu0
      %v2197 = vadd.f32 0.0, %v2196
      %v2198 = vpop.f32.mrf.mxu0
      %2199 = vmatprep.mubr.f32.mxu0 0.0
      %2200 = vmatmul.mubr.f32.gmra.mxu0 %v1979
      %v2201 = vpop.f32.mrf.mxu0
      %v2202 = vadd.f32 0.0, %v2201
      %v2203 = vpop.f32.mrf.mxu0
      %2204 = vmatprep.mubr.f32.mxu0 0.0
      %2205 = vmatmul.mubr.f32.gmra.mxu0 %v1982
      %v2206 = vpop.f32.mrf.mxu0
      %v2207 = vadd.f32 0.0, %v2206
      %v2208 = vpop.f32.mrf.mxu0
      %2209 = vmatprep.mubr.f32.mxu0 0.0
      %2210 = vmatmul.mubr.f32.gmra.mxu0 %v1985
      %v2211 = vpop.f32.mrf.mxu0
      %v2212 = vadd.f32 0.0, %v2211
      %v2213 = vpop.f32.mrf.mxu0
      %2214 = vmatprep.mubr.f32.mxu0 0.0
      %2215 = vmatmul.mubr.f32.gmra.mxu0 %v1988
      %v2216 = vpop.f32.mrf.mxu0
      %v2217 = vadd.f32 0.0, %v2216
      %v2218 = vpop.f32.mrf.mxu0
      %2219 = vmatprep.mubr.f32.mxu0 0.0
      %2220 = vmatmul.mubr.f32.gmra.mxu0 %v1991
      %v2221 = vpop.f32.mrf.mxu0
      %v2222 = vadd.f32 0.0, %v2221
      %v2223 = vpop.f32.mrf.mxu0
      %2224 = vmatprep.mubr.f32.mxu0 0.0
      %2225 = vmatmul.mubr.f32.gmra.mxu0 %v1994
      %v2226 = vpop.f32.mrf.mxu0
      %v2227 = vadd.f32 0.0, %v2226
      %v2228 = vpop.f32.mrf.mxu0
      %2229 = vmatprep.mubr.f32.mxu0 0.0
      %2230 = vmatmul.mubr.f32.gmra.mxu0 %v1997
      %v2231 = vpop.f32.mrf.mxu0
      %v2232 = vadd.f32 0.0, %v2231
      %v2233 = vpop.f32.mrf.mxu0
      %2234 = vmatprep.mubr.f32.mxu0 0.0
      %2235 = vmatmul.mubr.f32.gmra.mxu0 %v2000
      %v2236 = vpop.f32.mrf.mxu0
      %v2237 = vadd.f32 0.0, %v2236
      %v2238 = vpop.f32.mrf.mxu0
      %2239 = vmatprep.mubr.f32.mxu0 0.0
      %2240 = vmatmul.mubr.f32.gmra.mxu0 %v2003
      %v2241 = vpop.f32.mrf.mxu0
      %v2242 = vadd.f32 0.0, %v2241
      %v2243 = vpop.f32.mrf.mxu0
      %2244 = vmatprep.mubr.f32.mxu0 0.0
      %2245 = vmatmul.mubr.f32.gmra.mxu0 %v2006
      %v2246 = vpop.f32.mrf.mxu0
      %v2247 = vadd.f32 0.0, %v2246
      %v2248 = vpop.f32.mrf.mxu0
      %2249 = vmatprep.mubr.f32.mxu0 0.0
      %2250 = vmatmul.mubr.f32.gmra.mxu0 %v2009
      %v2251 = vpop.f32.mrf.mxu0
      %v2252 = vadd.f32 0.0, %v2251
      %v2253 = vpop.f32.mrf.mxu0
      %2254 = vmatprep.mubr.f32.mxu0 0.0
      %2255 = vmatmul.mubr.f32.gmra.mxu0 %v2012
      %v2256 = vpop.f32.mrf.mxu0
      %v2257 = vadd.f32 0.0, %v2256
      %v2258 = vpop.f32.mrf.mxu0
      %2259 = vmatprep.mubr.f32.mxu0 0.0
      %2260 = vmatmul.mubr.f32.gmra.mxu0 %v2015
      %v2261 = vpop.f32.mrf.mxu0
      %v2262 = vadd.f32 0.0, %v2261
      %v2263 = vpop.f32.mrf.mxu0
      %2264 = vdwg.mxu0
      %v2265 = vadd.f32 %v1835, %v2087
      %v2266 = vadd.f32 %v1836, %v2092
      %v2267 = vadd.f32 %v1837, %v2097
      %v2268 = vadd.f32 %v1838, %v2102
      %v2269 = vadd.f32 %v1839, %v2107
      %v2270 = vadd.f32 %v1840, %v2112
      %v2271 = vadd.f32 %v1841, %v2117
      %v2272 = vadd.f32 %v1842, %v2122
      %v2273 = vadd.f32 %v1843, %v2127
      %v2274 = vadd.f32 %v1844, %v2132
      %v2275 = vadd.f32 %v1845, %v2137
      %v2276 = vadd.f32 %v1846, %v2142
      %v2277 = vadd.f32 %v1847, %v2147
      %v2278 = vadd.f32 %v1848, %v2152
      %v2279 = vadd.f32 %v1849, %v2157
      %v2280 = vadd.f32 %v1850, %v2162
      %v2281 = vadd.f32 %v1851, %v2167
      %v2282 = vadd.f32 %v1852, %v2172
      %v2283 = vadd.f32 %v1853, %v2177
      %v2284 = vadd.f32 %v1854, %v2182
      %v2285 = vadd.f32 %v1855, %v2187
      %v2286 = vadd.f32 %v1856, %v2192
      %v2287 = vadd.f32 %v1857, %v2197
      %v2288 = vadd.f32 %v1858, %v2202
      %v2289 = vadd.f32 %v1859, %v2207
      %v2290 = vadd.f32 %v1860, %v2212
      %v2291 = vadd.f32 %v1861, %v2217
      %v2292 = vadd.f32 %v1862, %v2222
      %v2293 = vadd.f32 %v1863, %v2227
      %v2294 = vadd.f32 %v1864, %v2232
      %v2295 = vadd.f32 %v1865, %v2237
      %v2296 = vadd.f32 %v1866, %v2242
      %v2297 = vadd.f32 %v1867, %v2247
      %v2298 = vadd.f32 %v1868, %v2252
      %v2299 = vadd.f32 %v1869, %v2257
      %v2300 = vadd.f32 %v1870, %v2262
      %v2301 = vld [vmem:[%s206 + $0x14] sm:$0xff]
      %v2302 = vld [vmem:[%s206 + $0x1c] sm:$0xff]
      %v2303 = vld [vmem:[%s206 + $0x24] sm:$0xff]
      %v2304 = vld [vmem:[%s206 + $0x2c] sm:$0xff]
      %v2305 = vld [vmem:[%s206 + $0x34] sm:$0xff]
      %v2306 = vld [vmem:[%s206 + $0x3c] sm:$0xff]
      %v2307 = vld [vmem:[%s206 + $0x44] sm:$0xff]
      %v2308 = vld [vmem:[%s206 + $0x4c] sm:$0xff]
      %v2309 = vld [vmem:[%s206 + $0x54] sm:$0xff]
      %v2310 = vld [vmem:[%s206 + $0x5c] sm:$0xff]
      %v2311 = vld [vmem:[%s206 + $0x64] sm:$0xff]
      %v2312 = vld [vmem:[%s206 + $0x6c] sm:$0xff]
      %v2313 = vld [vmem:[%s206 + $0x74] sm:$0xff]
      %v2314 = vld [vmem:[%s206 + $0x7c] sm:$0xff]
      %v2315 = vld [vmem:[%s206 + $0x84] sm:$0xff]
      %v2316 = vld [vmem:[%s206 + $0x8c] sm:$0xff]
      %v2317 = vld [vmem:[%s206 + $0x94] sm:$0xff]
      %v2318 = vld [vmem:[%s206 + $0x9c] sm:$0xff]
      %v2319 = vld [vmem:[%s206 + $0xa4] sm:$0xff]
      %v2320 = vld [vmem:[%s206 + $0xac] sm:$0xff]
      %v2321 = vld [vmem:[%s206 + $0xb4] sm:$0xff]
      %v2322 = vld [vmem:[%s206 + $0xbc] sm:$0xff]
      %v2323 = vld [vmem:[%s206 + $0xc4] sm:$0xff]
      %v2324 = vld [vmem:[%s206 + $0xcc] sm:$0xff]
      %v2325 = vld [vmem:[%s206 + $0xd4] sm:$0xff]
      %v2326 = vld [vmem:[%s206 + $0xdc] sm:$0xff]
      %v2327 = vld [vmem:[%s206 + $0xe4] sm:$0xff]
      %v2328 = vld [vmem:[%s206 + $0xec] sm:$0xff]
      %v2329 = vld [vmem:[%s206 + $0xf4] sm:$0xff]
      %v2330 = vld [vmem:[%s206 + $0xfc] sm:$0xff]
      %v2331 = vld [vmem:[%s206 + $0x104] sm:$0xff]
      %v2332 = vld [vmem:[%s206 + $0x10c] sm:$0xff]
      %v2333 = vld [vmem:[%s206 + $0x114] sm:$0xff]
      %v2334 = vld [vmem:[%s206 + $0x11c] sm:$0xff]
      %v2335 = vld [vmem:[%s206 + $0x124] sm:$0xff]
      %v2336 = vld [vmem:[%s206 + $0x12c] sm:$0xff]
      %s2337 = scalar_lea.vmem %s210, 20
      %v2338 = vld [vmem:[%s2337] sm:$0xf]
      %v2340 = vsel %vm297, %v2301, 0
      %v2343 = vsel %vm297, %v2302, 0
      %v2346 = vsel %vm297, %v2303, 0
      %v2349 = vsel %vm297, %v2304, 0
      %v2352 = vsel %vm297, %v2305, 0
      %v2355 = vsel %vm297, %v2306, 0
      %v2358 = vsel %vm297, %v2307, 0
      %v2361 = vsel %vm297, %v2308, 0
      %v2364 = vsel %vm297, %v2309, 0
      %v2367 = vsel %vm297, %v2310, 0
      %v2370 = vsel %vm297, %v2311, 0
      %v2373 = vsel %vm297, %v2312, 0
      %v2376 = vsel %vm297, %v2313, 0
      %v2379 = vsel %vm297, %v2314, 0
      %v2382 = vsel %vm297, %v2315, 0
      %v2385 = vsel %vm297, %v2316, 0
      %v2388 = vsel %vm297, %v2317, 0
      %v2391 = vsel %vm297, %v2318, 0
      %v2394 = vsel %vm297, %v2319, 0
      %v2397 = vsel %vm297, %v2320, 0
      %v2400 = vsel %vm297, %v2321, 0
      %v2403 = vsel %vm297, %v2322, 0
      %v2406 = vsel %vm297, %v2323, 0
      %v2409 = vsel %vm297, %v2324, 0
      %v2412 = vsel %vm297, %v2325, 0
      %v2415 = vsel %vm297, %v2326, 0
      %v2418 = vsel %vm297, %v2327, 0
      %v2421 = vsel %vm297, %v2328, 0
      %v2424 = vsel %vm297, %v2329, 0
      %v2427 = vsel %vm297, %v2330, 0
      %v2430 = vsel %vm297, %v2331, 0
      %v2433 = vsel %vm297, %v2332, 0
      %v2436 = vsel %vm297, %v2333, 0
      %v2439 = vsel %vm297, %v2334, 0
      %v2442 = vsel %vm297, %v2335, 0
      %v2445 = vsel %vm297, %v2336, 0
      %v2448 = vsel %vm406, %v2338, 0
      %2450 = vmatprep.subr.mxu0 0.0
      %2451 = vmatpush1.msra.mxu0 0.0
      %2452 = vmatprep.subr.mxu0 0.0
      %2453 = vmatpush1.msra.mxu0 0.0
      %2454 = vmatprep.subr.mxu0 0.0
      %2455 = vmatpush1.msra.mxu0 0.0
      %2456 = vmatprep.subr.mxu0 0.0
      %2457 = vmatpush1.msra.mxu0 0.0
      %2458 = vmatprep.subr.mxu0 0.0
      %2459 = vmatpush1.msra.mxu0 0.0
      %2460 = vmatprep.subr.mxu0 0.0
      %2461 = vmatpush1.msra.mxu0 0.0
      %2462 = vmatprep.subr.mxu0 0.0
      %2463 = vmatpush1.msra.mxu0 0.0
      %2464 = vmatprep.subr.mxu0 0.0
      %2465 = vmatpush1.msra.mxu0 0.0
      %2466 = vmatprep.subr.mxu0 0.0
      %2467 = vmatpush1.msra.mxu0 0.0
      %2468 = vmatprep.subr.mxu0 0.0
      %2469 = vmatpush1.msra.mxu0 0.0
      %2470 = vmatprep.subr.mxu0 0.0
      %2471 = vmatpush1.msra.mxu0 0.0
      %2472 = vmatprep.subr.mxu0 0.0
      %2473 = vmatpush1.msra.mxu0 0.0
      %2474 = vmatprep.subr.mxu0 0.0
      %2475 = vmatpush1.msra.mxu0 0.0
      %2476 = vmatprep.subr.mxu0 0.0
      %2477 = vmatpush1.msra.mxu0 0.0
      %2478 = vmatprep.subr.mxu0 0.0
      %2479 = vmatpush1.msra.mxu0 0.0
      %2480 = vmatprep.subr.mxu0 0.0
      %2481 = vmatpush1.msra.mxu0 %v2448
      %2482 = vmatprep.subr.mxu0 0.0
      %2483 = vmatpush2.msra.mxu0 0.0
      %2484 = vmatprep.subr.mxu0 0.0
      %2485 = vmatpush2.msra.mxu0 0.0
      %2486 = vmatprep.subr.mxu0 0.0
      %2487 = vmatpush2.msra.mxu0 0.0
      %2488 = vmatprep.subr.mxu0 0.0
      %2489 = vmatpush2.msra.mxu0 0.0
      %2490 = vmatprep.subr.mxu0 0.0
      %2491 = vmatpush2.msra.mxu0 0.0
      %2492 = vmatprep.subr.mxu0 0.0
      %2493 = vmatpush2.msra.mxu0 0.0
      %2494 = vmatprep.subr.mxu0 0.0
      %2495 = vmatpush2.msra.mxu0 0.0
      %2496 = vmatprep.subr.mxu0 0.0
      %2497 = vmatpush2.msra.mxu0 0.0
      %2498 = vmatprep.subr.mxu0 0.0
      %2499 = vmatpush2.msra.mxu0 0.0
      %2500 = vmatprep.subr.mxu0 0.0
      %2501 = vmatpush2.msra.mxu0 0.0
      %2502 = vmatprep.subr.mxu0 0.0
      %2503 = vmatpush2.msra.mxu0 0.0
      %2504 = vmatprep.subr.mxu0 0.0
      %2505 = vmatpush2.msra.mxu0 0.0
      %2506 = vmatprep.subr.mxu0 0.0
      %2507 = vmatpush2.msra.mxu0 0.0
      %2508 = vmatprep.subr.mxu0 0.0
      %2509 = vmatpush2.msra.mxu0 0.0
      %2510 = vmatprep.subr.mxu0 0.0
      %2511 = vmatpush2.msra.mxu0 0.0
      %2512 = vmatprep.subr.mxu0 0.0
      %2513 = vmatpush2.msra.mxu0 0.0
      %2514 = vmatprep.mubr.f32.mxu0 0.0
      %2515 = vmatmul.mubr.f32.gmra.mxu0 %v2340
      %v2516 = vpop.f32.mrf.mxu0
      %v2517 = vadd.f32 0.0, %v2516
      %v2518 = vpop.f32.mrf.mxu0
      %2519 = vmatprep.mubr.f32.mxu0 0.0
      %2520 = vmatmul.mubr.f32.gmra.mxu0 %v2343
      %v2521 = vpop.f32.mrf.mxu0
      %v2522 = vadd.f32 0.0, %v2521
      %v2523 = vpop.f32.mrf.mxu0
      %2524 = vmatprep.mubr.f32.mxu0 0.0
      %2525 = vmatmul.mubr.f32.gmra.mxu0 %v2346
      %v2526 = vpop.f32.mrf.mxu0
      %v2527 = vadd.f32 0.0, %v2526
      %v2528 = vpop.f32.mrf.mxu0
      %2529 = vmatprep.mubr.f32.mxu0 0.0
      %2530 = vmatmul.mubr.f32.gmra.mxu0 %v2349
      %v2531 = vpop.f32.mrf.mxu0
      %v2532 = vadd.f32 0.0, %v2531
      %v2533 = vpop.f32.mrf.mxu0
      %2534 = vmatprep.mubr.f32.mxu0 0.0
      %2535 = vmatmul.mubr.f32.gmra.mxu0 %v2352
      %v2536 = vpop.f32.mrf.mxu0
      %v2537 = vadd.f32 0.0, %v2536
      %v2538 = vpop.f32.mrf.mxu0
      %2539 = vmatprep.mubr.f32.mxu0 0.0
      %2540 = vmatmul.mubr.f32.gmra.mxu0 %v2355
      %v2541 = vpop.f32.mrf.mxu0
      %v2542 = vadd.f32 0.0, %v2541
      %v2543 = vpop.f32.mrf.mxu0
      %2544 = vmatprep.mubr.f32.mxu0 0.0
      %2545 = vmatmul.mubr.f32.gmra.mxu0 %v2358
      %v2546 = vpop.f32.mrf.mxu0
      %v2547 = vadd.f32 0.0, %v2546
      %v2548 = vpop.f32.mrf.mxu0
      %2549 = vmatprep.mubr.f32.mxu0 0.0
      %2550 = vmatmul.mubr.f32.gmra.mxu0 %v2361
      %v2551 = vpop.f32.mrf.mxu0
      %v2552 = vadd.f32 0.0, %v2551
      %v2553 = vpop.f32.mrf.mxu0
      %2554 = vmatprep.mubr.f32.mxu0 0.0
      %2555 = vmatmul.mubr.f32.gmra.mxu0 %v2364
      %v2556 = vpop.f32.mrf.mxu0
      %v2557 = vadd.f32 0.0, %v2556
      %v2558 = vpop.f32.mrf.mxu0
      %2559 = vmatprep.mubr.f32.mxu0 0.0
      %2560 = vmatmul.mubr.f32.gmra.mxu0 %v2367
      %v2561 = vpop.f32.mrf.mxu0
      %v2562 = vadd.f32 0.0, %v2561
      %v2563 = vpop.f32.mrf.mxu0
      %2564 = vmatprep.mubr.f32.mxu0 0.0
      %2565 = vmatmul.mubr.f32.gmra.mxu0 %v2370
      %v2566 = vpop.f32.mrf.mxu0
      %v2567 = vadd.f32 0.0, %v2566
      %v2568 = vpop.f32.mrf.mxu0
      %2569 = vmatprep.mubr.f32.mxu0 0.0
      %2570 = vmatmul.mubr.f32.gmra.mxu0 %v2373
      %v2571 = vpop.f32.mrf.mxu0
      %v2572 = vadd.f32 0.0, %v2571
      %v2573 = vpop.f32.mrf.mxu0
      %2574 = vmatprep.mubr.f32.mxu0 0.0
      %2575 = vmatmul.mubr.f32.gmra.mxu0 %v2376
      %v2576 = vpop.f32.mrf.mxu0
      %v2577 = vadd.f32 0.0, %v2576
      %v2578 = vpop.f32.mrf.mxu0
      %2579 = vmatprep.mubr.f32.mxu0 0.0
      %2580 = vmatmul.mubr.f32.gmra.mxu0 %v2379
      %v2581 = vpop.f32.mrf.mxu0
      %v2582 = vadd.f32 0.0, %v2581
      %v2583 = vpop.f32.mrf.mxu0
      %2584 = vmatprep.mubr.f32.mxu0 0.0
      %2585 = vmatmul.mubr.f32.gmra.mxu0 %v2382
      %v2586 = vpop.f32.mrf.mxu0
      %v2587 = vadd.f32 0.0, %v2586
      %v2588 = vpop.f32.mrf.mxu0
      %2589 = vmatprep.mubr.f32.mxu0 0.0
      %2590 = vmatmul.mubr.f32.gmra.mxu0 %v2385
      %v2591 = vpop.f32.mrf.mxu0
      %v2592 = vadd.f32 0.0, %v2591
      %v2593 = vpop.f32.mrf.mxu0
      %2594 = vmatprep.mubr.f32.mxu0 0.0
      %2595 = vmatmul.mubr.f32.gmra.mxu0 %v2388
      %v2596 = vpop.f32.mrf.mxu0
      %v2597 = vadd.f32 0.0, %v2596
      %v2598 = vpop.f32.mrf.mxu0
      %2599 = vmatprep.mubr.f32.mxu0 0.0
      %2600 = vmatmul.mubr.f32.gmra.mxu0 %v2391
      %v2601 = vpop.f32.mrf.mxu0
      %v2602 = vadd.f32 0.0, %v2601
      %v2603 = vpop.f32.mrf.mxu0
      %2604 = vmatprep.mubr.f32.mxu0 0.0
      %2605 = vmatmul.mubr.f32.gmra.mxu0 %v2394
      %v2606 = vpop.f32.mrf.mxu0
      %v2607 = vadd.f32 0.0, %v2606
      %v2608 = vpop.f32.mrf.mxu0
      %2609 = vmatprep.mubr.f32.mxu0 0.0
      %2610 = vmatmul.mubr.f32.gmra.mxu0 %v2397
      %v2611 = vpop.f32.mrf.mxu0
      %v2612 = vadd.f32 0.0, %v2611
      %v2613 = vpop.f32.mrf.mxu0
      %2614 = vmatprep.mubr.f32.mxu0 0.0
      %2615 = vmatmul.mubr.f32.gmra.mxu0 %v2400
      %v2616 = vpop.f32.mrf.mxu0
      %v2617 = vadd.f32 0.0, %v2616
      %v2618 = vpop.f32.mrf.mxu0
      %2619 = vmatprep.mubr.f32.mxu0 0.0
      %2620 = vmatmul.mubr.f32.gmra.mxu0 %v2403
      %v2621 = vpop.f32.mrf.mxu0
      %v2622 = vadd.f32 0.0, %v2621
      %v2623 = vpop.f32.mrf.mxu0
      %2624 = vmatprep.mubr.f32.mxu0 0.0
      %2625 = vmatmul.mubr.f32.gmra.mxu0 %v2406
      %v2626 = vpop.f32.mrf.mxu0
      %v2627 = vadd.f32 0.0, %v2626
      %v2628 = vpop.f32.mrf.mxu0
      %2629 = vmatprep.mubr.f32.mxu0 0.0
      %2630 = vmatmul.mubr.f32.gmra.mxu0 %v2409
      %v2631 = vpop.f32.mrf.mxu0
      %v2632 = vadd.f32 0.0, %v2631
      %v2633 = vpop.f32.mrf.mxu0
      %2634 = vmatprep.mubr.f32.mxu0 0.0
      %2635 = vmatmul.mubr.f32.gmra.mxu0 %v2412
      %v2636 = vpop.f32.mrf.mxu0
      %v2637 = vadd.f32 0.0, %v2636
      %v2638 = vpop.f32.mrf.mxu0
      %2639 = vmatprep.mubr.f32.mxu0 0.0
      %2640 = vmatmul.mubr.f32.gmra.mxu0 %v2415
      %v2641 = vpop.f32.mrf.mxu0
      %v2642 = vadd.f32 0.0, %v2641
      %v2643 = vpop.f32.mrf.mxu0
      %2644 = vmatprep.mubr.f32.mxu0 0.0
      %2645 = vmatmul.mubr.f32.gmra.mxu0 %v2418
      %v2646 = vpop.f32.mrf.mxu0
      %v2647 = vadd.f32 0.0, %v2646
      %v2648 = vpop.f32.mrf.mxu0
      %2649 = vmatprep.mubr.f32.mxu0 0.0
      %2650 = vmatmul.mubr.f32.gmra.mxu0 %v2421
      %v2651 = vpop.f32.mrf.mxu0
      %v2652 = vadd.f32 0.0, %v2651
      %v2653 = vpop.f32.mrf.mxu0
      %2654 = vmatprep.mubr.f32.mxu0 0.0
      %2655 = vmatmul.mubr.f32.gmra.mxu0 %v2424
      %v2656 = vpop.f32.mrf.mxu0
      %v2657 = vadd.f32 0.0, %v2656
      %v2658 = vpop.f32.mrf.mxu0
      %2659 = vmatprep.mubr.f32.mxu0 0.0
      %2660 = vmatmul.mubr.f32.gmra.mxu0 %v2427
      %v2661 = vpop.f32.mrf.mxu0
      %v2662 = vadd.f32 0.0, %v2661
      %v2663 = vpop.f32.mrf.mxu0
      %2664 = vmatprep.mubr.f32.mxu0 0.0
      %2665 = vmatmul.mubr.f32.gmra.mxu0 %v2430
      %v2666 = vpop.f32.mrf.mxu0
      %v2667 = vadd.f32 0.0, %v2666
      %v2668 = vpop.f32.mrf.mxu0
      %2669 = vmatprep.mubr.f32.mxu0 0.0
      %2670 = vmatmul.mubr.f32.gmra.mxu0 %v2433
      %v2671 = vpop.f32.mrf.mxu0
      %v2672 = vadd.f32 0.0, %v2671
      %v2673 = vpop.f32.mrf.mxu0
      %2674 = vmatprep.mubr.f32.mxu0 0.0
      %2675 = vmatmul.mubr.f32.gmra.mxu0 %v2436
      %v2676 = vpop.f32.mrf.mxu0
      %v2677 = vadd.f32 0.0, %v2676
      %v2678 = vpop.f32.mrf.mxu0
      %2679 = vmatprep.mubr.f32.mxu0 0.0
      %2680 = vmatmul.mubr.f32.gmra.mxu0 %v2439
      %v2681 = vpop.f32.mrf.mxu0
      %v2682 = vadd.f32 0.0, %v2681
      %v2683 = vpop.f32.mrf.mxu0
      %2684 = vmatprep.mubr.f32.mxu0 0.0
      %2685 = vmatmul.mubr.f32.gmra.mxu0 %v2442
      %v2686 = vpop.f32.mrf.mxu0
      %v2687 = vadd.f32 0.0, %v2686
      %v2688 = vpop.f32.mrf.mxu0
      %2689 = vmatprep.mubr.f32.mxu0 0.0
      %2690 = vmatmul.mubr.f32.gmra.mxu0 %v2445
      %v2691 = vpop.f32.mrf.mxu0
      %v2692 = vadd.f32 0.0, %v2691
      %v2693 = vpop.f32.mrf.mxu0
      %2694 = vdwg.mxu0
      %v2695 = vadd.f32 %v2265, %v2517
      %v2696 = vadd.f32 %v2266, %v2522
      %v2697 = vadd.f32 %v2267, %v2527
      %v2698 = vadd.f32 %v2268, %v2532
      %v2699 = vadd.f32 %v2269, %v2537
      %v2700 = vadd.f32 %v2270, %v2542
      %v2701 = vadd.f32 %v2271, %v2547
      %v2702 = vadd.f32 %v2272, %v2552
      %v2703 = vadd.f32 %v2273, %v2557
      %v2704 = vadd.f32 %v2274, %v2562
      %v2705 = vadd.f32 %v2275, %v2567
      %v2706 = vadd.f32 %v2276, %v2572
      %v2707 = vadd.f32 %v2277, %v2577
      %v2708 = vadd.f32 %v2278, %v2582
      %v2709 = vadd.f32 %v2279, %v2587
      %v2710 = vadd.f32 %v2280, %v2592
      %v2711 = vadd.f32 %v2281, %v2597
      %v2712 = vadd.f32 %v2282, %v2602
      %v2713 = vadd.f32 %v2283, %v2607
      %v2714 = vadd.f32 %v2284, %v2612
      %v2715 = vadd.f32 %v2285, %v2617
      %v2716 = vadd.f32 %v2286, %v2622
      %v2717 = vadd.f32 %v2287, %v2627
      %v2718 = vadd.f32 %v2288, %v2632
      %v2719 = vadd.f32 %v2289, %v2637
      %v2720 = vadd.f32 %v2290, %v2642
      %v2721 = vadd.f32 %v2291, %v2647
      %v2722 = vadd.f32 %v2292, %v2652
      %v2723 = vadd.f32 %v2293, %v2657
      %v2724 = vadd.f32 %v2294, %v2662
      %v2725 = vadd.f32 %v2295, %v2667
      %v2726 = vadd.f32 %v2296, %v2672
      %v2727 = vadd.f32 %v2297, %v2677
      %v2728 = vadd.f32 %v2298, %v2682
      %v2729 = vadd.f32 %v2299, %v2687
      %v2730 = vadd.f32 %v2300, %v2692
      %v2731 = vld [vmem:[%s206 + $0x24] sm:$0xff]
      %v2732 = vld [vmem:[%s206 + $0x2c] sm:$0xff]
      %v2733 = vld [vmem:[%s206 + $0x34] sm:$0xff]
      %v2734 = vld [vmem:[%s206 + $0x3c] sm:$0xff]
      %v2735 = vld [vmem:[%s206 + $0x44] sm:$0xff]
      %v2736 = vld [vmem:[%s206 + $0x4c] sm:$0xff]
      %v2737 = vld [vmem:[%s206 + $0x54] sm:$0xff]
      %v2738 = vld [vmem:[%s206 + $0x5c] sm:$0xff]
      %v2739 = vld [vmem:[%s206 + $0x64] sm:$0xff]
      %v2740 = vld [vmem:[%s206 + $0x6c] sm:$0xff]
      %v2741 = vld [vmem:[%s206 + $0x74] sm:$0xff]
      %v2742 = vld [vmem:[%s206 + $0x7c] sm:$0xff]
      %v2743 = vld [vmem:[%s206 + $0x84] sm:$0xff]
      %v2744 = vld [vmem:[%s206 + $0x8c] sm:$0xff]
      %v2745 = vld [vmem:[%s206 + $0x94] sm:$0xff]
      %v2746 = vld [vmem:[%s206 + $0x9c] sm:$0xff]
      %v2747 = vld [vmem:[%s206 + $0xa4] sm:$0xff]
      %v2748 = vld [vmem:[%s206 + $0xac] sm:$0xff]
      %v2749 = vld [vmem:[%s206 + $0xb4] sm:$0xff]
      %v2750 = vld [vmem:[%s206 + $0xbc] sm:$0xff]
      %v2751 = vld [vmem:[%s206 + $0xc4] sm:$0xff]
      %v2752 = vld [vmem:[%s206 + $0xcc] sm:$0xff]
      %v2753 = vld [vmem:[%s206 + $0xd4] sm:$0xff]
      %v2754 = vld [vmem:[%s206 + $0xdc] sm:$0xff]
      %v2755 = vld [vmem:[%s206 + $0xe4] sm:$0xff]
      %v2756 = vld [vmem:[%s206 + $0xec] sm:$0xff]
      %v2757 = vld [vmem:[%s206 + $0xf4] sm:$0xff]
      %v2758 = vld [vmem:[%s206 + $0xfc] sm:$0xff]
      %v2759 = vld [vmem:[%s206 + $0x104] sm:$0xff]
      %v2760 = vld [vmem:[%s206 + $0x10c] sm:$0xff]
      %v2761 = vld [vmem:[%s206 + $0x114] sm:$0xff]
      %v2762 = vld [vmem:[%s206 + $0x11c] sm:$0xff]
      %v2763 = vld [vmem:[%s206 + $0x124] sm:$0xff]
      %v2764 = vld [vmem:[%s206 + $0x12c] sm:$0xff]
      %v2765 = vld [vmem:[%s206 + $0x134] sm:$0xff]
      %v2766 = vld [vmem:[%s206 + $0x13c] sm:$0xff]
      %s2767 = scalar_lea.vmem %s210, 24
      %v2768 = vld [vmem:[%s2767] sm:$0xf]
      %v2770 = vsel %vm297, %v2731, 0
      %v2773 = vsel %vm297, %v2732, 0
      %v2776 = vsel %vm297, %v2733, 0
      %v2779 = vsel %vm297, %v2734, 0
      %v2782 = vsel %vm297, %v2735, 0
      %v2785 = vsel %vm297, %v2736, 0
      %v2788 = vsel %vm297, %v2737, 0
      %v2791 = vsel %vm297, %v2738, 0
      %v2794 = vsel %vm297, %v2739, 0
      %v2797 = vsel %vm297, %v2740, 0
      %v2800 = vsel %vm297, %v2741, 0
      %v2803 = vsel %vm297, %v2742, 0
      %v2806 = vsel %vm297, %v2743, 0
      %v2809 = vsel %vm297, %v2744, 0
      %v2812 = vsel %vm297, %v2745, 0
      %v2815 = vsel %vm297, %v2746, 0
      %v2818 = vsel %vm297, %v2747, 0
      %v2821 = vsel %vm297, %v2748, 0
      %v2824 = vsel %vm297, %v2749, 0
      %v2827 = vsel %vm297, %v2750, 0
      %v2830 = vsel %vm297, %v2751, 0
      %v2833 = vsel %vm297, %v2752, 0
      %v2836 = vsel %vm297, %v2753, 0
      %v2839 = vsel %vm297, %v2754, 0
      %v2842 = vsel %vm297, %v2755, 0
      %v2845 = vsel %vm297, %v2756, 0
      %v2848 = vsel %vm297, %v2757, 0
      %v2851 = vsel %vm297, %v2758, 0
      %v2854 = vsel %vm297, %v2759, 0
      %v2857 = vsel %vm297, %v2760, 0
      %v2860 = vsel %vm297, %v2761, 0
      %v2863 = vsel %vm297, %v2762, 0
      %v2866 = vsel %vm297, %v2763, 0
      %v2869 = vsel %vm297, %v2764, 0
      %v2872 = vsel %vm297, %v2765, 0
      %v2875 = vsel %vm297, %v2766, 0
      %v2878 = vsel %vm406, %v2768, 0
      %2880 = vmatprep.subr.mxu0 0.0
      %2881 = vmatpush1.msra.mxu0 0.0
      %2882 = vmatprep.subr.mxu0 0.0
      %2883 = vmatpush1.msra.mxu0 0.0
      %2884 = vmatprep.subr.mxu0 0.0
      %2885 = vmatpush1.msra.mxu0 0.0
      %2886 = vmatprep.subr.mxu0 0.0
      %2887 = vmatpush1.msra.mxu0 0.0
      %2888 = vmatprep.subr.mxu0 0.0
      %2889 = vmatpush1.msra.mxu0 0.0
      %2890 = vmatprep.subr.mxu0 0.0
      %2891 = vmatpush1.msra.mxu0 0.0
      %2892 = vmatprep.subr.mxu0 0.0
      %2893 = vmatpush1.msra.mxu0 0.0
      %2894 = vmatprep.subr.mxu0 0.0
      %2895 = vmatpush1.msra.mxu0 0.0
      %2896 = vmatprep.subr.mxu0 0.0
      %2897 = vmatpush1.msra.mxu0 0.0
      %2898 = vmatprep.subr.mxu0 0.0
      %2899 = vmatpush1.msra.mxu0 0.0
      %2900 = vmatprep.subr.mxu0 0.0
      %2901 = vmatpush1.msra.mxu0 0.0
      %2902 = vmatprep.subr.mxu0 0.0
      %2903 = vmatpush1.msra.mxu0 0.0
      %2904 = vmatprep.subr.mxu0 0.0
      %2905 = vmatpush1.msra.mxu0 0.0
      %2906 = vmatprep.subr.mxu0 0.0
      %2907 = vmatpush1.msra.mxu0 0.0
      %2908 = vmatprep.subr.mxu0 0.0
      %2909 = vmatpush1.msra.mxu0 0.0
      %2910 = vmatprep.subr.mxu0 0.0
      %2911 = vmatpush1.msra.mxu0 %v2878
      %2912 = vmatprep.subr.mxu0 0.0
      %2913 = vmatpush2.msra.mxu0 0.0
      %2914 = vmatprep.subr.mxu0 0.0
      %2915 = vmatpush2.msra.mxu0 0.0
      %2916 = vmatprep.subr.mxu0 0.0
      %2917 = vmatpush2.msra.mxu0 0.0
      %2918 = vmatprep.subr.mxu0 0.0
      %2919 = vmatpush2.msra.mxu0 0.0
      %2920 = vmatprep.subr.mxu0 0.0
      %2921 = vmatpush2.msra.mxu0 0.0
      %2922 = vmatprep.subr.mxu0 0.0
      %2923 = vmatpush2.msra.mxu0 0.0
      %2924 = vmatprep.subr.mxu0 0.0
      %2925 = vmatpush2.msra.mxu0 0.0
      %2926 = vmatprep.subr.mxu0 0.0
      %2927 = vmatpush2.msra.mxu0 0.0
      %2928 = vmatprep.subr.mxu0 0.0
      %2929 = vmatpush2.msra.mxu0 0.0
      %2930 = vmatprep.subr.mxu0 0.0
      %2931 = vmatpush2.msra.mxu0 0.0
      %2932 = vmatprep.subr.mxu0 0.0
      %2933 = vmatpush2.msra.mxu0 0.0
      %2934 = vmatprep.subr.mxu0 0.0
      %2935 = vmatpush2.msra.mxu0 0.0
      %2936 = vmatprep.subr.mxu0 0.0
      %2937 = vmatpush2.msra.mxu0 0.0
      %2938 = vmatprep.subr.mxu0 0.0
      %2939 = vmatpush2.msra.mxu0 0.0
      %2940 = vmatprep.subr.mxu0 0.0
      %2941 = vmatpush2.msra.mxu0 0.0
      %2942 = vmatprep.subr.mxu0 0.0
      %2943 = vmatpush2.msra.mxu0 0.0
      %2944 = vmatprep.mubr.f32.mxu0 0.0
      %2945 = vmatmul.mubr.f32.gmra.mxu0 %v2770
      %v2946 = vpop.f32.mrf.mxu0
      %v2947 = vadd.f32 0.0, %v2946
      %v2948 = vpop.f32.mrf.mxu0
      %2949 = vmatprep.mubr.f32.mxu0 0.0
      %2950 = vmatmul.mubr.f32.gmra.mxu0 %v2773
      %v2951 = vpop.f32.mrf.mxu0
      %v2952 = vadd.f32 0.0, %v2951
      %v2953 = vpop.f32.mrf.mxu0
      %2954 = vmatprep.mubr.f32.mxu0 0.0
      %2955 = vmatmul.mubr.f32.gmra.mxu0 %v2776
      %v2956 = vpop.f32.mrf.mxu0
      %v2957 = vadd.f32 0.0, %v2956
      %v2958 = vpop.f32.mrf.mxu0
      %2959 = vmatprep.mubr.f32.mxu0 0.0
      %2960 = vmatmul.mubr.f32.gmra.mxu0 %v2779
      %v2961 = vpop.f32.mrf.mxu0
      %v2962 = vadd.f32 0.0, %v2961
      %v2963 = vpop.f32.mrf.mxu0
      %2964 = vmatprep.mubr.f32.mxu0 0.0
      %2965 = vmatmul.mubr.f32.gmra.mxu0 %v2782
      %v2966 = vpop.f32.mrf.mxu0
      %v2967 = vadd.f32 0.0, %v2966
      %v2968 = vpop.f32.mrf.mxu0
      %2969 = vmatprep.mubr.f32.mxu0 0.0
      %2970 = vmatmul.mubr.f32.gmra.mxu0 %v2785
      %v2971 = vpop.f32.mrf.mxu0
      %v2972 = vadd.f32 0.0, %v2971
      %v2973 = vpop.f32.mrf.mxu0
      %2974 = vmatprep.mubr.f32.mxu0 0.0
      %2975 = vmatmul.mubr.f32.gmra.mxu0 %v2788
      %v2976 = vpop.f32.mrf.mxu0
      %v2977 = vadd.f32 0.0, %v2976
      %v2978 = vpop.f32.mrf.mxu0
      %2979 = vmatprep.mubr.f32.mxu0 0.0
      %2980 = vmatmul.mubr.f32.gmra.mxu0 %v2791
      %v2981 = vpop.f32.mrf.mxu0
      %v2982 = vadd.f32 0.0, %v2981
      %v2983 = vpop.f32.mrf.mxu0
      %2984 = vmatprep.mubr.f32.mxu0 0.0
      %2985 = vmatmul.mubr.f32.gmra.mxu0 %v2794
      %v2986 = vpop.f32.mrf.mxu0
      %v2987 = vadd.f32 0.0, %v2986
      %v2988 = vpop.f32.mrf.mxu0
      %2989 = vmatprep.mubr.f32.mxu0 0.0
      %2990 = vmatmul.mubr.f32.gmra.mxu0 %v2797
      %v2991 = vpop.f32.mrf.mxu0
      %v2992 = vadd.f32 0.0, %v2991
      %v2993 = vpop.f32.mrf.mxu0
      %2994 = vmatprep.mubr.f32.mxu0 0.0
      %2995 = vmatmul.mubr.f32.gmra.mxu0 %v2800
      %v2996 = vpop.f32.mrf.mxu0
      %v2997 = vadd.f32 0.0, %v2996
      %v2998 = vpop.f32.mrf.mxu0
      %2999 = vmatprep.mubr.f32.mxu0 0.0
      %3000 = vmatmul.mubr.f32.gmra.mxu0 %v2803
      %v3001 = vpop.f32.mrf.mxu0
      %v3002 = vadd.f32 0.0, %v3001
      %v3003 = vpop.f32.mrf.mxu0
      %3004 = vmatprep.mubr.f32.mxu0 0.0
      %3005 = vmatmul.mubr.f32.gmra.mxu0 %v2806
      %v3006 = vpop.f32.mrf.mxu0
      %v3007 = vadd.f32 0.0, %v3006
      %v3008 = vpop.f32.mrf.mxu0
      %3009 = vmatprep.mubr.f32.mxu0 0.0
      %3010 = vmatmul.mubr.f32.gmra.mxu0 %v2809
      %v3011 = vpop.f32.mrf.mxu0
      %v3012 = vadd.f32 0.0, %v3011
      %v3013 = vpop.f32.mrf.mxu0
      %3014 = vmatprep.mubr.f32.mxu0 0.0
      %3015 = vmatmul.mubr.f32.gmra.mxu0 %v2812
      %v3016 = vpop.f32.mrf.mxu0
      %v3017 = vadd.f32 0.0, %v3016
      %v3018 = vpop.f32.mrf.mxu0
      %3019 = vmatprep.mubr.f32.mxu0 0.0
      %3020 = vmatmul.mubr.f32.gmra.mxu0 %v2815
      %v3021 = vpop.f32.mrf.mxu0
      %v3022 = vadd.f32 0.0, %v3021
      %v3023 = vpop.f32.mrf.mxu0
      %3024 = vmatprep.mubr.f32.mxu0 0.0
      %3025 = vmatmul.mubr.f32.gmra.mxu0 %v2818
      %v3026 = vpop.f32.mrf.mxu0
      %v3027 = vadd.f32 0.0, %v3026
      %v3028 = vpop.f32.mrf.mxu0
      %3029 = vmatprep.mubr.f32.mxu0 0.0
      %3030 = vmatmul.mubr.f32.gmra.mxu0 %v2821
      %v3031 = vpop.f32.mrf.mxu0
      %v3032 = vadd.f32 0.0, %v3031
      %v3033 = vpop.f32.mrf.mxu0
      %3034 = vmatprep.mubr.f32.mxu0 0.0
      %3035 = vmatmul.mubr.f32.gmra.mxu0 %v2824
      %v3036 = vpop.f32.mrf.mxu0
      %v3037 = vadd.f32 0.0, %v3036
      %v3038 = vpop.f32.mrf.mxu0
      %3039 = vmatprep.mubr.f32.mxu0 0.0
      %3040 = vmatmul.mubr.f32.gmra.mxu0 %v2827
      %v3041 = vpop.f32.mrf.mxu0
      %v3042 = vadd.f32 0.0, %v3041
      %v3043 = vpop.f32.mrf.mxu0
      %3044 = vmatprep.mubr.f32.mxu0 0.0
      %3045 = vmatmul.mubr.f32.gmra.mxu0 %v2830
      %v3046 = vpop.f32.mrf.mxu0
      %v3047 = vadd.f32 0.0, %v3046
      %v3048 = vpop.f32.mrf.mxu0
      %3049 = vmatprep.mubr.f32.mxu0 0.0
      %3050 = vmatmul.mubr.f32.gmra.mxu0 %v2833
      %v3051 = vpop.f32.mrf.mxu0
      %v3052 = vadd.f32 0.0, %v3051
      %v3053 = vpop.f32.mrf.mxu0
      %3054 = vmatprep.mubr.f32.mxu0 0.0
      %3055 = vmatmul.mubr.f32.gmra.mxu0 %v2836
      %v3056 = vpop.f32.mrf.mxu0
      %v3057 = vadd.f32 0.0, %v3056
      %v3058 = vpop.f32.mrf.mxu0
      %3059 = vmatprep.mubr.f32.mxu0 0.0
      %3060 = vmatmul.mubr.f32.gmra.mxu0 %v2839
      %v3061 = vpop.f32.mrf.mxu0
      %v3062 = vadd.f32 0.0, %v3061
      %v3063 = vpop.f32.mrf.mxu0
      %3064 = vmatprep.mubr.f32.mxu0 0.0
      %3065 = vmatmul.mubr.f32.gmra.mxu0 %v2842
      %v3066 = vpop.f32.mrf.mxu0
      %v3067 = vadd.f32 0.0, %v3066
      %v3068 = vpop.f32.mrf.mxu0
      %3069 = vmatprep.mubr.f32.mxu0 0.0
      %3070 = vmatmul.mubr.f32.gmra.mxu0 %v2845
      %v3071 = vpop.f32.mrf.mxu0
      %v3072 = vadd.f32 0.0, %v3071
      %v3073 = vpop.f32.mrf.mxu0
      %3074 = vmatprep.mubr.f32.mxu0 0.0
      %3075 = vmatmul.mubr.f32.gmra.mxu0 %v2848
      %v3076 = vpop.f32.mrf.mxu0
      %v3077 = vadd.f32 0.0, %v3076
      %v3078 = vpop.f32.mrf.mxu0
      %3079 = vmatprep.mubr.f32.mxu0 0.0
      %3080 = vmatmul.mubr.f32.gmra.mxu0 %v2851
      %v3081 = vpop.f32.mrf.mxu0
      %v3082 = vadd.f32 0.0, %v3081
      %v3083 = vpop.f32.mrf.mxu0
      %3084 = vmatprep.mubr.f32.mxu0 0.0
      %3085 = vmatmul.mubr.f32.gmra.mxu0 %v2854
      %v3086 = vpop.f32.mrf.mxu0
      %v3087 = vadd.f32 0.0, %v3086
      %v3088 = vpop.f32.mrf.mxu0
      %3089 = vmatprep.mubr.f32.mxu0 0.0
      %3090 = vmatmul.mubr.f32.gmra.mxu0 %v2857
      %v3091 = vpop.f32.mrf.mxu0
      %v3092 = vadd.f32 0.0, %v3091
      %v3093 = vpop.f32.mrf.mxu0
      %3094 = vmatprep.mubr.f32.mxu0 0.0
      %3095 = vmatmul.mubr.f32.gmra.mxu0 %v2860
      %v3096 = vpop.f32.mrf.mxu0
      %v3097 = vadd.f32 0.0, %v3096
      %v3098 = vpop.f32.mrf.mxu0
      %3099 = vmatprep.mubr.f32.mxu0 0.0
      %3100 = vmatmul.mubr.f32.gmra.mxu0 %v2863
      %v3101 = vpop.f32.mrf.mxu0
      %v3102 = vadd.f32 0.0, %v3101
      %v3103 = vpop.f32.mrf.mxu0
      %3104 = vmatprep.mubr.f32.mxu0 0.0
      %3105 = vmatmul.mubr.f32.gmra.mxu0 %v2866
      %v3106 = vpop.f32.mrf.mxu0
      %v3107 = vadd.f32 0.0, %v3106
      %v3108 = vpop.f32.mrf.mxu0
      %3109 = vmatprep.mubr.f32.mxu0 0.0
      %3110 = vmatmul.mubr.f32.gmra.mxu0 %v2869
      %v3111 = vpop.f32.mrf.mxu0
      %v3112 = vadd.f32 0.0, %v3111
      %v3113 = vpop.f32.mrf.mxu0
      %3114 = vmatprep.mubr.f32.mxu0 0.0
      %3115 = vmatmul.mubr.f32.gmra.mxu0 %v2872
      %v3116 = vpop.f32.mrf.mxu0
      %v3117 = vadd.f32 0.0, %v3116
      %v3118 = vpop.f32.mrf.mxu0
      %3119 = vmatprep.mubr.f32.mxu0 0.0
      %3120 = vmatmul.mubr.f32.gmra.mxu0 %v2875
      %v3121 = vpop.f32.mrf.mxu0
      %v3122 = vadd.f32 0.0, %v3121
      %v3123 = vpop.f32.mrf.mxu0
      %3124 = vdwg.mxu0
      %v3125 = vadd.f32 %v2695, %v2947
      %v3126 = vadd.f32 %v2696, %v2952
      %v3127 = vadd.f32 %v2697, %v2957
      %v3128 = vadd.f32 %v2698, %v2962
      %v3129 = vadd.f32 %v2699, %v2967
      %v3130 = vadd.f32 %v2700, %v2972
      %v3131 = vadd.f32 %v2701, %v2977
      %v3132 = vadd.f32 %v2702, %v2982
      %v3133 = vadd.f32 %v2703, %v2987
      %v3134 = vadd.f32 %v2704, %v2992
      %v3135 = vadd.f32 %v2705, %v2997
      %v3136 = vadd.f32 %v2706, %v3002
      %v3137 = vadd.f32 %v2707, %v3007
      %v3138 = vadd.f32 %v2708, %v3012
      %v3139 = vadd.f32 %v2709, %v3017
      %v3140 = vadd.f32 %v2710, %v3022
      %v3141 = vadd.f32 %v2711, %v3027
      %v3142 = vadd.f32 %v2712, %v3032
      %v3143 = vadd.f32 %v2713, %v3037
      %v3144 = vadd.f32 %v2714, %v3042
      %v3145 = vadd.f32 %v2715, %v3047
      %v3146 = vadd.f32 %v2716, %v3052
      %v3147 = vadd.f32 %v2717, %v3057
      %v3148 = vadd.f32 %v2718, %v3062
      %v3149 = vadd.f32 %v2719, %v3067
      %v3150 = vadd.f32 %v2720, %v3072
      %v3151 = vadd.f32 %v2721, %v3077
      %v3152 = vadd.f32 %v2722, %v3082
      %v3153 = vadd.f32 %v2723, %v3087
      %v3154 = vadd.f32 %v2724, %v3092
      %v3155 = vadd.f32 %v2725, %v3097
      %v3156 = vadd.f32 %v2726, %v3102
      %v3157 = vadd.f32 %v2727, %v3107
      %v3158 = vadd.f32 %v2728, %v3112
      %v3159 = vadd.f32 %v2729, %v3117
      %v3160 = vadd.f32 %v2730, %v3122
      %v3161 = vld [vmem:[%s206 + $0x25] sm:$0xff]
      %v3162 = vld [vmem:[%s206 + $0x2d] sm:$0xff]
      %v3163 = vld [vmem:[%s206 + $0x35] sm:$0xff]
      %v3164 = vld [vmem:[%s206 + $0x3d] sm:$0xff]
      %v3165 = vld [vmem:[%s206 + $0x45] sm:$0xff]
      %v3166 = vld [vmem:[%s206 + $0x4d] sm:$0xff]
      %v3167 = vld [vmem:[%s206 + $0x55] sm:$0xff]
      %v3168 = vld [vmem:[%s206 + $0x5d] sm:$0xff]
      %v3169 = vld [vmem:[%s206 + $0x65] sm:$0xff]
      %v3170 = vld [vmem:[%s206 + $0x6d] sm:$0xff]
      %v3171 = vld [vmem:[%s206 + $0x75] sm:$0xff]
      %v3172 = vld [vmem:[%s206 + $0x7d] sm:$0xff]
      %v3173 = vld [vmem:[%s206 + $0x85] sm:$0xff]
      %v3174 = vld [vmem:[%s206 + $0x8d] sm:$0xff]
      %v3175 = vld [vmem:[%s206 + $0x95] sm:$0xff]
      %v3176 = vld [vmem:[%s206 + $0x9d] sm:$0xff]
      %v3177 = vld [vmem:[%s206 + $0xa5] sm:$0xff]
      %v3178 = vld [vmem:[%s206 + $0xad] sm:$0xff]
      %v3179 = vld [vmem:[%s206 + $0xb5] sm:$0xff]
      %v3180 = vld [vmem:[%s206 + $0xbd] sm:$0xff]
      %v3181 = vld [vmem:[%s206 + $0xc5] sm:$0xff]
      %v3182 = vld [vmem:[%s206 + $0xcd] sm:$0xff]
      %v3183 = vld [vmem:[%s206 + $0xd5] sm:$0xff]
      %v3184 = vld [vmem:[%s206 + $0xdd] sm:$0xff]
      %v3185 = vld [vmem:[%s206 + $0xe5] sm:$0xff]
      %v3186 = vld [vmem:[%s206 + $0xed] sm:$0xff]
      %v3187 = vld [vmem:[%s206 + $0xf5] sm:$0xff]
      %v3188 = vld [vmem:[%s206 + $0xfd] sm:$0xff]
      %v3189 = vld [vmem:[%s206 + $0x105] sm:$0xff]
      %v3190 = vld [vmem:[%s206 + $0x10d] sm:$0xff]
      %v3191 = vld [vmem:[%s206 + $0x115] sm:$0xff]
      %v3192 = vld [vmem:[%s206 + $0x11d] sm:$0xff]
      %v3193 = vld [vmem:[%s206 + $0x125] sm:$0xff]
      %v3194 = vld [vmem:[%s206 + $0x12d] sm:$0xff]
      %v3195 = vld [vmem:[%s206 + $0x135] sm:$0xff]
      %v3196 = vld [vmem:[%s206 + $0x13d] sm:$0xff]
      %s3197 = scalar_lea.vmem %s210, 28
      %v3198 = vld [vmem:[%s3197] sm:$0xf]
      %v3200 = vsel %vm297, %v3161, 0
      %v3203 = vsel %vm297, %v3162, 0
      %v3206 = vsel %vm297, %v3163, 0
      %v3209 = vsel %vm297, %v3164, 0
      %v3212 = vsel %vm297, %v3165, 0
      %v3215 = vsel %vm297, %v3166, 0
      %v3218 = vsel %vm297, %v3167, 0
      %v3221 = vsel %vm297, %v3168, 0
      %v3224 = vsel %vm297, %v3169, 0
      %v3227 = vsel %vm297, %v3170, 0
      %v3230 = vsel %vm297, %v3171, 0
      %v3233 = vsel %vm297, %v3172, 0
      %v3236 = vsel %vm297, %v3173, 0
      %v3239 = vsel %vm297, %v3174, 0
      %v3242 = vsel %vm297, %v3175, 0
      %v3245 = vsel %vm297, %v3176, 0
      %v3248 = vsel %vm297, %v3177, 0
      %v3251 = vsel %vm297, %v3178, 0
      %v3254 = vsel %vm297, %v3179, 0
      %v3257 = vsel %vm297, %v3180, 0
      %v3260 = vsel %vm297, %v3181, 0
      %v3263 = vsel %vm297, %v3182, 0
      %v3266 = vsel %vm297, %v3183, 0
      %v3269 = vsel %vm297, %v3184, 0
      %v3272 = vsel %vm297, %v3185, 0
      %v3275 = vsel %vm297, %v3186, 0
      %v3278 = vsel %vm297, %v3187, 0
      %v3281 = vsel %vm297, %v3188, 0
      %v3284 = vsel %vm297, %v3189, 0
      %v3287 = vsel %vm297, %v3190, 0
      %v3290 = vsel %vm297, %v3191, 0
      %v3293 = vsel %vm297, %v3192, 0
      %v3296 = vsel %vm297, %v3193, 0
      %v3299 = vsel %vm297, %v3194, 0
      %v3302 = vsel %vm297, %v3195, 0
      %v3305 = vsel %vm297, %v3196, 0
      %v3308 = vsel %vm406, %v3198, 0
      %3310 = vmatprep.subr.mxu0 0.0
      %3311 = vmatpush1.msra.mxu0 0.0
      %3312 = vmatprep.subr.mxu0 0.0
      %3313 = vmatpush1.msra.mxu0 0.0
      %3314 = vmatprep.subr.mxu0 0.0
      %3315 = vmatpush1.msra.mxu0 0.0
      %3316 = vmatprep.subr.mxu0 0.0
      %3317 = vmatpush1.msra.mxu0 0.0
      %3318 = vmatprep.subr.mxu0 0.0
      %3319 = vmatpush1.msra.mxu0 0.0
      %3320 = vmatprep.subr.mxu0 0.0
      %3321 = vmatpush1.msra.mxu0 0.0
      %3322 = vmatprep.subr.mxu0 0.0
      %3323 = vmatpush1.msra.mxu0 0.0
      %3324 = vmatprep.subr.mxu0 0.0
      %3325 = vmatpush1.msra.mxu0 0.0
      %3326 = vmatprep.subr.mxu0 0.0
      %3327 = vmatpush1.msra.mxu0 0.0
      %3328 = vmatprep.subr.mxu0 0.0
      %3329 = vmatpush1.msra.mxu0 0.0
      %3330 = vmatprep.subr.mxu0 0.0
      %3331 = vmatpush1.msra.mxu0 0.0
      %3332 = vmatprep.subr.mxu0 0.0
      %3333 = vmatpush1.msra.mxu0 0.0
      %3334 = vmatprep.subr.mxu0 0.0
      %3335 = vmatpush1.msra.mxu0 0.0
      %3336 = vmatprep.subr.mxu0 0.0
      %3337 = vmatpush1.msra.mxu0 0.0
      %3338 = vmatprep.subr.mxu0 0.0
      %3339 = vmatpush1.msra.mxu0 0.0
      %3340 = vmatprep.subr.mxu0 0.0
      %3341 = vmatpush1.msra.mxu0 %v3308
      %3342 = vmatprep.subr.mxu0 0.0
      %3343 = vmatpush2.msra.mxu0 0.0
      %3344 = vmatprep.subr.mxu0 0.0
      %3345 = vmatpush2.msra.mxu0 0.0
      %3346 = vmatprep.subr.mxu0 0.0
      %3347 = vmatpush2.msra.mxu0 0.0
      %3348 = vmatprep.subr.mxu0 0.0
      %3349 = vmatpush2.msra.mxu0 0.0
      %3350 = vmatprep.subr.mxu0 0.0
      %3351 = vmatpush2.msra.mxu0 0.0
      %3352 = vmatprep.subr.mxu0 0.0
      %3353 = vmatpush2.msra.mxu0 0.0
      %3354 = vmatprep.subr.mxu0 0.0
      %3355 = vmatpush2.msra.mxu0 0.0
      %3356 = vmatprep.subr.mxu0 0.0
      %3357 = vmatpush2.msra.mxu0 0.0
      %3358 = vmatprep.subr.mxu0 0.0
      %3359 = vmatpush2.msra.mxu0 0.0
      %3360 = vmatprep.subr.mxu0 0.0
      %3361 = vmatpush2.msra.mxu0 0.0
      %3362 = vmatprep.subr.mxu0 0.0
      %3363 = vmatpush2.msra.mxu0 0.0
      %3364 = vmatprep.subr.mxu0 0.0
      %3365 = vmatpush2.msra.mxu0 0.0
      %3366 = vmatprep.subr.mxu0 0.0
      %3367 = vmatpush2.msra.mxu0 0.0
      %3368 = vmatprep.subr.mxu0 0.0
      %3369 = vmatpush2.msra.mxu0 0.0
      %3370 = vmatprep.subr.mxu0 0.0
      %3371 = vmatpush2.msra.mxu0 0.0
      %3372 = vmatprep.subr.mxu0 0.0
      %3373 = vmatpush2.msra.mxu0 0.0
      %3374 = vmatprep.mubr.f32.mxu0 0.0
      %3375 = vmatmul.mubr.f32.gmra.mxu0 %v3200
      %v3376 = vpop.f32.mrf.mxu0
      %v3377 = vadd.f32 0.0, %v3376
      %v3378 = vpop.f32.mrf.mxu0
      %3379 = vmatprep.mubr.f32.mxu0 0.0
      %3380 = vmatmul.mubr.f32.gmra.mxu0 %v3203
      %v3381 = vpop.f32.mrf.mxu0
      %v3382 = vadd.f32 0.0, %v3381
      %v3383 = vpop.f32.mrf.mxu0
      %3384 = vmatprep.mubr.f32.mxu0 0.0
      %3385 = vmatmul.mubr.f32.gmra.mxu0 %v3206
      %v3386 = vpop.f32.mrf.mxu0
      %v3387 = vadd.f32 0.0, %v3386
      %v3388 = vpop.f32.mrf.mxu0
      %3389 = vmatprep.mubr.f32.mxu0 0.0
      %3390 = vmatmul.mubr.f32.gmra.mxu0 %v3209
      %v3391 = vpop.f32.mrf.mxu0
      %v3392 = vadd.f32 0.0, %v3391
      %v3393 = vpop.f32.mrf.mxu0
      %3394 = vmatprep.mubr.f32.mxu0 0.0
      %3395 = vmatmul.mubr.f32.gmra.mxu0 %v3212
      %v3396 = vpop.f32.mrf.mxu0
      %v3397 = vadd.f32 0.0, %v3396
      %v3398 = vpop.f32.mrf.mxu0
      %3399 = vmatprep.mubr.f32.mxu0 0.0
      %3400 = vmatmul.mubr.f32.gmra.mxu0 %v3215
      %v3401 = vpop.f32.mrf.mxu0
      %v3402 = vadd.f32 0.0, %v3401
      %v3403 = vpop.f32.mrf.mxu0
      %3404 = vmatprep.mubr.f32.mxu0 0.0
      %3405 = vmatmul.mubr.f32.gmra.mxu0 %v3218
      %v3406 = vpop.f32.mrf.mxu0
      %v3407 = vadd.f32 0.0, %v3406
      %v3408 = vpop.f32.mrf.mxu0
      %3409 = vmatprep.mubr.f32.mxu0 0.0
      %3410 = vmatmul.mubr.f32.gmra.mxu0 %v3221
      %v3411 = vpop.f32.mrf.mxu0
      %v3412 = vadd.f32 0.0, %v3411
      %v3413 = vpop.f32.mrf.mxu0
      %3414 = vmatprep.mubr.f32.mxu0 0.0
      %3415 = vmatmul.mubr.f32.gmra.mxu0 %v3224
      %v3416 = vpop.f32.mrf.mxu0
      %v3417 = vadd.f32 0.0, %v3416
      %v3418 = vpop.f32.mrf.mxu0
      %3419 = vmatprep.mubr.f32.mxu0 0.0
      %3420 = vmatmul.mubr.f32.gmra.mxu0 %v3227
      %v3421 = vpop.f32.mrf.mxu0
      %v3422 = vadd.f32 0.0, %v3421
      %v3423 = vpop.f32.mrf.mxu0
      %3424 = vmatprep.mubr.f32.mxu0 0.0
      %3425 = vmatmul.mubr.f32.gmra.mxu0 %v3230
      %v3426 = vpop.f32.mrf.mxu0
      %v3427 = vadd.f32 0.0, %v3426
      %v3428 = vpop.f32.mrf.mxu0
      %3429 = vmatprep.mubr.f32.mxu0 0.0
      %3430 = vmatmul.mubr.f32.gmra.mxu0 %v3233
      %v3431 = vpop.f32.mrf.mxu0
      %v3432 = vadd.f32 0.0, %v3431
      %v3433 = vpop.f32.mrf.mxu0
      %3434 = vmatprep.mubr.f32.mxu0 0.0
      %3435 = vmatmul.mubr.f32.gmra.mxu0 %v3236
      %v3436 = vpop.f32.mrf.mxu0
      %v3437 = vadd.f32 0.0, %v3436
      %v3438 = vpop.f32.mrf.mxu0
      %3439 = vmatprep.mubr.f32.mxu0 0.0
      %3440 = vmatmul.mubr.f32.gmra.mxu0 %v3239
      %v3441 = vpop.f32.mrf.mxu0
      %v3442 = vadd.f32 0.0, %v3441
      %v3443 = vpop.f32.mrf.mxu0
      %3444 = vmatprep.mubr.f32.mxu0 0.0
      %3445 = vmatmul.mubr.f32.gmra.mxu0 %v3242
      %v3446 = vpop.f32.mrf.mxu0
      %v3447 = vadd.f32 0.0, %v3446
      %v3448 = vpop.f32.mrf.mxu0
      %3449 = vmatprep.mubr.f32.mxu0 0.0
      %3450 = vmatmul.mubr.f32.gmra.mxu0 %v3245
      %v3451 = vpop.f32.mrf.mxu0
      %v3452 = vadd.f32 0.0, %v3451
      %v3453 = vpop.f32.mrf.mxu0
      %3454 = vmatprep.mubr.f32.mxu0 0.0
      %3455 = vmatmul.mubr.f32.gmra.mxu0 %v3248
      %v3456 = vpop.f32.mrf.mxu0
      %v3457 = vadd.f32 0.0, %v3456
      %v3458 = vpop.f32.mrf.mxu0
      %3459 = vmatprep.mubr.f32.mxu0 0.0
      %3460 = vmatmul.mubr.f32.gmra.mxu0 %v3251
      %v3461 = vpop.f32.mrf.mxu0
      %v3462 = vadd.f32 0.0, %v3461
      %v3463 = vpop.f32.mrf.mxu0
      %3464 = vmatprep.mubr.f32.mxu0 0.0
      %3465 = vmatmul.mubr.f32.gmra.mxu0 %v3254
      %v3466 = vpop.f32.mrf.mxu0
      %v3467 = vadd.f32 0.0, %v3466
      %v3468 = vpop.f32.mrf.mxu0
      %3469 = vmatprep.mubr.f32.mxu0 0.0
      %3470 = vmatmul.mubr.f32.gmra.mxu0 %v3257
      %v3471 = vpop.f32.mrf.mxu0
      %v3472 = vadd.f32 0.0, %v3471
      %v3473 = vpop.f32.mrf.mxu0
      %3474 = vmatprep.mubr.f32.mxu0 0.0
      %3475 = vmatmul.mubr.f32.gmra.mxu0 %v3260
      %v3476 = vpop.f32.mrf.mxu0
      %v3477 = vadd.f32 0.0, %v3476
      %v3478 = vpop.f32.mrf.mxu0
      %3479 = vmatprep.mubr.f32.mxu0 0.0
      %3480 = vmatmul.mubr.f32.gmra.mxu0 %v3263
      %v3481 = vpop.f32.mrf.mxu0
      %v3482 = vadd.f32 0.0, %v3481
      %v3483 = vpop.f32.mrf.mxu0
      %3484 = vmatprep.mubr.f32.mxu0 0.0
      %3485 = vmatmul.mubr.f32.gmra.mxu0 %v3266
      %v3486 = vpop.f32.mrf.mxu0
      %v3487 = vadd.f32 0.0, %v3486
      %v3488 = vpop.f32.mrf.mxu0
      %3489 = vmatprep.mubr.f32.mxu0 0.0
      %3490 = vmatmul.mubr.f32.gmra.mxu0 %v3269
      %v3491 = vpop.f32.mrf.mxu0
      %v3492 = vadd.f32 0.0, %v3491
      %v3493 = vpop.f32.mrf.mxu0
      %3494 = vmatprep.mubr.f32.mxu0 0.0
      %3495 = vmatmul.mubr.f32.gmra.mxu0 %v3272
      %v3496 = vpop.f32.mrf.mxu0
      %v3497 = vadd.f32 0.0, %v3496
      %v3498 = vpop.f32.mrf.mxu0
      %3499 = vmatprep.mubr.f32.mxu0 0.0
      %3500 = vmatmul.mubr.f32.gmra.mxu0 %v3275
      %v3501 = vpop.f32.mrf.mxu0
      %v3502 = vadd.f32 0.0, %v3501
      %v3503 = vpop.f32.mrf.mxu0
      %3504 = vmatprep.mubr.f32.mxu0 0.0
      %3505 = vmatmul.mubr.f32.gmra.mxu0 %v3278
      %v3506 = vpop.f32.mrf.mxu0
      %v3507 = vadd.f32 0.0, %v3506
      %v3508 = vpop.f32.mrf.mxu0
      %3509 = vmatprep.mubr.f32.mxu0 0.0
      %3510 = vmatmul.mubr.f32.gmra.mxu0 %v3281
      %v3511 = vpop.f32.mrf.mxu0
      %v3512 = vadd.f32 0.0, %v3511
      %v3513 = vpop.f32.mrf.mxu0
      %3514 = vmatprep.mubr.f32.mxu0 0.0
      %3515 = vmatmul.mubr.f32.gmra.mxu0 %v3284
      %v3516 = vpop.f32.mrf.mxu0
      %v3517 = vadd.f32 0.0, %v3516
      %v3518 = vpop.f32.mrf.mxu0
      %3519 = vmatprep.mubr.f32.mxu0 0.0
      %3520 = vmatmul.mubr.f32.gmra.mxu0 %v3287
      %v3521 = vpop.f32.mrf.mxu0
      %v3522 = vadd.f32 0.0, %v3521
      %v3523 = vpop.f32.mrf.mxu0
      %3524 = vmatprep.mubr.f32.mxu0 0.0
      %3525 = vmatmul.mubr.f32.gmra.mxu0 %v3290
      %v3526 = vpop.f32.mrf.mxu0
      %v3527 = vadd.f32 0.0, %v3526
      %v3528 = vpop.f32.mrf.mxu0
      %3529 = vmatprep.mubr.f32.mxu0 0.0
      %3530 = vmatmul.mubr.f32.gmra.mxu0 %v3293
      %v3531 = vpop.f32.mrf.mxu0
      %v3532 = vadd.f32 0.0, %v3531
      %v3533 = vpop.f32.mrf.mxu0
      %3534 = vmatprep.mubr.f32.mxu0 0.0
      %3535 = vmatmul.mubr.f32.gmra.mxu0 %v3296
      %v3536 = vpop.f32.mrf.mxu0
      %v3537 = vadd.f32 0.0, %v3536
      %v3538 = vpop.f32.mrf.mxu0
      %3539 = vmatprep.mubr.f32.mxu0 0.0
      %3540 = vmatmul.mubr.f32.gmra.mxu0 %v3299
      %v3541 = vpop.f32.mrf.mxu0
      %v3542 = vadd.f32 0.0, %v3541
      %v3543 = vpop.f32.mrf.mxu0
      %3544 = vmatprep.mubr.f32.mxu0 0.0
      %3545 = vmatmul.mubr.f32.gmra.mxu0 %v3302
      %v3546 = vpop.f32.mrf.mxu0
      %v3547 = vadd.f32 0.0, %v3546
      %v3548 = vpop.f32.mrf.mxu0
      %3549 = vmatprep.mubr.f32.mxu0 0.0
      %3550 = vmatmul.mubr.f32.gmra.mxu0 %v3305
      %v3551 = vpop.f32.mrf.mxu0
      %v3552 = vadd.f32 0.0, %v3551
      %v3553 = vpop.f32.mrf.mxu0
      %3554 = vdwg.mxu0
      %v3555 = vadd.f32 %v3125, %v3377
      %v3556 = vadd.f32 %v3126, %v3382
      %v3557 = vadd.f32 %v3127, %v3387
      %v3558 = vadd.f32 %v3128, %v3392
      %v3559 = vadd.f32 %v3129, %v3397
      %v3560 = vadd.f32 %v3130, %v3402
      %v3561 = vadd.f32 %v3131, %v3407
      %v3562 = vadd.f32 %v3132, %v3412
      %v3563 = vadd.f32 %v3133, %v3417
      %v3564 = vadd.f32 %v3134, %v3422
      %v3565 = vadd.f32 %v3135, %v3427
      %v3566 = vadd.f32 %v3136, %v3432
      %v3567 = vadd.f32 %v3137, %v3437
      %v3568 = vadd.f32 %v3138, %v3442
      %v3569 = vadd.f32 %v3139, %v3447
      %v3570 = vadd.f32 %v3140, %v3452
      %v3571 = vadd.f32 %v3141, %v3457
      %v3572 = vadd.f32 %v3142, %v3462
      %v3573 = vadd.f32 %v3143, %v3467
      %v3574 = vadd.f32 %v3144, %v3472
      %v3575 = vadd.f32 %v3145, %v3477
      %v3576 = vadd.f32 %v3146, %v3482
      %v3577 = vadd.f32 %v3147, %v3487
      %v3578 = vadd.f32 %v3148, %v3492
      %v3579 = vadd.f32 %v3149, %v3497
      %v3580 = vadd.f32 %v3150, %v3502
      %v3581 = vadd.f32 %v3151, %v3507
      %v3582 = vadd.f32 %v3152, %v3512
      %v3583 = vadd.f32 %v3153, %v3517
      %v3584 = vadd.f32 %v3154, %v3522
      %v3585 = vadd.f32 %v3155, %v3527
      %v3586 = vadd.f32 %v3156, %v3532
      %v3587 = vadd.f32 %v3157, %v3537
      %v3588 = vadd.f32 %v3158, %v3542
      %v3589 = vadd.f32 %v3159, %v3547
      %v3590 = vadd.f32 %v3160, %v3552
      %v3591 = vld [vmem:[%s206 + $0x26] sm:$0xff]
      %v3592 = vld [vmem:[%s206 + $0x2e] sm:$0xff]
      %v3593 = vld [vmem:[%s206 + $0x36] sm:$0xff]
      %v3594 = vld [vmem:[%s206 + $0x3e] sm:$0xff]
      %v3595 = vld [vmem:[%s206 + $0x46] sm:$0xff]
      %v3596 = vld [vmem:[%s206 + $0x4e] sm:$0xff]
      %v3597 = vld [vmem:[%s206 + $0x56] sm:$0xff]
      %v3598 = vld [vmem:[%s206 + $0x5e] sm:$0xff]
      %v3599 = vld [vmem:[%s206 + $0x66] sm:$0xff]
      %v3600 = vld [vmem:[%s206 + $0x6e] sm:$0xff]
      %v3601 = vld [vmem:[%s206 + $0x76] sm:$0xff]
      %v3602 = vld [vmem:[%s206 + $0x7e] sm:$0xff]
      %v3603 = vld [vmem:[%s206 + $0x86] sm:$0xff]
      %v3604 = vld [vmem:[%s206 + $0x8e] sm:$0xff]
      %v3605 = vld [vmem:[%s206 + $0x96] sm:$0xff]
      %v3606 = vld [vmem:[%s206 + $0x9e] sm:$0xff]
      %v3607 = vld [vmem:[%s206 + $0xa6] sm:$0xff]
      %v3608 = vld [vmem:[%s206 + $0xae] sm:$0xff]
      %v3609 = vld [vmem:[%s206 + $0xb6] sm:$0xff]
      %v3610 = vld [vmem:[%s206 + $0xbe] sm:$0xff]
      %v3611 = vld [vmem:[%s206 + $0xc6] sm:$0xff]
      %v3612 = vld [vmem:[%s206 + $0xce] sm:$0xff]
      %v3613 = vld [vmem:[%s206 + $0xd6] sm:$0xff]
      %v3614 = vld [vmem:[%s206 + $0xde] sm:$0xff]
      %v3615 = vld [vmem:[%s206 + $0xe6] sm:$0xff]
      %v3616 = vld [vmem:[%s206 + $0xee] sm:$0xff]
      %v3617 = vld [vmem:[%s206 + $0xf6] sm:$0xff]
      %v3618 = vld [vmem:[%s206 + $0xfe] sm:$0xff]
      %v3619 = vld [vmem:[%s206 + $0x106] sm:$0xff]
      %v3620 = vld [vmem:[%s206 + $0x10e] sm:$0xff]
      %v3621 = vld [vmem:[%s206 + $0x116] sm:$0xff]
      %v3622 = vld [vmem:[%s206 + $0x11e] sm:$0xff]
      %v3623 = vld [vmem:[%s206 + $0x126] sm:$0xff]
      %v3624 = vld [vmem:[%s206 + $0x12e] sm:$0xff]
      %v3625 = vld [vmem:[%s206 + $0x136] sm:$0xff]
      %v3626 = vld [vmem:[%s206 + $0x13e] sm:$0xff]
      %s3627 = scalar_lea.vmem %s210, 32
      %v3628 = vld [vmem:[%s3627] sm:$0xf]
      %v3630 = vsel %vm297, %v3591, 0
      %v3633 = vsel %vm297, %v3592, 0
      %v3636 = vsel %vm297, %v3593, 0
      %v3639 = vsel %vm297, %v3594, 0
      %v3642 = vsel %vm297, %v3595, 0
      %v3645 = vsel %vm297, %v3596, 0
      %v3648 = vsel %vm297, %v3597, 0
      %v3651 = vsel %vm297, %v3598, 0
      %v3654 = vsel %vm297, %v3599, 0
      %v3657 = vsel %vm297, %v3600, 0
      %v3660 = vsel %vm297, %v3601, 0
      %v3663 = vsel %vm297, %v3602, 0
      %v3666 = vsel %vm297, %v3603, 0
      %v3669 = vsel %vm297, %v3604, 0
      %v3672 = vsel %vm297, %v3605, 0
      %v3675 = vsel %vm297, %v3606, 0
      %v3678 = vsel %vm297, %v3607, 0
      %v3681 = vsel %vm297, %v3608, 0
      %v3684 = vsel %vm297, %v3609, 0
      %v3687 = vsel %vm297, %v3610, 0
      %v3690 = vsel %vm297, %v3611, 0
      %v3693 = vsel %vm297, %v3612, 0
      %v3696 = vsel %vm297, %v3613, 0
      %v3699 = vsel %vm297, %v3614, 0
      %v3702 = vsel %vm297, %v3615, 0
      %v3705 = vsel %vm297, %v3616, 0
      %v3708 = vsel %vm297, %v3617, 0
      %v3711 = vsel %vm297, %v3618, 0
      %v3714 = vsel %vm297, %v3619, 0
      %v3717 = vsel %vm297, %v3620, 0
      %v3720 = vsel %vm297, %v3621, 0
      %v3723 = vsel %vm297, %v3622, 0
      %v3726 = vsel %vm297, %v3623, 0
      %v3729 = vsel %vm297, %v3624, 0
      %v3732 = vsel %vm297, %v3625, 0
      %v3735 = vsel %vm297, %v3626, 0
      %v3738 = vsel %vm406, %v3628, 0
      %3740 = vmatprep.subr.mxu0 0.0
      %3741 = vmatpush1.msra.mxu0 0.0
      %3742 = vmatprep.subr.mxu0 0.0
      %3743 = vmatpush1.msra.mxu0 0.0
      %3744 = vmatprep.subr.mxu0 0.0
      %3745 = vmatpush1.msra.mxu0 0.0
      %3746 = vmatprep.subr.mxu0 0.0
      %3747 = vmatpush1.msra.mxu0 0.0
      %3748 = vmatprep.subr.mxu0 0.0
      %3749 = vmatpush1.msra.mxu0 0.0
      %3750 = vmatprep.subr.mxu0 0.0
      %3751 = vmatpush1.msra.mxu0 0.0
      %3752 = vmatprep.subr.mxu0 0.0
      %3753 = vmatpush1.msra.mxu0 0.0
      %3754 = vmatprep.subr.mxu0 0.0
      %3755 = vmatpush1.msra.mxu0 0.0
      %3756 = vmatprep.subr.mxu0 0.0
      %3757 = vmatpush1.msra.mxu0 0.0
      %3758 = vmatprep.subr.mxu0 0.0
      %3759 = vmatpush1.msra.mxu0 0.0
      %3760 = vmatprep.subr.mxu0 0.0
      %3761 = vmatpush1.msra.mxu0 0.0
      %3762 = vmatprep.subr.mxu0 0.0
      %3763 = vmatpush1.msra.mxu0 0.0
      %3764 = vmatprep.subr.mxu0 0.0
      %3765 = vmatpush1.msra.mxu0 0.0
      %3766 = vmatprep.subr.mxu0 0.0
      %3767 = vmatpush1.msra.mxu0 0.0
      %3768 = vmatprep.subr.mxu0 0.0
      %3769 = vmatpush1.msra.mxu0 0.0
      %3770 = vmatprep.subr.mxu0 0.0
      %3771 = vmatpush1.msra.mxu0 %v3738
      %3772 = vmatprep.subr.mxu0 0.0
      %3773 = vmatpush2.msra.mxu0 0.0
      %3774 = vmatprep.subr.mxu0 0.0
      %3775 = vmatpush2.msra.mxu0 0.0
      %3776 = vmatprep.subr.mxu0 0.0
      %3777 = vmatpush2.msra.mxu0 0.0
      %3778 = vmatprep.subr.mxu0 0.0
      %3779 = vmatpush2.msra.mxu0 0.0
      %3780 = vmatprep.subr.mxu0 0.0
      %3781 = vmatpush2.msra.mxu0 0.0
      %3782 = vmatprep.subr.mxu0 0.0
      %3783 = vmatpush2.msra.mxu0 0.0
      %3784 = vmatprep.subr.mxu0 0.0
      %3785 = vmatpush2.msra.mxu0 0.0
      %3786 = vmatprep.subr.mxu0 0.0
      %3787 = vmatpush2.msra.mxu0 0.0
      %3788 = vmatprep.subr.mxu0 0.0
      %3789 = vmatpush2.msra.mxu0 0.0
      %3790 = vmatprep.subr.mxu0 0.0
      %3791 = vmatpush2.msra.mxu0 0.0
      %3792 = vmatprep.subr.mxu0 0.0
      %3793 = vmatpush2.msra.mxu0 0.0
      %3794 = vmatprep.subr.mxu0 0.0
      %3795 = vmatpush2.msra.mxu0 0.0
      %3796 = vmatprep.subr.mxu0 0.0
      %3797 = vmatpush2.msra.mxu0 0.0
      %3798 = vmatprep.subr.mxu0 0.0
      %3799 = vmatpush2.msra.mxu0 0.0
      %3800 = vmatprep.subr.mxu0 0.0
      %3801 = vmatpush2.msra.mxu0 0.0
      %3802 = vmatprep.subr.mxu0 0.0
      %3803 = vmatpush2.msra.mxu0 0.0
      %3804 = vmatprep.mubr.f32.mxu0 0.0
      %3805 = vmatmul.mubr.f32.gmra.mxu0 %v3630
      %v3806 = vpop.f32.mrf.mxu0
      %v3807 = vadd.f32 0.0, %v3806
      %v3808 = vpop.f32.mrf.mxu0
      %3809 = vmatprep.mubr.f32.mxu0 0.0
      %3810 = vmatmul.mubr.f32.gmra.mxu0 %v3633
      %v3811 = vpop.f32.mrf.mxu0
      %v3812 = vadd.f32 0.0, %v3811
      %v3813 = vpop.f32.mrf.mxu0
      %3814 = vmatprep.mubr.f32.mxu0 0.0
      %3815 = vmatmul.mubr.f32.gmra.mxu0 %v3636
      %v3816 = vpop.f32.mrf.mxu0
      %v3817 = vadd.f32 0.0, %v3816
      %v3818 = vpop.f32.mrf.mxu0
      %3819 = vmatprep.mubr.f32.mxu0 0.0
      %3820 = vmatmul.mubr.f32.gmra.mxu0 %v3639
      %v3821 = vpop.f32.mrf.mxu0
      %v3822 = vadd.f32 0.0, %v3821
      %v3823 = vpop.f32.mrf.mxu0
      %3824 = vmatprep.mubr.f32.mxu0 0.0
      %3825 = vmatmul.mubr.f32.gmra.mxu0 %v3642
      %v3826 = vpop.f32.mrf.mxu0
      %v3827 = vadd.f32 0.0, %v3826
      %v3828 = vpop.f32.mrf.mxu0
      %3829 = vmatprep.mubr.f32.mxu0 0.0
      %3830 = vmatmul.mubr.f32.gmra.mxu0 %v3645
      %v3831 = vpop.f32.mrf.mxu0
      %v3832 = vadd.f32 0.0, %v3831
      %v3833 = vpop.f32.mrf.mxu0
      %3834 = vmatprep.mubr.f32.mxu0 0.0
      %3835 = vmatmul.mubr.f32.gmra.mxu0 %v3648
      %v3836 = vpop.f32.mrf.mxu0
      %v3837 = vadd.f32 0.0, %v3836
      %v3838 = vpop.f32.mrf.mxu0
      %3839 = vmatprep.mubr.f32.mxu0 0.0
      %3840 = vmatmul.mubr.f32.gmra.mxu0 %v3651
      %v3841 = vpop.f32.mrf.mxu0
      %v3842 = vadd.f32 0.0, %v3841
      %v3843 = vpop.f32.mrf.mxu0
      %3844 = vmatprep.mubr.f32.mxu0 0.0
      %3845 = vmatmul.mubr.f32.gmra.mxu0 %v3654
      %v3846 = vpop.f32.mrf.mxu0
      %v3847 = vadd.f32 0.0, %v3846
      %v3848 = vpop.f32.mrf.mxu0
      %3849 = vmatprep.mubr.f32.mxu0 0.0
      %3850 = vmatmul.mubr.f32.gmra.mxu0 %v3657
      %v3851 = vpop.f32.mrf.mxu0
      %v3852 = vadd.f32 0.0, %v3851
      %v3853 = vpop.f32.mrf.mxu0
      %3854 = vmatprep.mubr.f32.mxu0 0.0
      %3855 = vmatmul.mubr.f32.gmra.mxu0 %v3660
      %v3856 = vpop.f32.mrf.mxu0
      %v3857 = vadd.f32 0.0, %v3856
      %v3858 = vpop.f32.mrf.mxu0
      %3859 = vmatprep.mubr.f32.mxu0 0.0
      %3860 = vmatmul.mubr.f32.gmra.mxu0 %v3663
      %v3861 = vpop.f32.mrf.mxu0
      %v3862 = vadd.f32 0.0, %v3861
      %v3863 = vpop.f32.mrf.mxu0
      %3864 = vmatprep.mubr.f32.mxu0 0.0
      %3865 = vmatmul.mubr.f32.gmra.mxu0 %v3666
      %v3866 = vpop.f32.mrf.mxu0
      %v3867 = vadd.f32 0.0, %v3866
      %v3868 = vpop.f32.mrf.mxu0
      %3869 = vmatprep.mubr.f32.mxu0 0.0
      %3870 = vmatmul.mubr.f32.gmra.mxu0 %v3669
      %v3871 = vpop.f32.mrf.mxu0
      %v3872 = vadd.f32 0.0, %v3871
      %v3873 = vpop.f32.mrf.mxu0
      %3874 = vmatprep.mubr.f32.mxu0 0.0
      %3875 = vmatmul.mubr.f32.gmra.mxu0 %v3672
      %v3876 = vpop.f32.mrf.mxu0
      %v3877 = vadd.f32 0.0, %v3876
      %v3878 = vpop.f32.mrf.mxu0
      %3879 = vmatprep.mubr.f32.mxu0 0.0
      %3880 = vmatmul.mubr.f32.gmra.mxu0 %v3675
      %v3881 = vpop.f32.mrf.mxu0
      %v3882 = vadd.f32 0.0, %v3881
      %v3883 = vpop.f32.mrf.mxu0
      %3884 = vmatprep.mubr.f32.mxu0 0.0
      %3885 = vmatmul.mubr.f32.gmra.mxu0 %v3678
      %v3886 = vpop.f32.mrf.mxu0
      %v3887 = vadd.f32 0.0, %v3886
      %v3888 = vpop.f32.mrf.mxu0
      %3889 = vmatprep.mubr.f32.mxu0 0.0
      %3890 = vmatmul.mubr.f32.gmra.mxu0 %v3681
      %v3891 = vpop.f32.mrf.mxu0
      %v3892 = vadd.f32 0.0, %v3891
      %v3893 = vpop.f32.mrf.mxu0
      %3894 = vmatprep.mubr.f32.mxu0 0.0
      %3895 = vmatmul.mubr.f32.gmra.mxu0 %v3684
      %v3896 = vpop.f32.mrf.mxu0
      %v3897 = vadd.f32 0.0, %v3896
      %v3898 = vpop.f32.mrf.mxu0
      %3899 = vmatprep.mubr.f32.mxu0 0.0
      %3900 = vmatmul.mubr.f32.gmra.mxu0 %v3687
      %v3901 = vpop.f32.mrf.mxu0
      %v3902 = vadd.f32 0.0, %v3901
      %v3903 = vpop.f32.mrf.mxu0
      %3904 = vmatprep.mubr.f32.mxu0 0.0
      %3905 = vmatmul.mubr.f32.gmra.mxu0 %v3690
      %v3906 = vpop.f32.mrf.mxu0
      %v3907 = vadd.f32 0.0, %v3906
      %v3908 = vpop.f32.mrf.mxu0
      %3909 = vmatprep.mubr.f32.mxu0 0.0
      %3910 = vmatmul.mubr.f32.gmra.mxu0 %v3693
      %v3911 = vpop.f32.mrf.mxu0
      %v3912 = vadd.f32 0.0, %v3911
      %v3913 = vpop.f32.mrf.mxu0
      %3914 = vmatprep.mubr.f32.mxu0 0.0
      %3915 = vmatmul.mubr.f32.gmra.mxu0 %v3696
      %v3916 = vpop.f32.mrf.mxu0
      %v3917 = vadd.f32 0.0, %v3916
      %v3918 = vpop.f32.mrf.mxu0
      %3919 = vmatprep.mubr.f32.mxu0 0.0
      %3920 = vmatmul.mubr.f32.gmra.mxu0 %v3699
      %v3921 = vpop.f32.mrf.mxu0
      %v3922 = vadd.f32 0.0, %v3921
      %v3923 = vpop.f32.mrf.mxu0
      %3924 = vmatprep.mubr.f32.mxu0 0.0
      %3925 = vmatmul.mubr.f32.gmra.mxu0 %v3702
      %v3926 = vpop.f32.mrf.mxu0
      %v3927 = vadd.f32 0.0, %v3926
      %v3928 = vpop.f32.mrf.mxu0
      %3929 = vmatprep.mubr.f32.mxu0 0.0
      %3930 = vmatmul.mubr.f32.gmra.mxu0 %v3705
      %v3931 = vpop.f32.mrf.mxu0
      %v3932 = vadd.f32 0.0, %v3931
      %v3933 = vpop.f32.mrf.mxu0
      %3934 = vmatprep.mubr.f32.mxu0 0.0
      %3935 = vmatmul.mubr.f32.gmra.mxu0 %v3708
      %v3936 = vpop.f32.mrf.mxu0
      %v3937 = vadd.f32 0.0, %v3936
      %v3938 = vpop.f32.mrf.mxu0
      %3939 = vmatprep.mubr.f32.mxu0 0.0
      %3940 = vmatmul.mubr.f32.gmra.mxu0 %v3711
      %v3941 = vpop.f32.mrf.mxu0
      %v3942 = vadd.f32 0.0, %v3941
      %v3943 = vpop.f32.mrf.mxu0
      %3944 = vmatprep.mubr.f32.mxu0 0.0
      %3945 = vmatmul.mubr.f32.gmra.mxu0 %v3714
      %v3946 = vpop.f32.mrf.mxu0
      %v3947 = vadd.f32 0.0, %v3946
      %v3948 = vpop.f32.mrf.mxu0
      %3949 = vmatprep.mubr.f32.mxu0 0.0
      %3950 = vmatmul.mubr.f32.gmra.mxu0 %v3717
      %v3951 = vpop.f32.mrf.mxu0
      %v3952 = vadd.f32 0.0, %v3951
      %v3953 = vpop.f32.mrf.mxu0
      %3954 = vmatprep.mubr.f32.mxu0 0.0
      %3955 = vmatmul.mubr.f32.gmra.mxu0 %v3720
      %v3956 = vpop.f32.mrf.mxu0
      %v3957 = vadd.f32 0.0, %v3956
      %v3958 = vpop.f32.mrf.mxu0
      %3959 = vmatprep.mubr.f32.mxu0 0.0
      %3960 = vmatmul.mubr.f32.gmra.mxu0 %v3723
      %v3961 = vpop.f32.mrf.mxu0
      %v3962 = vadd.f32 0.0, %v3961
      %v3963 = vpop.f32.mrf.mxu0
      %3964 = vmatprep.mubr.f32.mxu0 0.0
      %3965 = vmatmul.mubr.f32.gmra.mxu0 %v3726
      %v3966 = vpop.f32.mrf.mxu0
      %v3967 = vadd.f32 0.0, %v3966
      %v3968 = vpop.f32.mrf.mxu0
      %3969 = vmatprep.mubr.f32.mxu0 0.0
      %3970 = vmatmul.mubr.f32.gmra.mxu0 %v3729
      %v3971 = vpop.f32.mrf.mxu0
      %v3972 = vadd.f32 0.0, %v3971
      %v3973 = vpop.f32.mrf.mxu0
      %3974 = vmatprep.mubr.f32.mxu0 0.0
      %3975 = vmatmul.mubr.f32.gmra.mxu0 %v3732
      %v3976 = vpop.f32.mrf.mxu0
      %v3977 = vadd.f32 0.0, %v3976
      %v3978 = vpop.f32.mrf.mxu0
      %3979 = vmatprep.mubr.f32.mxu0 0.0
      %3980 = vmatmul.mubr.f32.gmra.mxu0 %v3735
      %v3981 = vpop.f32.mrf.mxu0
      %v3982 = vadd.f32 0.0, %v3981
      %v3983 = vpop.f32.mrf.mxu0
      %3984 = vdwg.mxu0
      %v3985 = vadd.f32 %v3555, %v3807
      %v3986 = vadd.f32 %v3556, %v3812
      %v3987 = vadd.f32 %v3557, %v3817
      %v3988 = vadd.f32 %v3558, %v3822
      %v3989 = vadd.f32 %v3559, %v3827
      %v3990 = vadd.f32 %v3560, %v3832
      %v3991 = vadd.f32 %v3561, %v3837
      %v3992 = vadd.f32 %v3562, %v3842
      %v3993 = vadd.f32 %v3563, %v3847
      %v3994 = vadd.f32 %v3564, %v3852
      %v3995 = vadd.f32 %v3565, %v3857
      %v3996 = vadd.f32 %v3566, %v3862
      %v3997 = vadd.f32 %v3567, %v3867
      %v3998 = vadd.f32 %v3568, %v3872
      %v3999 = vadd.f32 %v3569, %v3877
      %v4000 = vadd.f32 %v3570, %v3882
      %v4001 = vadd.f32 %v3571, %v3887
      %v4002 = vadd.f32 %v3572, %v3892
      %v4003 = vadd.f32 %v3573, %v3897
      %v4004 = vadd.f32 %v3574, %v3902
      %v4005 = vadd.f32 %v3575, %v3907
      %v4006 = vadd.f32 %v3576, %v3912
      %v4007 = vadd.f32 %v3577, %v3917
      %v4008 = vadd.f32 %v3578, %v3922
      %v4009 = vadd.f32 %v3579, %v3927
      %v4010 = vadd.f32 %v3580, %v3932
      %v4011 = vadd.f32 %v3581, %v3937
      %v4012 = vadd.f32 %v3582, %v3942
      %v4013 = vadd.f32 %v3583, %v3947
      %v4014 = vadd.f32 %v3584, %v3952
      %v4015 = vadd.f32 %v3585, %v3957
      %v4016 = vadd.f32 %v3586, %v3962
      %v4017 = vadd.f32 %v3587, %v3967
      %v4018 = vadd.f32 %v3588, %v3972
      %v4019 = vadd.f32 %v3589, %v3977
      %v4020 = vadd.f32 %v3590, %v3982
      %v4021 = vld [vmem:[%s213] sm:$0x1]
      %v4023 = vlaneseq
      %v4024 = vshrl.u32 %v4023, 7
      %v4025 = vsub.s32 0, %v4024
      %v4026 = vrot.slane %v4021, %v4025
      %v4028 = vadd.f32 %v3985, %v4026
      %v4029 = vadd.f32 %v3986, %v4026
      %v4030 = vadd.f32 %v3987, %v4026
      %v4031 = vadd.f32 %v3988, %v4026
      %v4032 = vadd.f32 %v3989, %v4026
      %v4033 = vadd.f32 %v3990, %v4026
      %v4034 = vadd.f32 %v3991, %v4026
      %v4035 = vadd.f32 %v3992, %v4026
      %v4036 = vadd.f32 %v3993, %v4026
      %v4037 = vadd.f32 %v3994, %v4026
      %v4038 = vadd.f32 %v3995, %v4026
      %v4039 = vadd.f32 %v3996, %v4026
      %v4040 = vadd.f32 %v3997, %v4026
      %v4041 = vadd.f32 %v3998, %v4026
      %v4042 = vadd.f32 %v3999, %v4026
      %v4043 = vadd.f32 %v4000, %v4026
      %v4044 = vadd.f32 %v4001, %v4026
      %v4045 = vadd.f32 %v4002, %v4026
      %v4046 = vadd.f32 %v4003, %v4026
      %v4047 = vadd.f32 %v4004, %v4026
      %v4048 = vadd.f32 %v4005, %v4026
      %v4049 = vadd.f32 %v4006, %v4026
      %v4050 = vadd.f32 %v4007, %v4026
      %v4051 = vadd.f32 %v4008, %v4026
      %v4052 = vadd.f32 %v4009, %v4026
      %v4053 = vadd.f32 %v4010, %v4026
      %v4054 = vadd.f32 %v4011, %v4026
      %v4055 = vadd.f32 %v4012, %v4026
      %v4056 = vadd.f32 %v4013, %v4026
      %v4057 = vadd.f32 %v4014, %v4026
      %v4058 = vadd.f32 %v4015, %v4026
      %v4059 = vadd.f32 %v4016, %v4026
      %v4060 = vadd.f32 %v4017, %v4026
      %v4061 = vadd.f32 %v4018, %v4026
      %v4062 = vadd.f32 %v4019, %v4026
      %v4063 = vadd.f32 %v4020, %v4026
      %v4064 = vmax.f32 %v4028, 0.0
      %v4065 = vmax.f32 %v4029, 0.0
      %v4066 = vmax.f32 %v4030, 0.0
      %v4067 = vmax.f32 %v4031, 0.0
      %v4068 = vmax.f32 %v4032, 0.0
      %v4069 = vmax.f32 %v4033, 0.0
      %v4070 = vmax.f32 %v4034, 0.0
      %v4071 = vmax.f32 %v4035, 0.0
      %v4072 = vmax.f32 %v4036, 0.0
      %v4073 = vmax.f32 %v4037, 0.0
      %v4074 = vmax.f32 %v4038, 0.0
      %v4075 = vmax.f32 %v4039, 0.0
      %v4076 = vmax.f32 %v4040, 0.0
      %v4077 = vmax.f32 %v4041, 0.0
      %v4078 = vmax.f32 %v4042, 0.0
      %v4079 = vmax.f32 %v4043, 0.0
      %v4080 = vmax.f32 %v4044, 0.0
      %v4081 = vmax.f32 %v4045, 0.0
      %v4082 = vmax.f32 %v4046, 0.0
      %v4083 = vmax.f32 %v4047, 0.0
      %v4084 = vmax.f32 %v4048, 0.0
      %v4085 = vmax.f32 %v4049, 0.0
      %v4086 = vmax.f32 %v4050, 0.0
      %v4087 = vmax.f32 %v4051, 0.0
      %v4088 = vmax.f32 %v4052, 0.0
      %v4089 = vmax.f32 %v4053, 0.0
      %v4090 = vmax.f32 %v4054, 0.0
      %v4091 = vmax.f32 %v4055, 0.0
      %v4092 = vmax.f32 %v4056, 0.0
      %v4093 = vmax.f32 %v4057, 0.0
      %v4094 = vmax.f32 %v4058, 0.0
      %v4095 = vmax.f32 %v4059, 0.0
      %v4096 = vmax.f32 %v4060, 0.0
      %v4097 = vmax.f32 %v4061, 0.0
      %v4098 = vmax.f32 %v4062, 0.0
      %v4099 = vmax.f32 %v4063, 0.0
      %vm4100 = vcmask 64512
      %4101 = vst.msk [vmem:[%s221] sm:$0xff] %vm4100, %v4064
      %4102 = vst.msk [vmem:[%s221 + $0x8] sm:$0xff] %vm4100, %v4065
      %4103 = vst.msk [vmem:[%s221 + $0x10] sm:$0xff] %vm4100, %v4066
      %4104 = vst.msk [vmem:[%s221 + $0x18] sm:$0xff] %vm4100, %v4067
      %4105 = vst.msk [vmem:[%s221 + $0x20] sm:$0xff] %vm4100, %v4068
      %4106 = vst.msk [vmem:[%s221 + $0x28] sm:$0xff] %vm4100, %v4069
      %4107 = vst.msk [vmem:[%s221 + $0x30] sm:$0xff] %vm4100, %v4070
      %4108 = vst.msk [vmem:[%s221 + $0x38] sm:$0xff] %vm4100, %v4071
      %4109 = vst.msk [vmem:[%s221 + $0x40] sm:$0xff] %vm4100, %v4072
      %4110 = vst.msk [vmem:[%s221 + $0x48] sm:$0xff] %vm4100, %v4073
      %4111 = vst.msk [vmem:[%s221 + $0x50] sm:$0xff] %vm4100, %v4074
      %4112 = vst.msk [vmem:[%s221 + $0x58] sm:$0xff] %vm4100, %v4075
      %4113 = vst.msk [vmem:[%s221 + $0x60] sm:$0xff] %vm4100, %v4076
      %4114 = vst.msk [vmem:[%s221 + $0x68] sm:$0xff] %vm4100, %v4077
      %4115 = vst.msk [vmem:[%s221 + $0x70] sm:$0xff] %vm4100, %v4078
      %4116 = vst.msk [vmem:[%s221 + $0x78] sm:$0xff] %vm4100, %v4079
      %4117 = vst.msk [vmem:[%s221 + $0x80] sm:$0xff] %vm4100, %v4080
      %4118 = vst.msk [vmem:[%s221 + $0x88] sm:$0xff] %vm4100, %v4081
      %4119 = vst.msk [vmem:[%s221 + $0x90] sm:$0xff] %vm4100, %v4082
      %4120 = vst.msk [vmem:[%s221 + $0x98] sm:$0xff] %vm4100, %v4083
      %4121 = vst.msk [vmem:[%s221 + $0xa0] sm:$0xff] %vm4100, %v4084
      %4122 = vst.msk [vmem:[%s221 + $0xa8] sm:$0xff] %vm4100, %v4085
      %4123 = vst.msk [vmem:[%s221 + $0xb0] sm:$0xff] %vm4100, %v4086
      %4124 = vst.msk [vmem:[%s221 + $0xb8] sm:$0xff] %vm4100, %v4087
      %4125 = vst.msk [vmem:[%s221 + $0xc0] sm:$0xff] %vm4100, %v4088
      %4126 = vst.msk [vmem:[%s221 + $0xc8] sm:$0xff] %vm4100, %v4089
      %4127 = vst.msk [vmem:[%s221 + $0xd0] sm:$0xff] %vm4100, %v4090
      %4128 = vst.msk [vmem:[%s221 + $0xd8] sm:$0xff] %vm4100, %v4091
      %4129 = vst.msk [vmem:[%s221 + $0xe0] sm:$0xff] %vm4100, %v4092
      %4130 = vst.msk [vmem:[%s221 + $0xe8] sm:$0xff] %vm4100, %v4093
      %4131 = vst.msk [vmem:[%s221 + $0xf0] sm:$0xff] %vm4100, %v4094
      %4132 = vst.msk [vmem:[%s221 + $0xf8] sm:$0xff] %vm4100, %v4095
      %4133 = vst.msk [vmem:[%s221 + $0x100] sm:$0xff] %vm4100, %v4096
      %4134 = vst.msk [vmem:[%s221 + $0x108] sm:$0xff] %vm4100, %v4097
      %4135 = vst.msk [vmem:[%s221 + $0x110] sm:$0xff] %vm4100, %v4098
      %4136 = vst.msk [vmem:[%s221 + $0x118] sm:$0xff] %vm4100, %v4099
      %p4137 = scmp.lt.s32.totalorder %s18, 1
      %s4138 = scalar_select %p4137, %s18, 1
      %p4139 = scmp.lt.s32.totalorder %s19, 0
      %s4140 = scalar_select %p4139, %s19, 0
      %s4141 = smul.addr %s4138, 36
      %s4142 = sadd.s32 %s4140, %s4141
      %s4143 = smul.addr %s4142, 8
      %s4144 = scalar_lea.vmem %s3, %s4143
      // Predicated region
      $region33: #{tpu_custom_call.1} parent=31 // pred_check
        %p4145 = pneg %p124
      $region34: #{tpu_custom_call.1} parent=31 // pred_check_branch
        %4147 = sbr.rel (%p4145) target = $region36
      $region35: #{tpu_custom_call.1} parent=31 // pred_region
        _
      $region36: #{tpu_custom_call.1} parent=31 // pred_fallthru
        _
    $region32: #{tpu_custom_call.1} parent=5 // pred_fallthru
      _
    %p4148 = scmp.le.s32.totalorder 2, %s9
    // Predicated region
    $region37: #{tpu_custom_call.1} parent=5 // pred_check
      %p4149 = pneg %p4148
    $region38: #{tpu_custom_call.1} parent=5 // pred_check_branch
      %4151 = sbr.rel (%p4149) target = $region40
    $region39: #{tpu_custom_call.1} parent=5 // pred_region
      %s4152 = ssub.s32 %s9, 2
      // Predicated region
      $region41: #{tpu_custom_call.1} parent=39 // pred_check
        %p4153 = pneg %p130
      $region42: #{tpu_custom_call.1} parent=39 // pred_check_branch
        %4155 = sbr.rel (%p4153) target = $region44
      $region43: #{tpu_custom_call.1} parent=39 // pred_region
        %p4156 = scmp.lt.s32.totalorder %s20, 1
        %s4157 = scalar_select %p4156, %s20, 1
        %p4158 = scmp.lt.s32.totalorder %s21, 0
        %s4159 = scalar_select %p4158, %s21, 0
        %s4160 = smul.addr %s4157, 36
        %s4161 = sadd.s32 %s4159, %s4160
        %s4162 = smul.addr %s4161, 8
        %s4163 = scalar_lea.vmem %s3, %s4162
      $region44: #{tpu_custom_call.1} parent=39 // pred_fallthru
        _
    $region40: #{tpu_custom_call.1} parent=5 // pred_fallthru
      _
  $region6: #{tpu_custom_call.1} parent=0 // loop_footer
    %s13 = sadd.s32 1, %s9
  $region7: #{tpu_custom_call.1} parent=0 // loop_footer_branch
    %8 = sbr.rel target = $region3
  $region8: #{tpu_custom_call.1} parent=0 // loop_exit
    _

</llo_original>
